<compile_context>
chip_gen: v7x
topology: tpu7x:2x2x1
jax: 0.10.0
libtpu: 0.0.40
codegen_flags: <defaults>
</compile_context>

<pallas_src>
import numpy as np
import jax
import jax.numpy as jnp
from jax import lax
from jax.experimental import pallas as pl
from jax.experimental.pallas import tpu as pltpu


# ---------------------------------------------------------------------------
# Pallas kernels
# ---------------------------------------------------------------------------
def _conv_relu_pool_kernel(p_ref, w_ref, b_ref, o_ref):
    """Fused conv (im2col matmul) + bias + ReLU + 2x2 max-pool, single shot.

    p_ref holds the four pool-window patch groups stacked along rows:
    rows [g*Np, (g+1)*Np) belong to pool position g.  One big matmul on the
    MXU, then an element-wise max over the four sublane-aligned row groups.
    relu(max_g(x_g @ W) + b) == maxpool(relu(conv(x) + b)) because ReLU is
    monotone and the bias is constant within each pooling window.
    """
    n = o_ref.shape[0]
    s = jnp.dot(p_ref[...], w_ref[...], preferred_element_type=jnp.float32)
    m = jnp.maximum(jnp.maximum(s[0:n, :], s[n:2 * n, :]),
                    jnp.maximum(s[2 * n:3 * n, :], s[3 * n:4 * n, :]))
    o_ref[...] = jnp.maximum(m + b_ref[...], 0.0).astype(o_ref.dtype)


def conv_relu_pool(patches, w_mat, bias):
    """patches: (4*Np, K) bf16, w_mat: (K, Cout) bf16, bias: (1, Cout) f32."""
    n4, _ = patches.shape
    n = n4 // 4
    cout = w_mat.shape[1]
    vmem = pl.BlockSpec(memory_space=pltpu.MemorySpace.VMEM)
    return pl.pallas_call(
        _conv_relu_pool_kernel,
        out_shape=jax.ShapeDtypeStruct((n, cout), jnp.float32),
        in_specs=[vmem, vmem, vmem],
        out_specs=vmem,
    )(patches, w_mat, bias)


def _mlp_kernel(x_ref, w1_ref, b1_ref, w2_ref, b2_ref, o_ref):
    h = jnp.dot(x_ref[...], w1_ref[...],
                preferred_element_type=jnp.float32) + b1_ref[...]
    h = jnp.maximum(h, 0.0).astype(jnp.bfloat16)
    o_ref[...] = (jnp.dot(h, w2_ref[...], preferred_element_type=jnp.float32)
                  + b2_ref[...]).astype(o_ref.dtype)


def mlp(x, w1t, b1, w2t, b2):
    """x: (B, 3136) bf16, w1t: (3136, 128) bf16, b1: (1, 128) f32,
    w2t: (128, 10) bf16, b2: (1, 10) f32."""
    b = x.shape[0]
    out_dim = w2t.shape[1]
    vmem = pl.BlockSpec(memory_space=pltpu.MemorySpace.VMEM)
    return pl.pallas_call(
        _mlp_kernel,
        out_shape=jax.ShapeDtypeStruct((b, out_dim), jnp.float32),
        in_specs=[vmem] * 5,
        out_specs=vmem,
    )(x, w1t, b1, w2t, b2)


# ---------------------------------------------------------------------------
# Plain-JAX glue (data layout only; no heavy compute)
# ---------------------------------------------------------------------------
def _round_up(x, m):
    return (x + m - 1) // m * m


def _im2col_pool_groups(x_nhwc):
    """(B, H, W, C) -> ((4*Np, 9*C) bf16 patches, N, Np).

    Rows [g*Np, (g+1)*Np) hold pool-window position g; within a group rows are
    row-major over (B, H/2, W/2).  N = B*(H/2)*(W/2); Np = round_up(N, 8) with
    zero padding rows appended to each group (sublane alignment).
    Patch feature order along the last dim is (dy, dx, cin), cin fastest.
    """
    b, h, w, c = x_nhwc.shape
    xp = jnp.pad(x_nhwc, ((0, 0), (1, 1), (1, 1), (0, 0)))
    pat = jnp.stack([xp[:, dy:dy + h, dx:dx + w, :]
                     for dy in range(3) for dx in range(3)], axis=3)
    pat = pat.reshape(b, h, w, 9 * c)
    pat = pat.reshape(b, h // 2, 2, w // 2, 2, 9 * c)
    pat = pat.transpose(2, 4, 0, 1, 3, 5)                 # (2, 2, B, H/2, W/2, 9C)
    n = b * (h // 2) * (w // 2)
    pat = pat.reshape(4, n, 9 * c)
    npad = _round_up(n, 8)
    if npad != n:
        pat = jnp.pad(pat, ((0, 0), (0, npad - n), (0, 0)))
    return pat.reshape(4 * npad, 9 * c).astype(jnp.bfloat16), n, npad


def _conv_weight_to_mat(w_oihw):
    """PyTorch (Cout, Cin, 3, 3) conv weight -> (9*Cin, Cout) bf16 matmul weight."""
    cout, cin, kh, kw = w_oihw.shape
    return jnp.transpose(w_oihw, (2, 3, 1, 0)).reshape(kh * kw * cin, cout) \
              .astype(jnp.bfloat16)


def mnist_cnn_forward(params, x_nchw):
    b = x_nchw.shape[0]
    x = jnp.transpose(x_nchw, (0, 2, 3, 1))               # NCHW -> NHWC

    # conv1 (1->32, 3x3, pad 1) + ReLU + maxpool 2x2
    p1, n1, _ = _im2col_pool_groups(x)                    # (4*392, 9) for B=2
    y1 = conv_relu_pool(p1, _conv_weight_to_mat(params["conv1_w"]),
                        params["conv1_b"][None, :].astype(jnp.float32))
    y1 = y1[:n1].reshape(b, 14, 14, 32)

    # conv2 (32->64, 3x3, pad 1) + ReLU + maxpool 2x2
    p2, n2, _ = _im2col_pool_groups(y1)                   # (4*104, 288) for B=2
    y2 = conv_relu_pool(p2, _conv_weight_to_mat(params["conv2_w"]),
                        params["conv2_b"][None, :].astype(jnp.float32))

    # NHWC flatten (b, h, w, c); fc1's weight is permuted below to match, so
    # no NHWC->NCHW transpose of the activations is needed.
    flat = y2[:n2].reshape(b, 7 * 7 * 64).astype(jnp.bfloat16)

    # fc1_w is (128, 64*7*7) with input index c*49 + h*7 + w (NCHW flatten);
    # permute its input dim to (h*7 + w)*64 + c and transpose for the matmul.
    w1t = (params["fc1_w"].reshape(128, 64, 7, 7)
           .transpose(2, 3, 1, 0).reshape(7 * 7 * 64, 128).astype(jnp.bfloat16))
    w2t = params["fc2_w"].T.astype(jnp.bfloat16)

    return mlp(flat, w1t, params["fc1_b"][None, :].astype(jnp.float32),
               w2t, params["fc2_b"][None, :].astype(jnp.float32))


# ---------------------------------------------------------------------------
# Pure-JAX f32 reference (PyTorch semantics)
# ---------------------------------------------------------------------------
def mnist_cnn_reference(params, x_nchw):
    dn = ("NCHW", "OIHW", "NCHW")

    def conv(x, w, bias):
        y = lax.conv_general_dilated(x, w, (1, 1), ((1, 1), (1, 1)),
                                     dimension_numbers=dn)
        return y + bias[None, :, None, None]

    def pool(x):
        return lax.reduce_window(x, -jnp.inf, lax.max,
                                 (1, 1, 2, 2), (1, 1, 2, 2), "VALID")

    x = pool(jax.nn.relu(conv(x_nchw, params["conv1_w"], params["conv1_b"])))
    x = pool(jax.nn.relu(conv(x, params["conv2_w"], params["conv2_b"])))
    x = x.reshape(x.shape[0], -1)
    x = jax.nn.relu(x @ params["fc1_w"].T + params["fc1_b"])
    return x @ params["fc2_w"].T + params["fc2_b"]


# ---------------------------------------------------------------------------
if __name__ == "__main__":
    output_size = 10
    key = jax.random.PRNGKey(0)
    ks = jax.random.split(key, 9)

    # Deterministic synthetic parameters (shapes from MNISTCNN.__init__)
    params = {
        "conv1_w": 0.10 * jax.random.normal(ks[0], (32, 1, 3, 3), jnp.float32),
        "conv1_b": 0.10 * jax.random.normal(ks[1], (32,), jnp.float32),
        "conv2_w": 0.05 * jax.random.normal(ks[2], (64, 32, 3, 3), jnp.float32),
        "conv2_b": 0.10 * jax.random.normal(ks[3], (64,), jnp.float32),
        "fc1_w": 0.02 * jax.random.normal(ks[4], (128, 64 * 7 * 7), jnp.float32),
        "fc1_b": 0.10 * jax.random.normal(ks[5], (128,), jnp.float32),
        "fc2_w": 0.05 * jax.random.normal(ks[6], (output_size, 128), jnp.float32),
        "fc2_b": 0.10 * jax.random.normal(ks[7], (output_size,), jnp.float32),
    }

    # MNIST-shaped input (28x28 is required by the 64*7*7 flatten), NCHW like PyTorch.
    x = jax.random.normal(ks[8], (2, 1, 28, 28), jnp.float32)

    out = jax.block_until_ready(jax.jit(mnist_cnn_forward)(params, x))
    ref = jax.block_until_ready(jax.jit(mnist_cnn_reference)(params, x))

    assert out.shape == (2, output_size) and out.dtype == jnp.float32
    # bf16 matmul operands (f32 accumulate) -> slightly looser tolerance vs f32 ref.
    np.testing.assert_allclose(np.asarray(out), np.asarray(ref),
                               rtol=2e-2, atol=1e-2)
    print("KERNEL_OK")
</pallas_src>

<mosaic_0001>
module attributes {stable_mosaic.version = 11 : i64} {
  func.func @_conv_relu_pool_kernel(%arg0: memref<1568x9xbf16, #tpu.memory_space<vmem>>, %arg1: memref<9x32xbf16, #tpu.memory_space<vmem>>, %arg2: memref<1x32xf32, #tpu.memory_space<vmem>>, %arg3: memref<392x32xf32, #tpu.memory_space<vmem>>) attributes {dimension_semantics = [], scalar_prefetch = 0 : i64, scratch_operands = 0 : i64, tpu.core_type = #tpu.core_type<tc>} {
    %c0 = arith.constant 0 : index
    %c0_0 = arith.constant 0 : index
    %0 = vector.load %arg0[%c0, %c0_0] : memref<1568x9xbf16, #tpu.memory_space<vmem>>, vector<1568x9xbf16>
    %c0_1 = arith.constant 0 : index
    %c0_2 = arith.constant 0 : index
    %1 = vector.load %arg1[%c0_1, %c0_2] : memref<9x32xbf16, #tpu.memory_space<vmem>>, vector<9x32xbf16>
    %cst = arith.constant dense<0.000000e+00> : vector<1568x32xf32>
    %2 = tpu.matmul %0, %1, %cst {dimension_numbers = #tpu.dot_dimension_numbers<[1], [0], [0], [1], [0, 0, 1, 1], [], []>} : vector<1568x9xbf16>, vector<9x32xbf16>, vector<1568x32xf32> -> vector<1568x32xf32>
    %3 = vector.extract_strided_slice %2 {offsets = [0, 0], sizes = [392, 32], strides = [1, 1]} : vector<1568x32xf32> to vector<392x32xf32>
    %4 = vector.extract_strided_slice %2 {offsets = [392, 0], sizes = [392, 32], strides = [1, 1]} : vector<1568x32xf32> to vector<392x32xf32>
    %5 = arith.maximumf %3, %4 : vector<392x32xf32>
    %6 = vector.extract_strided_slice %2 {offsets = [784, 0], sizes = [392, 32], strides = [1, 1]} : vector<1568x32xf32> to vector<392x32xf32>
    %7 = vector.extract_strided_slice %2 {offsets = [1176, 0], sizes = [392, 32], strides = [1, 1]} : vector<1568x32xf32> to vector<392x32xf32>
    %8 = arith.maximumf %6, %7 : vector<392x32xf32>
    %9 = arith.maximumf %5, %8 : vector<392x32xf32>
    %c0_3 = arith.constant 0 : index
    %c0_4 = arith.constant 0 : index
    %10 = vector.load %arg2[%c0_3, %c0_4] : memref<1x32xf32, #tpu.memory_space<vmem>>, vector<1x32xf32>
    %11 = vector.broadcast %10 : vector<1x32xf32> to vector<392x32xf32>
    %12 = arith.addf %9, %11 : vector<392x32xf32>
    %cst_5 = arith.constant 0.000000e+00 : f32
    %13 = vector.broadcast %cst_5 : f32 to vector<392x32xf32>
    %14 = arith.maximumf %12, %13 : vector<392x32xf32>
    %c0_6 = arith.constant 0 : index
    %c0_7 = arith.constant 0 : index
    %15 = vector.load %arg3[%c0_6, %c0_7] : memref<392x32xf32, #tpu.memory_space<vmem>>, vector<392x32xf32>
    tpu.vector_store %arg3[%c0_6, %c0_7], %14 {strides = array<i32>} : memref<392x32xf32, #tpu.memory_space<vmem>>, vector<392x32xf32>,
    return
  }
}

module attributes {stable_mosaic.version = 11 : i64} {
  func.func @_conv_relu_pool_kernel(%arg0: memref<416x288xbf16, #tpu.memory_space<vmem>>, %arg1: memref<288x64xbf16, #tpu.memory_space<vmem>>, %arg2: memref<1x64xf32, #tpu.memory_space<vmem>>, %arg3: memref<104x64xf32, #tpu.memory_space<vmem>>) attributes {dimension_semantics = [], scalar_prefetch = 0 : i64, scratch_operands = 0 : i64, tpu.core_type = #tpu.core_type<tc>} {
    %c0 = arith.constant 0 : index
    %c0_0 = arith.constant 0 : index
    %0 = vector.load %arg0[%c0, %c0_0] : memref<416x288xbf16, #tpu.memory_space<vmem>>, vector<416x288xbf16>
    %c0_1 = arith.constant 0 : index
    %c0_2 = arith.constant 0 : index
    %1 = vector.load %arg1[%c0_1, %c0_2] : memref<288x64xbf16, #tpu.memory_space<vmem>>, vector<288x64xbf16>
    %cst = arith.constant dense<0.000000e+00> : vector<416x64xf32>
    %2 = tpu.matmul %0, %1, %cst {dimension_numbers = #tpu.dot_dimension_numbers<[1], [0], [0], [1], [0, 0, 1, 1], [], []>} : vector<416x288xbf16>, vector<288x64xbf16>, vector<416x64xf32> -> vector<416x64xf32>
    %3 = vector.extract_strided_slice %2 {offsets = [0, 0], sizes = [104, 64], strides = [1, 1]} : vector<416x64xf32> to vector<104x64xf32>
    %4 = vector.extract_strided_slice %2 {offsets = [104, 0], sizes = [104, 64], strides = [1, 1]} : vector<416x64xf32> to vector<104x64xf32>
    %5 = arith.maximumf %3, %4 : vector<104x64xf32>
    %6 = vector.extract_strided_slice %2 {offsets = [208, 0], sizes = [104, 64], strides = [1, 1]} : vector<416x64xf32> to vector<104x64xf32>
    %7 = vector.extract_strided_slice %2 {offsets = [312, 0], sizes = [104, 64], strides = [1, 1]} : vector<416x64xf32> to vector<104x64xf32>
    %8 = arith.maximumf %6, %7 : vector<104x64xf32>
    %9 = arith.maximumf %5, %8 : vector<104x64xf32>
    %c0_3 = arith.constant 0 : index
    %c0_4 = arith.constant 0 : index
    %10 = vector.load %arg2[%c0_3, %c0_4] : memref<1x64xf32, #tpu.memory_space<vmem>>, vector<1x64xf32>
    %11 = vector.broadcast %10 : vector<1x64xf32> to vector<104x64xf32>
    %12 = arith.addf %9, %11 : vector<104x64xf32>
    %cst_5 = arith.constant 0.000000e+00 : f32
    %13 = vector.broadcast %cst_5 : f32 to vector<104x64xf32>
    %14 = arith.maximumf %12, %13 : vector<104x64xf32>
    %c0_6 = arith.constant 0 : index
    %c0_7 = arith.constant 0 : index
    %15 = vector.load %arg3[%c0_6, %c0_7] : memref<104x64xf32, #tpu.memory_space<vmem>>, vector<104x64xf32>
    tpu.vector_store %arg3[%c0_6, %c0_7], %14 {strides = array<i32>} : memref<104x64xf32, #tpu.memory_space<vmem>>, vector<104x64xf32>,
    return
  }
}

module attributes {stable_mosaic.version = 11 : i64} {
  func.func @_mlp_kernel(%arg0: memref<2x3136xbf16, #tpu.memory_space<vmem>>, %arg1: memref<3136x128xbf16, #tpu.memory_space<vmem>>, %arg2: memref<1x128xf32, #tpu.memory_space<vmem>>, %arg3: memref<128x10xbf16, #tpu.memory_space<vmem>>, %arg4: memref<1x10xf32, #tpu.memory_space<vmem>>, %arg5: memref<2x10xf32, #tpu.memory_space<vmem>>) attributes {dimension_semantics = [], scalar_prefetch = 0 : i64, scratch_operands = 0 : i64, tpu.core_type = #tpu.core_type<tc>} {
    %c0 = arith.constant 0 : index
    %c0_0 = arith.constant 0 : index
    %0 = vector.load %arg0[%c0, %c0_0] : memref<2x3136xbf16, #tpu.memory_space<vmem>>, vector<2x3136xbf16>
    %c0_1 = arith.constant 0 : index
    %c0_2 = arith.constant 0 : index
    %1 = vector.load %arg1[%c0_1, %c0_2] : memref<3136x128xbf16, #tpu.memory_space<vmem>>, vector<3136x128xbf16>
    %cst = arith.constant dense<0.000000e+00> : vector<2x128xf32>
    %2 = tpu.matmul %0, %1, %cst {dimension_numbers = #tpu.dot_dimension_numbers<[1], [0], [0], [1], [0, 0, 1, 1], [], []>} : vector<2x3136xbf16>, vector<3136x128xbf16>, vector<2x128xf32> -> vector<2x128xf32>
    %c0_3 = arith.constant 0 : index
    %c0_4 = arith.constant 0 : index
    %3 = vector.load %arg2[%c0_3, %c0_4] : memref<1x128xf32, #tpu.memory_space<vmem>>, vector<1x128xf32>
    %4 = vector.broadcast %3 : vector<1x128xf32> to vector<2x128xf32>
    %5 = arith.addf %2, %4 : vector<2x128xf32>
    %cst_5 = arith.constant 0.000000e+00 : f32
    %6 = vector.broadcast %cst_5 : f32 to vector<2x128xf32>
    %7 = arith.maximumf %5, %6 : vector<2x128xf32>
    %8 = arith.truncf %7 : vector<2x128xf32> to vector<2x128xbf16>
    %c0_6 = arith.constant 0 : index
    %c0_7 = arith.constant 0 : index
    %9 = vector.load %arg3[%c0_6, %c0_7] : memref<128x10xbf16, #tpu.memory_space<vmem>>, vector<128x10xbf16>
    %cst_8 = arith.constant dense<0.000000e+00> : vector<2x10xf32>
    %10 = tpu.matmul %8, %9, %cst_8 {dimension_numbers = #tpu.dot_dimension_numbers<[1], [0], [0], [1], [0, 0, 1, 1], [], []>} : vector<2x128xbf16>, vector<128x10xbf16>, vector<2x10xf32> -> vector<2x10xf32>
    %c0_9 = arith.constant 0 : index
    %c0_10 = arith.constant 0 : index
    %11 = vector.load %arg4[%c0_9, %c0_10] : memref<1x10xf32, #tpu.memory_space<vmem>>, vector<1x10xf32>
    %12 = vector.broadcast %11 : vector<1x10xf32> to vector<2x10xf32>
    %13 = arith.addf %10, %12 : vector<2x10xf32>
    %c0_11 = arith.constant 0 : index
    %c0_12 = arith.constant 0 : index
    %14 = vector.load %arg5[%c0_11, %c0_12] : memref<2x10xf32, #tpu.memory_space<vmem>>, vector<2x10xf32>
    tpu.vector_store %arg5[%c0_11, %c0_12], %13 {strides = array<i32>} : memref<2x10xf32, #tpu.memory_space<vmem>>, vector<2x10xf32>,
    return
  }
}

</mosaic_0001>

<llo_original>
// kernel: mnist_cnn_forward.3
$region0: #{mnist_cnn_forward.3}
  #allocation0 [shape = 'u32[]', space=smem, size = 0x4, offset = 0x4, fixed_abs, tag = 'smem constant byte address 0x4 - core index']
  #allocation1 [shape = 'u32[144,128]{1,0:T(1,128)}', space=vmem, size = 0x12000, scoped, tag = 'internal scratch']
  %s0 = inlined_call_operand.vmem [shape: bf16[1568,9], index: 0, kind: input, shape index: {}]
  %s1 = inlined_call_operand.vmem [shape: bf16[9,32], index: 1, kind: input, shape index: {}]
  %s2 = inlined_call_operand.vmem [shape: f32[1,32], index: 2, kind: input, shape index: {}]
  %s3 = inlined_call_operand.vmem [shape: f32[392,32], index: 3, kind: output, shape index: {}]
  %s4 = sld [smem:[#allocation0]]
  $region22: #{mnist_cnn_forward.3} parent=0
    _
  %s6 = ssub.s32 1, %s4
  %s7 = scalar_select 0, %s6, %s4
  // Predicated region
  $region2: #{mnist_cnn_forward.3} parent=0 // pred_check
    _
  $region3: #{mnist_cnn_forward.3} parent=0 // pred_check_branch
    %9 = sbr.rel (0) target = $region5
  $region4: #{mnist_cnn_forward.3} parent=0 // pred_region
    _
  $region5: #{mnist_cnn_forward.3} parent=0 // pred_fallthru
    _
  // Predicated region
  $region6: #{mnist_cnn_forward.3} parent=0 // pred_check
    _
  $region7: #{mnist_cnn_forward.3} parent=0 // pred_check_branch
    %11 = sbr.rel (0) target = $region9
  $region8: #{mnist_cnn_forward.3} parent=0 // pred_region
    _
  $region9: #{mnist_cnn_forward.3} parent=0 // pred_fallthru
    _
  // Predicated region
  $region10: #{mnist_cnn_forward.3} parent=0 // pred_check
    _
  $region11: #{mnist_cnn_forward.3} parent=0 // pred_check_branch
    %13 = sbr.rel (0) target = $region13
  $region12: #{mnist_cnn_forward.3} parent=0 // pred_region
    _
  $region13: #{mnist_cnn_forward.3} parent=0 // pred_fallthru
    _
  %v15 = vld [vmem:[%s0] sm:$0xf]
  %v16 = vld [vmem:[%s0 + $0x4] sm:$0xf]
  %v17 = vld [vmem:[%s0 + $0x8] sm:$0xf]
  %v18 = vld [vmem:[%s0 + $0xc] sm:$0xf]
  %v19 = vld [vmem:[%s0 + $0x10] sm:$0xf]
  %v20 = vld [vmem:[%s0 + $0x14] sm:$0xf]
  %v21 = vld [vmem:[%s0 + $0x18] sm:$0xf]
  %v22 = vld [vmem:[%s0 + $0x1c] sm:$0xf]
  %v23 = vld [vmem:[%s0 + $0x20] sm:$0xf]
  %v24 = vld [vmem:[%s0 + $0x24] sm:$0xf]
  %v25 = vld [vmem:[%s0 + $0x28] sm:$0xf]
  %v26 = vld [vmem:[%s0 + $0x2c] sm:$0xf]
  %v27 = vld [vmem:[%s0 + $0x30] sm:$0xf]
  %v28 = vld [vmem:[%s0 + $0x34] sm:$0xf]
  %v29 = vld [vmem:[%s0 + $0x38] sm:$0xf]
  %v30 = vld [vmem:[%s0 + $0x3c] sm:$0xf]
  %v31 = vld [vmem:[%s0 + $0x40] sm:$0xf]
  %v32 = vld [vmem:[%s0 + $0x44] sm:$0xf]
  %v33 = vld [vmem:[%s0 + $0x48] sm:$0xf]
  %v34 = vld [vmem:[%s0 + $0x4c] sm:$0xf]
  %v35 = vld [vmem:[%s0 + $0x50] sm:$0xf]
  %v36 = vld [vmem:[%s0 + $0x54] sm:$0xf]
  %v37 = vld [vmem:[%s0 + $0x58] sm:$0xf]
  %v38 = vld [vmem:[%s0 + $0x5c] sm:$0xf]
  %v39 = vld [vmem:[%s0 + $0x60] sm:$0xf]
  %v40 = vld [vmem:[%s0 + $0x64] sm:$0xf]
  %v41 = vld [vmem:[%s0 + $0x68] sm:$0xf]
  %v42 = vld [vmem:[%s0 + $0x6c] sm:$0xf]
  %v43 = vld [vmem:[%s0 + $0x70] sm:$0xf]
  %v44 = vld [vmem:[%s0 + $0x74] sm:$0xf]
  %v45 = vld [vmem:[%s0 + $0x78] sm:$0xf]
  %v46 = vld [vmem:[%s0 + $0x7c] sm:$0xf]
  %v47 = vld [vmem:[%s0 + $0x80] sm:$0xf]
  %v48 = vld [vmem:[%s0 + $0x84] sm:$0xf]
  %v49 = vld [vmem:[%s0 + $0x88] sm:$0xf]
  %v50 = vld [vmem:[%s0 + $0x8c] sm:$0xf]
  %v51 = vld [vmem:[%s0 + $0x90] sm:$0xf]
  %v52 = vld [vmem:[%s0 + $0x94] sm:$0xf]
  %v53 = vld [vmem:[%s0 + $0x98] sm:$0xf]
  %v54 = vld [vmem:[%s0 + $0x9c] sm:$0xf]
  %v55 = vld [vmem:[%s0 + $0xa0] sm:$0xf]
  %v56 = vld [vmem:[%s0 + $0xa4] sm:$0xf]
  %v57 = vld [vmem:[%s0 + $0xa8] sm:$0xf]
  %v58 = vld [vmem:[%s0 + $0xac] sm:$0xf]
  %v59 = vld [vmem:[%s0 + $0xb0] sm:$0xf]
  %v60 = vld [vmem:[%s0 + $0xb4] sm:$0xf]
  %v61 = vld [vmem:[%s0 + $0xb8] sm:$0xf]
  %v62 = vld [vmem:[%s0 + $0xbc] sm:$0xf]
  %v63 = vld [vmem:[%s0 + $0xc0] sm:$0xf]
  %v64 = vld [vmem:[%s0 + $0xc4] sm:$0xf]
  %v65 = vld [vmem:[%s0 + $0xc8] sm:$0xf]
  %v66 = vld [vmem:[%s0 + $0xcc] sm:$0xf]
  %v67 = vld [vmem:[%s0 + $0xd0] sm:$0xf]
  %v68 = vld [vmem:[%s0 + $0xd4] sm:$0xf]
  %v69 = vld [vmem:[%s0 + $0xd8] sm:$0xf]
  %v70 = vld [vmem:[%s0 + $0xdc] sm:$0xf]
  %v71 = vld [vmem:[%s0 + $0xe0] sm:$0xf]
  %v72 = vld [vmem:[%s0 + $0xe4] sm:$0xf]
  %v73 = vld [vmem:[%s0 + $0xe8] sm:$0xf]
  %v74 = vld [vmem:[%s0 + $0xec] sm:$0xf]
  %v75 = vld [vmem:[%s0 + $0xf0] sm:$0xf]
  %v76 = vld [vmem:[%s0 + $0xf4] sm:$0xf]
  %v77 = vld [vmem:[%s0 + $0xf8] sm:$0xf]
  %v78 = vld [vmem:[%s0 + $0xfc] sm:$0xf]
  %v79 = vld [vmem:[%s0 + $0x100] sm:$0xf]
  %v80 = vld [vmem:[%s0 + $0x104] sm:$0xf]
  %v81 = vld [vmem:[%s0 + $0x108] sm:$0xf]
  %v82 = vld [vmem:[%s0 + $0x10c] sm:$0xf]
  %v83 = vld [vmem:[%s0 + $0x110] sm:$0xf]
  %v84 = vld [vmem:[%s0 + $0x114] sm:$0xf]
  %v85 = vld [vmem:[%s0 + $0x118] sm:$0xf]
  %v86 = vld [vmem:[%s0 + $0x11c] sm:$0xf]
  %v87 = vld [vmem:[%s0 + $0x120] sm:$0xf]
  %v88 = vld [vmem:[%s0 + $0x124] sm:$0xf]
  %v89 = vld [vmem:[%s0 + $0x128] sm:$0xf]
  %v90 = vld [vmem:[%s0 + $0x12c] sm:$0xf]
  %v91 = vld [vmem:[%s0 + $0x130] sm:$0xf]
  %v92 = vld [vmem:[%s0 + $0x134] sm:$0xf]
  %v93 = vld [vmem:[%s0 + $0x138] sm:$0xf]
  %v94 = vld [vmem:[%s0 + $0x13c] sm:$0xf]
  %v95 = vld [vmem:[%s0 + $0x140] sm:$0xf]
  %v96 = vld [vmem:[%s0 + $0x144] sm:$0xf]
  %v97 = vld [vmem:[%s0 + $0x148] sm:$0xf]
  %v98 = vld [vmem:[%s0 + $0x14c] sm:$0xf]
  %v99 = vld [vmem:[%s0 + $0x150] sm:$0xf]
  %v100 = vld [vmem:[%s0 + $0x154] sm:$0xf]
  %v101 = vld [vmem:[%s0 + $0x158] sm:$0xf]
  %v102 = vld [vmem:[%s0 + $0x15c] sm:$0xf]
  %v103 = vld [vmem:[%s0 + $0x160] sm:$0xf]
  %v104 = vld [vmem:[%s0 + $0x164] sm:$0xf]
  %v105 = vld [vmem:[%s0 + $0x168] sm:$0xf]
  %v106 = vld [vmem:[%s0 + $0x16c] sm:$0xf]
  %v107 = vld [vmem:[%s0 + $0x170] sm:$0xf]
  %v108 = vld [vmem:[%s0 + $0x174] sm:$0xf]
  %v109 = vld [vmem:[%s0 + $0x178] sm:$0xf]
  %v110 = vld [vmem:[%s0 + $0x17c] sm:$0xf]
  %v111 = vld [vmem:[%s0 + $0x180] sm:$0xf]
  %v112 = vld [vmem:[%s0 + $0x184] sm:$0xf]
  %v113 = vld [vmem:[%s0 + $0x188] sm:$0xf]
  %v114 = vld [vmem:[%s0 + $0x18c] sm:$0xf]
  %v115 = vld [vmem:[%s0 + $0x190] sm:$0xf]
  %v116 = vld [vmem:[%s0 + $0x194] sm:$0xf]
  %v117 = vld [vmem:[%s0 + $0x198] sm:$0xf]
  %v118 = vld [vmem:[%s0 + $0x19c] sm:$0xf]
  %v119 = vld [vmem:[%s0 + $0x1a0] sm:$0xf]
  %v120 = vld [vmem:[%s0 + $0x1a4] sm:$0xf]
  %v121 = vld [vmem:[%s0 + $0x1a8] sm:$0xf]
  %v122 = vld [vmem:[%s0 + $0x1ac] sm:$0xf]
  %v123 = vld [vmem:[%s0 + $0x1b0] sm:$0xf]
  %v124 = vld [vmem:[%s0 + $0x1b4] sm:$0xf]
  %v125 = vld [vmem:[%s0 + $0x1b8] sm:$0xf]
  %v126 = vld [vmem:[%s0 + $0x1bc] sm:$0xf]
  %v127 = vld [vmem:[%s0 + $0x1c0] sm:$0xf]
  %v128 = vld [vmem:[%s0 + $0x1c4] sm:$0xf]
  %v129 = vld [vmem:[%s0 + $0x1c8] sm:$0xf]
  %v130 = vld [vmem:[%s0 + $0x1cc] sm:$0xf]
  %v131 = vld [vmem:[%s0 + $0x1d0] sm:$0xf]
  %v132 = vld [vmem:[%s0 + $0x1d4] sm:$0xf]
  %v133 = vld [vmem:[%s0 + $0x1d8] sm:$0xf]
  %v134 = vld [vmem:[%s0 + $0x1dc] sm:$0xf]
  %v135 = vld [vmem:[%s0 + $0x1e0] sm:$0xf]
  %v136 = vld [vmem:[%s0 + $0x1e4] sm:$0xf]
  %v137 = vld [vmem:[%s0 + $0x1e8] sm:$0xf]
  %v138 = vld [vmem:[%s0 + $0x1ec] sm:$0xf]
  %v139 = vld [vmem:[%s0 + $0x1f0] sm:$0xf]
  %v140 = vld [vmem:[%s0 + $0x1f4] sm:$0xf]
  %v141 = vld [vmem:[%s0 + $0x1f8] sm:$0xf]
  %v142 = vld [vmem:[%s0 + $0x1fc] sm:$0xf]
  %v143 = vld [vmem:[%s0 + $0x200] sm:$0xf]
  %v144 = vld [vmem:[%s0 + $0x204] sm:$0xf]
  %v145 = vld [vmem:[%s0 + $0x208] sm:$0xf]
  %v146 = vld [vmem:[%s0 + $0x20c] sm:$0xf]
  %v147 = vld [vmem:[%s0 + $0x210] sm:$0xf]
  %v148 = vld [vmem:[%s0 + $0x214] sm:$0xf]
  %v149 = vld [vmem:[%s0 + $0x218] sm:$0xf]
  %v150 = vld [vmem:[%s0 + $0x21c] sm:$0xf]
  %v151 = vld [vmem:[%s0 + $0x220] sm:$0xf]
  %v152 = vld [vmem:[%s0 + $0x224] sm:$0xf]
  %v153 = vld [vmem:[%s0 + $0x228] sm:$0xf]
  %v154 = vld [vmem:[%s0 + $0x22c] sm:$0xf]
  %v155 = vld [vmem:[%s0 + $0x230] sm:$0xf]
  %v156 = vld [vmem:[%s0 + $0x234] sm:$0xf]
  %v157 = vld [vmem:[%s0 + $0x238] sm:$0xf]
  %v158 = vld [vmem:[%s0 + $0x23c] sm:$0xf]
  %v159 = vld [vmem:[%s0 + $0x240] sm:$0xf]
  %v160 = vld [vmem:[%s0 + $0x244] sm:$0xf]
  %v161 = vld [vmem:[%s0 + $0x248] sm:$0xf]
  %v162 = vld [vmem:[%s0 + $0x24c] sm:$0xf]
  %v163 = vld [vmem:[%s0 + $0x250] sm:$0xf]
  %v164 = vld [vmem:[%s0 + $0x254] sm:$0xf]
  %v165 = vld [vmem:[%s0 + $0x258] sm:$0xf]
  %v166 = vld [vmem:[%s0 + $0x25c] sm:$0xf]
  %v167 = vld [vmem:[%s0 + $0x260] sm:$0xf]
  %v168 = vld [vmem:[%s0 + $0x264] sm:$0xf]
  %v169 = vld [vmem:[%s0 + $0x268] sm:$0xf]
  %v170 = vld [vmem:[%s0 + $0x26c] sm:$0xf]
  %v171 = vld [vmem:[%s0 + $0x270] sm:$0xf]
  %v172 = vld [vmem:[%s0 + $0x274] sm:$0xf]
  %v173 = vld [vmem:[%s0 + $0x278] sm:$0xf]
  %v174 = vld [vmem:[%s0 + $0x27c] sm:$0xf]
  %v175 = vld [vmem:[%s0 + $0x280] sm:$0xf]
  %v176 = vld [vmem:[%s0 + $0x284] sm:$0xf]
  %v177 = vld [vmem:[%s0 + $0x288] sm:$0xf]
  %v178 = vld [vmem:[%s0 + $0x28c] sm:$0xf]
  %v179 = vld [vmem:[%s0 + $0x290] sm:$0xf]
  %v180 = vld [vmem:[%s0 + $0x294] sm:$0xf]
  %v181 = vld [vmem:[%s0 + $0x298] sm:$0xf]
  %v182 = vld [vmem:[%s0 + $0x29c] sm:$0xf]
  %v183 = vld [vmem:[%s0 + $0x2a0] sm:$0xf]
  %v184 = vld [vmem:[%s0 + $0x2a4] sm:$0xf]
  %v185 = vld [vmem:[%s0 + $0x2a8] sm:$0xf]
  %v186 = vld [vmem:[%s0 + $0x2ac] sm:$0xf]
  %v187 = vld [vmem:[%s0 + $0x2b0] sm:$0xf]
  %v188 = vld [vmem:[%s0 + $0x2b4] sm:$0xf]
  %v189 = vld [vmem:[%s0 + $0x2b8] sm:$0xf]
  %v190 = vld [vmem:[%s0 + $0x2bc] sm:$0xf]
  %v191 = vld [vmem:[%s0 + $0x2c0] sm:$0xf]
  %v192 = vld [vmem:[%s0 + $0x2c4] sm:$0xf]
  %v193 = vld [vmem:[%s0 + $0x2c8] sm:$0xf]
  %v194 = vld [vmem:[%s0 + $0x2cc] sm:$0xf]
  %v195 = vld [vmem:[%s0 + $0x2d0] sm:$0xf]
  %v196 = vld [vmem:[%s0 + $0x2d4] sm:$0xf]
  %v197 = vld [vmem:[%s0 + $0x2d8] sm:$0xf]
  %v198 = vld [vmem:[%s0 + $0x2dc] sm:$0xf]
  %v199 = vld [vmem:[%s0 + $0x2e0] sm:$0xf]
  %v200 = vld [vmem:[%s0 + $0x2e4] sm:$0xf]
  %v201 = vld [vmem:[%s0 + $0x2e8] sm:$0xf]
  %v202 = vld [vmem:[%s0 + $0x2ec] sm:$0xf]
  %v203 = vld [vmem:[%s0 + $0x2f0] sm:$0xf]
  %v204 = vld [vmem:[%s0 + $0x2f4] sm:$0xf]
  %v205 = vld [vmem:[%s0 + $0x2f8] sm:$0xf]
  %v206 = vld [vmem:[%s0 + $0x2fc] sm:$0xf]
  %v207 = vld [vmem:[%s0 + $0x300] sm:$0xf]
  %v208 = vld [vmem:[%s0 + $0x304] sm:$0xf]
  %v209 = vld [vmem:[%s0 + $0x308] sm:$0xf]
  %v210 = vld [vmem:[%s0 + $0x30c] sm:$0xf]
  %v211 = vld [vmem:[%s1] sm:$0xf]
  %v212 = vld [vmem:[%s1 + $0x4] sm:$0x1]
  %v409 = vunpack.c.l.b16 %v15
  %v410 = vunpack.c.l.b16 %v16
  %v411 = vunpack.c.l.b16 %v17
  %v412 = vunpack.c.l.b16 %v18
  %v413 = vunpack.c.l.b16 %v19
  %v414 = vunpack.c.l.b16 %v20
  %v415 = vunpack.c.l.b16 %v21
  %v416 = vunpack.c.l.b16 %v22
  %v417 = vunpack.c.l.b16 %v23
  %v418 = vunpack.c.l.b16 %v24
  %v419 = vunpack.c.l.b16 %v25
  %v420 = vunpack.c.l.b16 %v26
  %v421 = vunpack.c.l.b16 %v27
  %v422 = vunpack.c.l.b16 %v28
  %v423 = vunpack.c.l.b16 %v29
  %v424 = vunpack.c.l.b16 %v30
  %v425 = vunpack.c.l.b16 %v31
  %v426 = vunpack.c.l.b16 %v32
  %v427 = vunpack.c.l.b16 %v33
  %v428 = vunpack.c.l.b16 %v34
  %v429 = vunpack.c.l.b16 %v35
  %v430 = vunpack.c.l.b16 %v36
  %v431 = vunpack.c.l.b16 %v37
  %v432 = vunpack.c.l.b16 %v38
  %v433 = vunpack.c.l.b16 %v39
  %v434 = vunpack.c.l.b16 %v40
  %v435 = vunpack.c.l.b16 %v41
  %v436 = vunpack.c.l.b16 %v42
  %v437 = vunpack.c.l.b16 %v43
  %v438 = vunpack.c.l.b16 %v44
  %v439 = vunpack.c.l.b16 %v45
  %v440 = vunpack.c.l.b16 %v46
  %v441 = vunpack.c.l.b16 %v47
  %v442 = vunpack.c.l.b16 %v48
  %v443 = vunpack.c.l.b16 %v49
  %v444 = vunpack.c.l.b16 %v50
  %v445 = vunpack.c.l.b16 %v51
  %v446 = vunpack.c.l.b16 %v52
  %v447 = vunpack.c.l.b16 %v53
  %v448 = vunpack.c.l.b16 %v54
  %v449 = vunpack.c.l.b16 %v55
  %v450 = vunpack.c.l.b16 %v56
  %v451 = vunpack.c.l.b16 %v57
  %v452 = vunpack.c.l.b16 %v58
  %v453 = vunpack.c.l.b16 %v59
  %v454 = vunpack.c.l.b16 %v60
  %v455 = vunpack.c.l.b16 %v61
  %v456 = vunpack.c.l.b16 %v62
  %v457 = vunpack.c.l.b16 %v63
  %v458 = vunpack.c.l.b16 %v64
  %v459 = vunpack.c.l.b16 %v65
  %v460 = vunpack.c.l.b16 %v66
  %v461 = vunpack.c.l.b16 %v67
  %v462 = vunpack.c.l.b16 %v68
  %v463 = vunpack.c.l.b16 %v69
  %v464 = vunpack.c.l.b16 %v70
  %v465 = vunpack.c.l.b16 %v71
  %v466 = vunpack.c.l.b16 %v72
  %v467 = vunpack.c.l.b16 %v73
  %v468 = vunpack.c.l.b16 %v74
  %v469 = vunpack.c.l.b16 %v75
  %v470 = vunpack.c.l.b16 %v76
  %v471 = vunpack.c.l.b16 %v77
  %v472 = vunpack.c.l.b16 %v78
  %v473 = vunpack.c.l.b16 %v79
  %v474 = vunpack.c.l.b16 %v80
  %v475 = vunpack.c.l.b16 %v81
  %v476 = vunpack.c.l.b16 %v82
  %v477 = vunpack.c.l.b16 %v83
  %v478 = vunpack.c.l.b16 %v84
  %v479 = vunpack.c.l.b16 %v85
  %v480 = vunpack.c.l.b16 %v86
  %v481 = vunpack.c.l.b16 %v87
  %v482 = vunpack.c.l.b16 %v88
  %v483 = vunpack.c.l.b16 %v89
  %v484 = vunpack.c.l.b16 %v90
  %v485 = vunpack.c.l.b16 %v91
  %v486 = vunpack.c.l.b16 %v92
  %v487 = vunpack.c.l.b16 %v93
  %v488 = vunpack.c.l.b16 %v94
  %v489 = vunpack.c.l.b16 %v95
  %v490 = vunpack.c.l.b16 %v96
  %v491 = vunpack.c.l.b16 %v97
  %v492 = vunpack.c.l.b16 %v98
  %v493 = vunpack.c.l.b16 %v99
  %v494 = vunpack.c.l.b16 %v100
  %v495 = vunpack.c.l.b16 %v101
  %v496 = vunpack.c.l.b16 %v102
  %v497 = vunpack.c.l.b16 %v103
  %v498 = vunpack.c.l.b16 %v104
  %v499 = vunpack.c.l.b16 %v105
  %v500 = vunpack.c.l.b16 %v106
  %v501 = vunpack.c.l.b16 %v107
  %v502 = vunpack.c.l.b16 %v108
  %v503 = vunpack.c.l.b16 %v109
  %v504 = vunpack.c.l.b16 %v110
  %v505 = vunpack.c.l.b16 %v111
  %v506 = vunpack.c.l.b16 %v112
  %v507 = vunpack.c.l.b16 %v113
  %v508 = vunpack.c.l.b16 %v114
  %v509 = vunpack.c.l.b16 %v115
  %v510 = vunpack.c.l.b16 %v116
  %v511 = vunpack.c.l.b16 %v117
  %v512 = vunpack.c.l.b16 %v118
  %v513 = vunpack.c.l.b16 %v119
  %v514 = vunpack.c.l.b16 %v120
  %v515 = vunpack.c.l.b16 %v121
  %v516 = vunpack.c.l.b16 %v122
  %v517 = vunpack.c.l.b16 %v123
  %v518 = vunpack.c.l.b16 %v124
  %v519 = vunpack.c.l.b16 %v125
  %v520 = vunpack.c.l.b16 %v126
  %v521 = vunpack.c.l.b16 %v127
  %v522 = vunpack.c.l.b16 %v128
  %v523 = vunpack.c.l.b16 %v129
  %v524 = vunpack.c.l.b16 %v130
  %v525 = vunpack.c.l.b16 %v131
  %v526 = vunpack.c.l.b16 %v132
  %v527 = vunpack.c.l.b16 %v133
  %v528 = vunpack.c.l.b16 %v134
  %v529 = vunpack.c.l.b16 %v135
  %v530 = vunpack.c.l.b16 %v136
  %v531 = vunpack.c.l.b16 %v137
  %v532 = vunpack.c.l.b16 %v138
  %v533 = vunpack.c.l.b16 %v139
  %v534 = vunpack.c.l.b16 %v140
  %v535 = vunpack.c.l.b16 %v141
  %v536 = vunpack.c.l.b16 %v142
  %v537 = vunpack.c.l.b16 %v143
  %v538 = vunpack.c.l.b16 %v144
  %v539 = vunpack.c.l.b16 %v145
  %v540 = vunpack.c.l.b16 %v146
  %v541 = vunpack.c.l.b16 %v147
  %v542 = vunpack.c.l.b16 %v148
  %v543 = vunpack.c.l.b16 %v149
  %v544 = vunpack.c.l.b16 %v150
  %v545 = vunpack.c.l.b16 %v151
  %v546 = vunpack.c.l.b16 %v152
  %v547 = vunpack.c.l.b16 %v153
  %v548 = vunpack.c.l.b16 %v154
  %v549 = vunpack.c.l.b16 %v155
  %v550 = vunpack.c.l.b16 %v156
  %v551 = vunpack.c.l.b16 %v157
  %v552 = vunpack.c.l.b16 %v158
  %v553 = vunpack.c.l.b16 %v159
  %v554 = vunpack.c.l.b16 %v160
  %v555 = vunpack.c.l.b16 %v161
  %v556 = vunpack.c.l.b16 %v162
  %v557 = vunpack.c.l.b16 %v163
  %v558 = vunpack.c.l.b16 %v164
  %v559 = vunpack.c.l.b16 %v165
  %v560 = vunpack.c.l.b16 %v166
  %v561 = vunpack.c.l.b16 %v167
  %v562 = vunpack.c.l.b16 %v168
  %v563 = vunpack.c.l.b16 %v169
  %v564 = vunpack.c.l.b16 %v170
  %v565 = vunpack.c.l.b16 %v171
  %v566 = vunpack.c.l.b16 %v172
  %v567 = vunpack.c.l.b16 %v173
  %v568 = vunpack.c.l.b16 %v174
  %v569 = vunpack.c.l.b16 %v175
  %v570 = vunpack.c.l.b16 %v176
  %v571 = vunpack.c.l.b16 %v177
  %v572 = vunpack.c.l.b16 %v178
  %v573 = vunpack.c.l.b16 %v179
  %v574 = vunpack.c.l.b16 %v180
  %v575 = vunpack.c.l.b16 %v181
  %v576 = vunpack.c.l.b16 %v182
  %v577 = vunpack.c.l.b16 %v183
  %v578 = vunpack.c.l.b16 %v184
  %v579 = vunpack.c.l.b16 %v185
  %v580 = vunpack.c.l.b16 %v186
  %v581 = vunpack.c.l.b16 %v187
  %v582 = vunpack.c.l.b16 %v188
  %v583 = vunpack.c.l.b16 %v189
  %v584 = vunpack.c.l.b16 %v190
  %v585 = vunpack.c.l.b16 %v191
  %v586 = vunpack.c.l.b16 %v192
  %v587 = vunpack.c.l.b16 %v193
  %v588 = vunpack.c.l.b16 %v194
  %v589 = vunpack.c.l.b16 %v195
  %v590 = vunpack.c.l.b16 %v196
  %v591 = vunpack.c.l.b16 %v197
  %v592 = vunpack.c.l.b16 %v198
  %v593 = vunpack.c.l.b16 %v199
  %v594 = vunpack.c.l.b16 %v200
  %v595 = vunpack.c.l.b16 %v201
  %v596 = vunpack.c.l.b16 %v202
  %v597 = vunpack.c.l.b16 %v203
  %v598 = vunpack.c.l.b16 %v204
  %v599 = vunpack.c.l.b16 %v205
  %v600 = vunpack.c.l.b16 %v206
  %v601 = vunpack.c.l.b16 %v207
  %v602 = vunpack.c.l.b16 %v208
  %v603 = vunpack.c.l.b16 %v209
  %v604 = vunpack.c.l.b16 %v210
  %v605 = vpack.c.b16 %v410, %v409
  %v606 = vpack.c.b16 %v412, %v411
  %v607 = vpack.c.b16 %v414, %v413
  %v608 = vpack.c.b16 %v416, %v415
  %v609 = vpack.c.b16 %v418, %v417
  %v610 = vpack.c.b16 %v420, %v419
  %v611 = vpack.c.b16 %v422, %v421
  %v612 = vpack.c.b16 %v424, %v423
  %v613 = vpack.c.b16 %v426, %v425
  %v614 = vpack.c.b16 %v428, %v427
  %v615 = vpack.c.b16 %v430, %v429
  %v616 = vpack.c.b16 %v432, %v431
  %v617 = vpack.c.b16 %v434, %v433
  %v618 = vpack.c.b16 %v436, %v435
  %v619 = vpack.c.b16 %v438, %v437
  %v620 = vpack.c.b16 %v440, %v439
  %v621 = vpack.c.b16 %v442, %v441
  %v622 = vpack.c.b16 %v444, %v443
  %v623 = vpack.c.b16 %v446, %v445
  %v624 = vpack.c.b16 %v448, %v447
  %v625 = vpack.c.b16 %v450, %v449
  %v626 = vpack.c.b16 %v452, %v451
  %v627 = vpack.c.b16 %v454, %v453
  %v628 = vpack.c.b16 %v456, %v455
  %v629 = vpack.c.b16 %v458, %v457
  %v630 = vpack.c.b16 %v460, %v459
  %v631 = vpack.c.b16 %v462, %v461
  %v632 = vpack.c.b16 %v464, %v463
  %v633 = vpack.c.b16 %v466, %v465
  %v634 = vpack.c.b16 %v468, %v467
  %v635 = vpack.c.b16 %v470, %v469
  %v636 = vpack.c.b16 %v472, %v471
  %v637 = vpack.c.b16 %v474, %v473
  %v638 = vpack.c.b16 %v476, %v475
  %v639 = vpack.c.b16 %v478, %v477
  %v640 = vpack.c.b16 %v480, %v479
  %v641 = vpack.c.b16 %v482, %v481
  %v642 = vpack.c.b16 %v484, %v483
  %v643 = vpack.c.b16 %v486, %v485
  %v644 = vpack.c.b16 %v488, %v487
  %v645 = vpack.c.b16 %v490, %v489
  %v646 = vpack.c.b16 %v492, %v491
  %v647 = vpack.c.b16 %v494, %v493
  %v648 = vpack.c.b16 %v496, %v495
  %v649 = vpack.c.b16 %v498, %v497
  %v650 = vpack.c.b16 %v500, %v499
  %v651 = vpack.c.b16 %v502, %v501
  %v652 = vpack.c.b16 %v504, %v503
  %v653 = vpack.c.b16 %v506, %v505
  %v654 = vpack.c.b16 %v508, %v507
  %v655 = vpack.c.b16 %v510, %v509
  %v656 = vpack.c.b16 %v512, %v511
  %v657 = vpack.c.b16 %v514, %v513
  %v658 = vpack.c.b16 %v516, %v515
  %v659 = vpack.c.b16 %v518, %v517
  %v660 = vpack.c.b16 %v520, %v519
  %v661 = vpack.c.b16 %v522, %v521
  %v662 = vpack.c.b16 %v524, %v523
  %v663 = vpack.c.b16 %v526, %v525
  %v664 = vpack.c.b16 %v528, %v527
  %v665 = vpack.c.b16 %v530, %v529
  %v666 = vpack.c.b16 %v532, %v531
  %v667 = vpack.c.b16 %v534, %v533
  %v668 = vpack.c.b16 %v536, %v535
  %v669 = vpack.c.b16 %v538, %v537
  %v670 = vpack.c.b16 %v540, %v539
  %v671 = vpack.c.b16 %v542, %v541
  %v672 = vpack.c.b16 %v544, %v543
  %v673 = vpack.c.b16 %v546, %v545
  %v674 = vpack.c.b16 %v548, %v547
  %v675 = vpack.c.b16 %v550, %v549
  %v676 = vpack.c.b16 %v552, %v551
  %v677 = vpack.c.b16 %v554, %v553
  %v678 = vpack.c.b16 %v556, %v555
  %v679 = vpack.c.b16 %v558, %v557
  %v680 = vpack.c.b16 %v560, %v559
  %v681 = vpack.c.b16 %v562, %v561
  %v682 = vpack.c.b16 %v564, %v563
  %v683 = vpack.c.b16 %v566, %v565
  %v684 = vpack.c.b16 %v568, %v567
  %v685 = vpack.c.b16 %v570, %v569
  %v686 = vpack.c.b16 %v572, %v571
  %v687 = vpack.c.b16 %v574, %v573
  %v688 = vpack.c.b16 %v576, %v575
  %v689 = vpack.c.b16 %v578, %v577
  %v690 = vpack.c.b16 %v580, %v579
  %v691 = vpack.c.b16 %v582, %v581
  %v692 = vpack.c.b16 %v584, %v583
  %v693 = vpack.c.b16 %v586, %v585
  %v694 = vpack.c.b16 %v588, %v587
  %v695 = vpack.c.b16 %v590, %v589
  %v696 = vpack.c.b16 %v592, %v591
  %v697 = vpack.c.b16 %v594, %v593
  %v698 = vpack.c.b16 %v596, %v595
  %v699 = vpack.c.b16 %v598, %v597
  %v700 = vpack.c.b16 %v600, %v599
  %v701 = vpack.c.b16 %v602, %v601
  %v702 = vpack.c.b16 %v604, %v603
  %v705 = vunpack.c.l.b16 %v211
  %v706 = vunpack.c.l.b16 %v212
  %v707 = vpack.c.b16 %v706, %v705
  %vm708 = vcmask 72704
  %v710 = vsel %vm708, %v605, 0
  %v713 = vsel %vm708, %v606, 0
  %v716 = vsel %vm708, %v607, 0
  %v719 = vsel %vm708, %v608, 0
  %v722 = vsel %vm708, %v609, 0
  %v725 = vsel %vm708, %v610, 0
  %v728 = vsel %vm708, %v611, 0
  %v731 = vsel %vm708, %v612, 0
  %v734 = vsel %vm708, %v613, 0
  %v737 = vsel %vm708, %v614, 0
  %v740 = vsel %vm708, %v615, 0
  %v743 = vsel %vm708, %v616, 0
  %v746 = vsel %vm708, %v617, 0
  %v749 = vsel %vm708, %v618, 0
  %v752 = vsel %vm708, %v619, 0
  %v755 = vsel %vm708, %v620, 0
  %v758 = vsel %vm708, %v621, 0
  %v761 = vsel %vm708, %v622, 0
  %v764 = vsel %vm708, %v623, 0
  %v767 = vsel %vm708, %v624, 0
  %v770 = vsel %vm708, %v625, 0
  %v773 = vsel %vm708, %v626, 0
  %v776 = vsel %vm708, %v627, 0
  %v779 = vsel %vm708, %v628, 0
  %v782 = vsel %vm708, %v629, 0
  %v785 = vsel %vm708, %v630, 0
  %v788 = vsel %vm708, %v631, 0
  %v791 = vsel %vm708, %v632, 0
  %v794 = vsel %vm708, %v633, 0
  %v797 = vsel %vm708, %v634, 0
  %v800 = vsel %vm708, %v635, 0
  %v803 = vsel %vm708, %v636, 0
  %v806 = vsel %vm708, %v637, 0
  %v809 = vsel %vm708, %v638, 0
  %v812 = vsel %vm708, %v639, 0
  %v815 = vsel %vm708, %v640, 0
  %v818 = vsel %vm708, %v641, 0
  %v821 = vsel %vm708, %v642, 0
  %v824 = vsel %vm708, %v643, 0
  %v827 = vsel %vm708, %v644, 0
  %v830 = vsel %vm708, %v645, 0
  %v833 = vsel %vm708, %v646, 0
  %v836 = vsel %vm708, %v647, 0
  %v839 = vsel %vm708, %v648, 0
  %v842 = vsel %vm708, %v649, 0
  %v845 = vsel %vm708, %v650, 0
  %v848 = vsel %vm708, %v651, 0
  %v851 = vsel %vm708, %v652, 0
  %v854 = vsel %vm708, %v653, 0
  %v857 = vsel %vm708, %v654, 0
  %v860 = vsel %vm708, %v655, 0
  %v863 = vsel %vm708, %v656, 0
  %v866 = vsel %vm708, %v657, 0
  %v869 = vsel %vm708, %v658, 0
  %v872 = vsel %vm708, %v659, 0
  %v875 = vsel %vm708, %v660, 0
  %v878 = vsel %vm708, %v661, 0
  %v881 = vsel %vm708, %v662, 0
  %v884 = vsel %vm708, %v663, 0
  %v887 = vsel %vm708, %v664, 0
  %v890 = vsel %vm708, %v665, 0
  %v893 = vsel %vm708, %v666, 0
  %v896 = vsel %vm708, %v667, 0
  %v899 = vsel %vm708, %v668, 0
  %v902 = vsel %vm708, %v669, 0
  %v905 = vsel %vm708, %v670, 0
  %v908 = vsel %vm708, %v671, 0
  %v911 = vsel %vm708, %v672, 0
  %v914 = vsel %vm708, %v673, 0
  %v917 = vsel %vm708, %v674, 0
  %v920 = vsel %vm708, %v675, 0
  %v923 = vsel %vm708, %v676, 0
  %v926 = vsel %vm708, %v677, 0
  %v929 = vsel %vm708, %v678, 0
  %v932 = vsel %vm708, %v679, 0
  %v935 = vsel %vm708, %v680, 0
  %v938 = vsel %vm708, %v681, 0
  %v941 = vsel %vm708, %v682, 0
  %v944 = vsel %vm708, %v683, 0
  %v947 = vsel %vm708, %v684, 0
  %v950 = vsel %vm708, %v685, 0
  %v953 = vsel %vm708, %v686, 0
  %v956 = vsel %vm708, %v687, 0
  %v959 = vsel %vm708, %v688, 0
  %v962 = vsel %vm708, %v689, 0
  %v965 = vsel %vm708, %v690, 0
  %v968 = vsel %vm708, %v691, 0
  %v971 = vsel %vm708, %v692, 0
  %v974 = vsel %vm708, %v693, 0
  %v977 = vsel %vm708, %v694, 0
  %v980 = vsel %vm708, %v695, 0
  %v983 = vsel %vm708, %v696, 0
  %v986 = vsel %vm708, %v697, 0
  %v989 = vsel %vm708, %v698, 0
  %v992 = vsel %vm708, %v699, 0
  %v995 = vsel %vm708, %v700, 0
  %v998 = vsel %vm708, %v701, 0
  %v1001 = vsel %vm708, %v702, 0
  %vm1003 = vcmask 1043456
  %vm1004 = vcmask 1044480
  %v1005 = vsel %vm1003, 4294967295, 65535
  %v1006 = vsel %vm1004, %v1005, 0
  %v1008 = vand.u32 %v707, %v1006
  %1010 = vmatprep.subr.bf16.mxu0 0
  %1011 = vmatpush1.bf16.msra.mxu0 %v1008
  %1012 = vmatprep.subr.bf16.mxu0 0
  %1013 = vmatpush1.bf16.msra.mxu0 0
  %1014 = vmatprep.subr.bf16.mxu0 0
  %1015 = vmatpush1.bf16.msra.mxu0 0
  %1016 = vmatprep.subr.bf16.mxu0 0
  %1017 = vmatpush1.bf16.msra.mxu0 0
  %1018 = vmatprep.subr.bf16.mxu0 0
  %1019 = vmatpush1.bf16.msra.mxu0 0
  %1020 = vmatprep.subr.bf16.mxu0 0
  %1021 = vmatpush1.bf16.msra.mxu0 0
  %1022 = vmatprep.subr.bf16.mxu0 0
  %1023 = vmatpush1.bf16.msra.mxu0 0
  %1024 = vmatprep.subr.bf16.mxu0 0
  %1025 = vmatpush1.bf16.msra.mxu0 0
  %1026 = vmatprep.subr.bf16.mxu0 0
  %1027 = vmatpush1.bf16.msra.mxu0 0
  %1028 = vmatprep.subr.bf16.mxu0 0
  %1029 = vmatpush1.bf16.msra.mxu0 0
  %1030 = vmatprep.subr.bf16.mxu0 0
  %1031 = vmatpush1.bf16.msra.mxu0 0
  %1032 = vmatprep.subr.bf16.mxu0 0
  %1033 = vmatpush1.bf16.msra.mxu0 0
  %1034 = vmatprep.subr.bf16.mxu0 0
  %1035 = vmatpush1.bf16.msra.mxu0 0
  %1036 = vmatprep.subr.bf16.mxu0 0
  %1037 = vmatpush1.bf16.msra.mxu0 0
  %1038 = vmatprep.subr.bf16.mxu0 0
  %1039 = vmatpush1.bf16.msra.mxu0 0
  %1040 = vmatprep.subr.bf16.mxu0 0
  %1041 = vmatpush1.bf16.msra.mxu0 0
  %1042 = vmatprep.mubr.bf16.mxu0 0
  %1043 = vmatmul.mubr.bf16.gmra.mrb[0].mxu0 %v710
  %v1044 = vpop.f32.mrb[0].mxu0
  %v1045 = vadd.f32 0.0, %v1044
  %v1046 = vpop.f32.mrb[0].mxu0
  %v1047 = vpop.f32.mrb[0].mxu0
  %v1048 = vadd.f32 0.0, %v1047
  %v1049 = vpop.f32.mrb[0].mxu0
  %1050 = vmatprep.mubr.bf16.mxu0 0
  %1051 = vmatmul.mubr.bf16.gmra.mrb[0].mxu0 %v713
  %v1052 = vpop.f32.mrb[0].mxu0
  %v1053 = vadd.f32 0.0, %v1052
  %v1054 = vpop.f32.mrb[0].mxu0
  %v1055 = vpop.f32.mrb[0].mxu0
  %v1056 = vadd.f32 0.0, %v1055
  %v1057 = vpop.f32.mrb[0].mxu0
  %1058 = vmatprep.mubr.bf16.mxu0 0
  %1059 = vmatmul.mubr.bf16.gmra.mrb[0].mxu0 %v716
  %v1060 = vpop.f32.mrb[0].mxu0
  %v1061 = vadd.f32 0.0, %v1060
  %v1062 = vpop.f32.mrb[0].mxu0
  %v1063 = vpop.f32.mrb[0].mxu0
  %v1064 = vadd.f32 0.0, %v1063
  %v1065 = vpop.f32.mrb[0].mxu0
  %1066 = vmatprep.mubr.bf16.mxu0 0
  %1067 = vmatmul.mubr.bf16.gmra.mrb[0].mxu0 %v719
  %v1068 = vpop.f32.mrb[0].mxu0
  %v1069 = vadd.f32 0.0, %v1068
  %v1070 = vpop.f32.mrb[0].mxu0
  %v1071 = vpop.f32.mrb[0].mxu0
  %v1072 = vadd.f32 0.0, %v1071
  %v1073 = vpop.f32.mrb[0].mxu0
  %1074 = vmatprep.mubr.bf16.mxu0 0
  %1075 = vmatmul.mubr.bf16.gmra.mrb[0].mxu0 %v722
  %v1076 = vpop.f32.mrb[0].mxu0
  %v1077 = vadd.f32 0.0, %v1076
  %v1078 = vpop.f32.mrb[0].mxu0
  %v1079 = vpop.f32.mrb[0].mxu0
  %v1080 = vadd.f32 0.0, %v1079
  %v1081 = vpop.f32.mrb[0].mxu0
  %1082 = vmatprep.mubr.bf16.mxu0 0
  %1083 = vmatmul.mubr.bf16.gmra.mrb[0].mxu0 %v725
  %v1084 = vpop.f32.mrb[0].mxu0
  %v1085 = vadd.f32 0.0, %v1084
  %v1086 = vpop.f32.mrb[0].mxu0
  %v1087 = vpop.f32.mrb[0].mxu0
  %v1088 = vadd.f32 0.0, %v1087
  %v1089 = vpop.f32.mrb[0].mxu0
  %1090 = vmatprep.mubr.bf16.mxu0 0
  %1091 = vmatmul.mubr.bf16.gmra.mrb[0].mxu0 %v728
  %v1092 = vpop.f32.mrb[0].mxu0
  %v1093 = vadd.f32 0.0, %v1092
  %v1094 = vpop.f32.mrb[0].mxu0
  %v1095 = vpop.f32.mrb[0].mxu0
  %v1096 = vadd.f32 0.0, %v1095
  %v1097 = vpop.f32.mrb[0].mxu0
  %1098 = vmatprep.mubr.bf16.mxu0 0
  %1099 = vmatmul.mubr.bf16.gmra.mrb[0].mxu0 %v731
  %v1100 = vpop.f32.mrb[0].mxu0
  %v1101 = vadd.f32 0.0, %v1100
  %v1102 = vpop.f32.mrb[0].mxu0
  %v1103 = vpop.f32.mrb[0].mxu0
  %v1104 = vadd.f32 0.0, %v1103
  %v1105 = vpop.f32.mrb[0].mxu0
  %1106 = vmatprep.mubr.bf16.mxu0 0
  %1107 = vmatmul.mubr.bf16.gmra.mrb[0].mxu0 %v734
  %v1108 = vpop.f32.mrb[0].mxu0
  %v1109 = vadd.f32 0.0, %v1108
  %v1110 = vpop.f32.mrb[0].mxu0
  %v1111 = vpop.f32.mrb[0].mxu0
  %v1112 = vadd.f32 0.0, %v1111
  %v1113 = vpop.f32.mrb[0].mxu0
  %1114 = vmatprep.mubr.bf16.mxu0 0
  %1115 = vmatmul.mubr.bf16.gmra.mrb[0].mxu0 %v737
  %v1116 = vpop.f32.mrb[0].mxu0
  %v1117 = vadd.f32 0.0, %v1116
  %v1118 = vpop.f32.mrb[0].mxu0
  %v1119 = vpop.f32.mrb[0].mxu0
  %v1120 = vadd.f32 0.0, %v1119
  %v1121 = vpop.f32.mrb[0].mxu0
  %1122 = vmatprep.mubr.bf16.mxu0 0
  %1123 = vmatmul.mubr.bf16.gmra.mrb[0].mxu0 %v740
  %v1124 = vpop.f32.mrb[0].mxu0
  %v1125 = vadd.f32 0.0, %v1124
  %v1126 = vpop.f32.mrb[0].mxu0
  %v1127 = vpop.f32.mrb[0].mxu0
  %v1128 = vadd.f32 0.0, %v1127
  %v1129 = vpop.f32.mrb[0].mxu0
  %1130 = vmatprep.mubr.bf16.mxu0 0
  %1131 = vmatmul.mubr.bf16.gmra.mrb[0].mxu0 %v743
  %v1132 = vpop.f32.mrb[0].mxu0
  %v1133 = vadd.f32 0.0, %v1132
  %v1134 = vpop.f32.mrb[0].mxu0
  %v1135 = vpop.f32.mrb[0].mxu0
  %v1136 = vadd.f32 0.0, %v1135
  %v1137 = vpop.f32.mrb[0].mxu0
  %1138 = vmatprep.mubr.bf16.mxu0 0
  %1139 = vmatmul.mubr.bf16.gmra.mrb[0].mxu0 %v746
  %v1140 = vpop.f32.mrb[0].mxu0
  %v1141 = vadd.f32 0.0, %v1140
  %v1142 = vpop.f32.mrb[0].mxu0
  %v1143 = vpop.f32.mrb[0].mxu0
  %v1144 = vadd.f32 0.0, %v1143
  %v1145 = vpop.f32.mrb[0].mxu0
  %1146 = vmatprep.mubr.bf16.mxu0 0
  %1147 = vmatmul.mubr.bf16.gmra.mrb[0].mxu0 %v749
  %v1148 = vpop.f32.mrb[0].mxu0
  %v1149 = vadd.f32 0.0, %v1148
  %v1150 = vpop.f32.mrb[0].mxu0
  %v1151 = vpop.f32.mrb[0].mxu0
  %v1152 = vadd.f32 0.0, %v1151
  %v1153 = vpop.f32.mrb[0].mxu0
  %1154 = vmatprep.mubr.bf16.mxu0 0
  %1155 = vmatmul.mubr.bf16.gmra.mrb[0].mxu0 %v752
  %v1156 = vpop.f32.mrb[0].mxu0
  %v1157 = vadd.f32 0.0, %v1156
  %v1158 = vpop.f32.mrb[0].mxu0
  %v1159 = vpop.f32.mrb[0].mxu0
  %v1160 = vadd.f32 0.0, %v1159
  %v1161 = vpop.f32.mrb[0].mxu0
  %1162 = vmatprep.mubr.bf16.mxu0 0
  %1163 = vmatmul.mubr.bf16.gmra.mrb[0].mxu0 %v755
  %v1164 = vpop.f32.mrb[0].mxu0
  %v1165 = vadd.f32 0.0, %v1164
  %v1166 = vpop.f32.mrb[0].mxu0
  %v1167 = vpop.f32.mrb[0].mxu0
  %v1168 = vadd.f32 0.0, %v1167
  %v1169 = vpop.f32.mrb[0].mxu0
  %1170 = vmatprep.mubr.bf16.mxu0 0
  %1171 = vmatmul.mubr.bf16.gmra.mrb[0].mxu0 %v758
  %v1172 = vpop.f32.mrb[0].mxu0
  %v1173 = vadd.f32 0.0, %v1172
  %v1174 = vpop.f32.mrb[0].mxu0
  %v1175 = vpop.f32.mrb[0].mxu0
  %v1176 = vadd.f32 0.0, %v1175
  %v1177 = vpop.f32.mrb[0].mxu0
  %1178 = vmatprep.mubr.bf16.mxu0 0
  %1179 = vmatmul.mubr.bf16.gmra.mrb[0].mxu0 %v761
  %v1180 = vpop.f32.mrb[0].mxu0
  %v1181 = vadd.f32 0.0, %v1180
  %v1182 = vpop.f32.mrb[0].mxu0
  %v1183 = vpop.f32.mrb[0].mxu0
  %v1184 = vadd.f32 0.0, %v1183
  %v1185 = vpop.f32.mrb[0].mxu0
  %1186 = vmatprep.mubr.bf16.mxu0 0
  %1187 = vmatmul.mubr.bf16.gmra.mrb[0].mxu0 %v764
  %v1188 = vpop.f32.mrb[0].mxu0
  %v1189 = vadd.f32 0.0, %v1188
  %v1190 = vpop.f32.mrb[0].mxu0
  %v1191 = vpop.f32.mrb[0].mxu0
  %v1192 = vadd.f32 0.0, %v1191
  %v1193 = vpop.f32.mrb[0].mxu0
  %1194 = vmatprep.mubr.bf16.mxu0 0
  %1195 = vmatmul.mubr.bf16.gmra.mrb[0].mxu0 %v767
  %v1196 = vpop.f32.mrb[0].mxu0
  %v1197 = vadd.f32 0.0, %v1196
  %v1198 = vpop.f32.mrb[0].mxu0
  %v1199 = vpop.f32.mrb[0].mxu0
  %v1200 = vadd.f32 0.0, %v1199
  %v1201 = vpop.f32.mrb[0].mxu0
  %1202 = vmatprep.mubr.bf16.mxu0 0
  %1203 = vmatmul.mubr.bf16.gmra.mrb[0].mxu0 %v770
  %v1204 = vpop.f32.mrb[0].mxu0
  %v1205 = vadd.f32 0.0, %v1204
  %v1206 = vpop.f32.mrb[0].mxu0
  %v1207 = vpop.f32.mrb[0].mxu0
  %v1208 = vadd.f32 0.0, %v1207
  %v1209 = vpop.f32.mrb[0].mxu0
  %1210 = vmatprep.mubr.bf16.mxu0 0
  %1211 = vmatmul.mubr.bf16.gmra.mrb[0].mxu0 %v773
  %v1212 = vpop.f32.mrb[0].mxu0
  %v1213 = vadd.f32 0.0, %v1212
  %v1214 = vpop.f32.mrb[0].mxu0
  %v1215 = vpop.f32.mrb[0].mxu0
  %v1216 = vadd.f32 0.0, %v1215
  %v1217 = vpop.f32.mrb[0].mxu0
  %1218 = vmatprep.mubr.bf16.mxu0 0
  %1219 = vmatmul.mubr.bf16.gmra.mrb[0].mxu0 %v776
  %v1220 = vpop.f32.mrb[0].mxu0
  %v1221 = vadd.f32 0.0, %v1220
  %v1222 = vpop.f32.mrb[0].mxu0
  %v1223 = vpop.f32.mrb[0].mxu0
  %v1224 = vadd.f32 0.0, %v1223
  %v1225 = vpop.f32.mrb[0].mxu0
  %1226 = vmatprep.mubr.bf16.mxu0 0
  %1227 = vmatmul.mubr.bf16.gmra.mrb[0].mxu0 %v779
  %v1228 = vpop.f32.mrb[0].mxu0
  %v1229 = vadd.f32 0.0, %v1228
  %v1230 = vpop.f32.mrb[0].mxu0
  %v1231 = vpop.f32.mrb[0].mxu0
  %v1232 = vadd.f32 0.0, %v1231
  %v1233 = vpop.f32.mrb[0].mxu0
  %1234 = vmatprep.mubr.bf16.mxu0 0
  %1235 = vmatmul.mubr.bf16.gmra.mrb[0].mxu0 %v782
  %v1236 = vpop.f32.mrb[0].mxu0
  %v1237 = vadd.f32 0.0, %v1236
  %v1238 = vpop.f32.mrb[0].mxu0
  %v1239 = vpop.f32.mrb[0].mxu0
  %v1240 = vadd.f32 0.0, %v1239
  %v1241 = vpop.f32.mrb[0].mxu0
  %1242 = vmatprep.mubr.bf16.mxu0 0
  %1243 = vmatmul.mubr.bf16.gmra.mrb[0].mxu0 %v785
  %v1244 = vpop.f32.mrb[0].mxu0
  %v1245 = vadd.f32 0.0, %v1244
  %v1246 = vpop.f32.mrb[0].mxu0
  %v1247 = vpop.f32.mrb[0].mxu0
  %v1248 = vadd.f32 0.0, %v1247
  %v1249 = vpop.f32.mrb[0].mxu0
  %1250 = vmatprep.mubr.bf16.mxu0 0
  %1251 = vmatmul.mubr.bf16.gmra.mrb[0].mxu0 %v788
  %v1252 = vpop.f32.mrb[0].mxu0
  %v1253 = vadd.f32 0.0, %v1252
  %v1254 = vpop.f32.mrb[0].mxu0
  %v1255 = vpop.f32.mrb[0].mxu0
  %v1256 = vadd.f32 0.0, %v1255
  %v1257 = vpop.f32.mrb[0].mxu0
  %1258 = vmatprep.mubr.bf16.mxu0 0
  %1259 = vmatmul.mubr.bf16.gmra.mrb[0].mxu0 %v791
  %v1260 = vpop.f32.mrb[0].mxu0
  %v1261 = vadd.f32 0.0, %v1260
  %v1262 = vpop.f32.mrb[0].mxu0
  %v1263 = vpop.f32.mrb[0].mxu0
  %v1264 = vadd.f32 0.0, %v1263
  %v1265 = vpop.f32.mrb[0].mxu0
  %1266 = vmatprep.mubr.bf16.mxu0 0
  %1267 = vmatmul.mubr.bf16.gmra.mrb[0].mxu0 %v794
  %v1268 = vpop.f32.mrb[0].mxu0
  %v1269 = vadd.f32 0.0, %v1268
  %v1270 = vpop.f32.mrb[0].mxu0
  %v1271 = vpop.f32.mrb[0].mxu0
  %v1272 = vadd.f32 0.0, %v1271
  %v1273 = vpop.f32.mrb[0].mxu0
  %1274 = vmatprep.mubr.bf16.mxu0 0
  %1275 = vmatmul.mubr.bf16.gmra.mrb[0].mxu0 %v797
  %v1276 = vpop.f32.mrb[0].mxu0
  %v1277 = vadd.f32 0.0, %v1276
  %v1278 = vpop.f32.mrb[0].mxu0
  %v1279 = vpop.f32.mrb[0].mxu0
  %v1280 = vadd.f32 0.0, %v1279
  %v1281 = vpop.f32.mrb[0].mxu0
  %1282 = vmatprep.mubr.bf16.mxu0 0
  %1283 = vmatmul.mubr.bf16.gmra.mrb[0].mxu0 %v800
  %v1284 = vpop.f32.mrb[0].mxu0
  %v1285 = vadd.f32 0.0, %v1284
  %v1286 = vpop.f32.mrb[0].mxu0
  %v1287 = vpop.f32.mrb[0].mxu0
  %v1288 = vadd.f32 0.0, %v1287
  %v1289 = vpop.f32.mrb[0].mxu0
  %1290 = vmatprep.mubr.bf16.mxu0 0
  %1291 = vmatmul.mubr.bf16.gmra.mrb[0].mxu0 %v803
  %v1292 = vpop.f32.mrb[0].mxu0
  %v1293 = vadd.f32 0.0, %v1292
  %v1294 = vpop.f32.mrb[0].mxu0
  %v1295 = vpop.f32.mrb[0].mxu0
  %v1296 = vadd.f32 0.0, %v1295
  %v1297 = vpop.f32.mrb[0].mxu0
  %1298 = vmatprep.mubr.bf16.mxu0 0
  %1299 = vmatmul.mubr.bf16.gmra.mrb[0].mxu0 %v806
  %v1300 = vpop.f32.mrb[0].mxu0
  %v1301 = vadd.f32 0.0, %v1300
  %v1302 = vpop.f32.mrb[0].mxu0
  %v1303 = vpop.f32.mrb[0].mxu0
  %v1304 = vadd.f32 0.0, %v1303
  %v1305 = vpop.f32.mrb[0].mxu0
  %1306 = vmatprep.mubr.bf16.mxu0 0
  %1307 = vmatmul.mubr.bf16.gmra.mrb[0].mxu0 %v809
  %v1308 = vpop.f32.mrb[0].mxu0
  %v1309 = vadd.f32 0.0, %v1308
  %v1310 = vpop.f32.mrb[0].mxu0
  %v1311 = vpop.f32.mrb[0].mxu0
  %v1312 = vadd.f32 0.0, %v1311
  %v1313 = vpop.f32.mrb[0].mxu0
  %1314 = vmatprep.mubr.bf16.mxu0 0
  %1315 = vmatmul.mubr.bf16.gmra.mrb[0].mxu0 %v812
  %v1316 = vpop.f32.mrb[0].mxu0
  %v1317 = vadd.f32 0.0, %v1316
  %v1318 = vpop.f32.mrb[0].mxu0
  %v1319 = vpop.f32.mrb[0].mxu0
  %v1320 = vadd.f32 0.0, %v1319
  %v1321 = vpop.f32.mrb[0].mxu0
  %1322 = vmatprep.mubr.bf16.mxu0 0
  %1323 = vmatmul.mubr.bf16.gmra.mrb[0].mxu0 %v815
  %v1324 = vpop.f32.mrb[0].mxu0
  %v1325 = vadd.f32 0.0, %v1324
  %v1326 = vpop.f32.mrb[0].mxu0
  %v1327 = vpop.f32.mrb[0].mxu0
  %v1328 = vadd.f32 0.0, %v1327
  %v1329 = vpop.f32.mrb[0].mxu0
  %1330 = vmatprep.mubr.bf16.mxu0 0
  %1331 = vmatmul.mubr.bf16.gmra.mrb[0].mxu0 %v818
  %v1332 = vpop.f32.mrb[0].mxu0
  %v1333 = vadd.f32 0.0, %v1332
  %v1334 = vpop.f32.mrb[0].mxu0
  %v1335 = vpop.f32.mrb[0].mxu0
  %v1336 = vadd.f32 0.0, %v1335
  %v1337 = vpop.f32.mrb[0].mxu0
  %1338 = vmatprep.mubr.bf16.mxu0 0
  %1339 = vmatmul.mubr.bf16.gmra.mrb[0].mxu0 %v821
  %v1340 = vpop.f32.mrb[0].mxu0
  %v1341 = vadd.f32 0.0, %v1340
  %v1342 = vpop.f32.mrb[0].mxu0
  %v1343 = vpop.f32.mrb[0].mxu0
  %v1344 = vadd.f32 0.0, %v1343
  %v1345 = vpop.f32.mrb[0].mxu0
  %1346 = vmatprep.mubr.bf16.mxu0 0
  %1347 = vmatmul.mubr.bf16.gmra.mrb[0].mxu0 %v824
  %v1348 = vpop.f32.mrb[0].mxu0
  %v1349 = vadd.f32 0.0, %v1348
  %v1350 = vpop.f32.mrb[0].mxu0
  %v1351 = vpop.f32.mrb[0].mxu0
  %v1352 = vadd.f32 0.0, %v1351
  %v1353 = vpop.f32.mrb[0].mxu0
  %1354 = vmatprep.mubr.bf16.mxu0 0
  %1355 = vmatmul.mubr.bf16.gmra.mrb[0].mxu0 %v827
  %v1356 = vpop.f32.mrb[0].mxu0
  %v1357 = vadd.f32 0.0, %v1356
  %v1358 = vpop.f32.mrb[0].mxu0
  %v1359 = vpop.f32.mrb[0].mxu0
  %v1360 = vadd.f32 0.0, %v1359
  %v1361 = vpop.f32.mrb[0].mxu0
  %1362 = vmatprep.mubr.bf16.mxu0 0
  %1363 = vmatmul.mubr.bf16.gmra.mrb[0].mxu0 %v830
  %v1364 = vpop.f32.mrb[0].mxu0
  %v1365 = vadd.f32 0.0, %v1364
  %v1366 = vpop.f32.mrb[0].mxu0
  %v1367 = vpop.f32.mrb[0].mxu0
  %v1368 = vadd.f32 0.0, %v1367
  %v1369 = vpop.f32.mrb[0].mxu0
  %1370 = vmatprep.mubr.bf16.mxu0 0
  %1371 = vmatmul.mubr.bf16.gmra.mrb[0].mxu0 %v833
  %v1372 = vpop.f32.mrb[0].mxu0
  %v1373 = vadd.f32 0.0, %v1372
  %v1374 = vpop.f32.mrb[0].mxu0
  %v1375 = vpop.f32.mrb[0].mxu0
  %v1376 = vadd.f32 0.0, %v1375
  %v1377 = vpop.f32.mrb[0].mxu0
  %1378 = vmatprep.mubr.bf16.mxu0 0
  %1379 = vmatmul.mubr.bf16.gmra.mrb[0].mxu0 %v836
  %v1380 = vpop.f32.mrb[0].mxu0
  %v1381 = vadd.f32 0.0, %v1380
  %v1382 = vpop.f32.mrb[0].mxu0
  %v1383 = vpop.f32.mrb[0].mxu0
  %v1384 = vadd.f32 0.0, %v1383
  %v1385 = vpop.f32.mrb[0].mxu0
  %1386 = vmatprep.mubr.bf16.mxu0 0
  %1387 = vmatmul.mubr.bf16.gmra.mrb[0].mxu0 %v839
  %v1388 = vpop.f32.mrb[0].mxu0
  %v1389 = vadd.f32 0.0, %v1388
  %v1390 = vpop.f32.mrb[0].mxu0
  %v1391 = vpop.f32.mrb[0].mxu0
  %v1392 = vadd.f32 0.0, %v1391
  %v1393 = vpop.f32.mrb[0].mxu0
  %1394 = vmatprep.mubr.bf16.mxu0 0
  %1395 = vmatmul.mubr.bf16.gmra.mrb[0].mxu0 %v842
  %v1396 = vpop.f32.mrb[0].mxu0
  %v1397 = vadd.f32 0.0, %v1396
  %v1398 = vpop.f32.mrb[0].mxu0
  %v1399 = vpop.f32.mrb[0].mxu0
  %v1400 = vadd.f32 0.0, %v1399
  %v1401 = vpop.f32.mrb[0].mxu0
  %1402 = vmatprep.mubr.bf16.mxu0 0
  %1403 = vmatmul.mubr.bf16.gmra.mrb[0].mxu0 %v845
  %v1404 = vpop.f32.mrb[0].mxu0
  %v1405 = vadd.f32 0.0, %v1404
  %v1406 = vpop.f32.mrb[0].mxu0
  %v1407 = vpop.f32.mrb[0].mxu0
  %v1408 = vadd.f32 0.0, %v1407
  %v1409 = vpop.f32.mrb[0].mxu0
  %1410 = vmatprep.mubr.bf16.mxu0 0
  %1411 = vmatmul.mubr.bf16.gmra.mrb[0].mxu0 %v848
  %v1412 = vpop.f32.mrb[0].mxu0
  %v1413 = vadd.f32 0.0, %v1412
  %v1414 = vpop.f32.mrb[0].mxu0
  %v1415 = vpop.f32.mrb[0].mxu0
  %v1416 = vadd.f32 0.0, %v1415
  %v1417 = vpop.f32.mrb[0].mxu0
  %1418 = vmatprep.mubr.bf16.mxu0 0
  %1419 = vmatmul.mubr.bf16.gmra.mrb[0].mxu0 %v851
  %v1420 = vpop.f32.mrb[0].mxu0
  %v1421 = vadd.f32 0.0, %v1420
  %v1422 = vpop.f32.mrb[0].mxu0
  %v1423 = vpop.f32.mrb[0].mxu0
  %v1424 = vadd.f32 0.0, %v1423
  %v1425 = vpop.f32.mrb[0].mxu0
  %1426 = vmatprep.mubr.bf16.mxu0 0
  %1427 = vmatmul.mubr.bf16.gmra.mrb[0].mxu0 %v854
  %v1428 = vpop.f32.mrb[0].mxu0
  %v1429 = vadd.f32 0.0, %v1428
  %v1430 = vpop.f32.mrb[0].mxu0
  %v1431 = vpop.f32.mrb[0].mxu0
  %v1432 = vadd.f32 0.0, %v1431
  %v1433 = vpop.f32.mrb[0].mxu0
  %1434 = vmatprep.mubr.bf16.mxu0 0
  %1435 = vmatmul.mubr.bf16.gmra.mrb[0].mxu0 %v857
  %v1436 = vpop.f32.mrb[0].mxu0
  %v1437 = vadd.f32 0.0, %v1436
  %v1438 = vpop.f32.mrb[0].mxu0
  %v1439 = vpop.f32.mrb[0].mxu0
  %v1440 = vadd.f32 0.0, %v1439
  %v1441 = vpop.f32.mrb[0].mxu0
  %1442 = vmatprep.mubr.bf16.mxu0 0
  %1443 = vmatmul.mubr.bf16.gmra.mrb[0].mxu0 %v860
  %v1444 = vpop.f32.mrb[0].mxu0
  %v1445 = vadd.f32 0.0, %v1444
  %v1446 = vpop.f32.mrb[0].mxu0
  %v1447 = vpop.f32.mrb[0].mxu0
  %v1448 = vadd.f32 0.0, %v1447
  %v1449 = vpop.f32.mrb[0].mxu0
  %1450 = vmatprep.mubr.bf16.mxu0 0
  %1451 = vmatmul.mubr.bf16.gmra.mrb[0].mxu0 %v863
  %v1452 = vpop.f32.mrb[0].mxu0
  %v1453 = vadd.f32 0.0, %v1452
  %v1454 = vpop.f32.mrb[0].mxu0
  %v1455 = vpop.f32.mrb[0].mxu0
  %v1456 = vadd.f32 0.0, %v1455
  %v1457 = vpop.f32.mrb[0].mxu0
  %1458 = vmatprep.mubr.bf16.mxu0 0
  %1459 = vmatmul.mubr.bf16.gmra.mrb[0].mxu0 %v866
  %v1460 = vpop.f32.mrb[0].mxu0
  %v1461 = vadd.f32 0.0, %v1460
  %v1462 = vpop.f32.mrb[0].mxu0
  %v1463 = vpop.f32.mrb[0].mxu0
  %v1464 = vadd.f32 0.0, %v1463
  %v1465 = vpop.f32.mrb[0].mxu0
  %1466 = vmatprep.mubr.bf16.mxu0 0
  %1467 = vmatmul.mubr.bf16.gmra.mrb[0].mxu0 %v869
  %v1468 = vpop.f32.mrb[0].mxu0
  %v1469 = vadd.f32 0.0, %v1468
  %v1470 = vpop.f32.mrb[0].mxu0
  %v1471 = vpop.f32.mrb[0].mxu0
  %v1472 = vadd.f32 0.0, %v1471
  %v1473 = vpop.f32.mrb[0].mxu0
  %1474 = vmatprep.mubr.bf16.mxu0 0
  %1475 = vmatmul.mubr.bf16.gmra.mrb[0].mxu0 %v872
  %v1476 = vpop.f32.mrb[0].mxu0
  %v1477 = vadd.f32 0.0, %v1476
  %v1478 = vpop.f32.mrb[0].mxu0
  %v1479 = vpop.f32.mrb[0].mxu0
  %v1480 = vadd.f32 0.0, %v1479
  %v1481 = vpop.f32.mrb[0].mxu0
  %1482 = vmatprep.mubr.bf16.mxu0 0
  %1483 = vmatmul.mubr.bf16.gmra.mrb[0].mxu0 %v875
  %v1484 = vpop.f32.mrb[0].mxu0
  %v1485 = vadd.f32 0.0, %v1484
  %v1486 = vpop.f32.mrb[0].mxu0
  %v1487 = vpop.f32.mrb[0].mxu0
  %v1488 = vadd.f32 0.0, %v1487
  %v1489 = vpop.f32.mrb[0].mxu0
  %1490 = vmatprep.mubr.bf16.mxu0 0
  %1491 = vmatmul.mubr.bf16.gmra.mrb[0].mxu0 %v878
  %v1492 = vpop.f32.mrb[0].mxu0
  %v1493 = vadd.f32 0.0, %v1492
  %v1494 = vpop.f32.mrb[0].mxu0
  %v1495 = vpop.f32.mrb[0].mxu0
  %v1496 = vadd.f32 0.0, %v1495
  %v1497 = vpop.f32.mrb[0].mxu0
  %1498 = vmatprep.mubr.bf16.mxu0 0
  %1499 = vmatmul.mubr.bf16.gmra.mrb[0].mxu0 %v881
  %v1500 = vpop.f32.mrb[0].mxu0
  %v1501 = vadd.f32 0.0, %v1500
  %v1502 = vpop.f32.mrb[0].mxu0
  %v1503 = vpop.f32.mrb[0].mxu0
  %v1504 = vadd.f32 0.0, %v1503
  %v1505 = vpop.f32.mrb[0].mxu0
  %1506 = vmatprep.mubr.bf16.mxu0 0
  %1507 = vmatmul.mubr.bf16.gmra.mrb[0].mxu0 %v884
  %v1508 = vpop.f32.mrb[0].mxu0
  %v1509 = vadd.f32 0.0, %v1508
  %v1510 = vpop.f32.mrb[0].mxu0
  %v1511 = vpop.f32.mrb[0].mxu0
  %v1512 = vadd.f32 0.0, %v1511
  %v1513 = vpop.f32.mrb[0].mxu0
  %1514 = vmatprep.mubr.bf16.mxu0 0
  %1515 = vmatmul.mubr.bf16.gmra.mrb[0].mxu0 %v887
  %v1516 = vpop.f32.mrb[0].mxu0
  %v1517 = vadd.f32 0.0, %v1516
  %v1518 = vpop.f32.mrb[0].mxu0
  %v1519 = vpop.f32.mrb[0].mxu0
  %v1520 = vadd.f32 0.0, %v1519
  %v1521 = vpop.f32.mrb[0].mxu0
  %1522 = vmatprep.mubr.bf16.mxu0 0
  %1523 = vmatmul.mubr.bf16.gmra.mrb[0].mxu0 %v890
  %v1524 = vpop.f32.mrb[0].mxu0
  %v1525 = vadd.f32 0.0, %v1524
  %v1526 = vpop.f32.mrb[0].mxu0
  %v1527 = vpop.f32.mrb[0].mxu0
  %v1528 = vadd.f32 0.0, %v1527
  %v1529 = vpop.f32.mrb[0].mxu0
  %1530 = vmatprep.mubr.bf16.mxu0 0
  %1531 = vmatmul.mubr.bf16.gmra.mrb[0].mxu0 %v893
  %v1532 = vpop.f32.mrb[0].mxu0
  %v1533 = vadd.f32 0.0, %v1532
  %v1534 = vpop.f32.mrb[0].mxu0
  %v1535 = vpop.f32.mrb[0].mxu0
  %v1536 = vadd.f32 0.0, %v1535
  %v1537 = vpop.f32.mrb[0].mxu0
  %1538 = vmatprep.mubr.bf16.mxu0 0
  %1539 = vmatmul.mubr.bf16.gmra.mrb[0].mxu0 %v896
  %v1540 = vpop.f32.mrb[0].mxu0
  %v1541 = vadd.f32 0.0, %v1540
  %v1542 = vpop.f32.mrb[0].mxu0
  %v1543 = vpop.f32.mrb[0].mxu0
  %v1544 = vadd.f32 0.0, %v1543
  %v1545 = vpop.f32.mrb[0].mxu0
  %1546 = vmatprep.mubr.bf16.mxu0 0
  %1547 = vmatmul.mubr.bf16.gmra.mrb[0].mxu0 %v899
  %v1548 = vpop.f32.mrb[0].mxu0
  %v1549 = vadd.f32 0.0, %v1548
  %v1550 = vpop.f32.mrb[0].mxu0
  %v1551 = vpop.f32.mrb[0].mxu0
  %v1552 = vadd.f32 0.0, %v1551
  %v1553 = vpop.f32.mrb[0].mxu0
  %1554 = vmatprep.mubr.bf16.mxu0 0
  %1555 = vmatmul.mubr.bf16.gmra.mrb[0].mxu0 %v902
  %v1556 = vpop.f32.mrb[0].mxu0
  %v1557 = vadd.f32 0.0, %v1556
  %v1558 = vpop.f32.mrb[0].mxu0
  %v1559 = vpop.f32.mrb[0].mxu0
  %v1560 = vadd.f32 0.0, %v1559
  %v1561 = vpop.f32.mrb[0].mxu0
  %1562 = vmatprep.mubr.bf16.mxu0 0
  %1563 = vmatmul.mubr.bf16.gmra.mrb[0].mxu0 %v905
  %v1564 = vpop.f32.mrb[0].mxu0
  %v1565 = vadd.f32 0.0, %v1564
  %v1566 = vpop.f32.mrb[0].mxu0
  %v1567 = vpop.f32.mrb[0].mxu0
  %v1568 = vadd.f32 0.0, %v1567
  %v1569 = vpop.f32.mrb[0].mxu0
  %1570 = vmatprep.mubr.bf16.mxu0 0
  %1571 = vmatmul.mubr.bf16.gmra.mrb[0].mxu0 %v908
  %v1572 = vpop.f32.mrb[0].mxu0
  %v1573 = vadd.f32 0.0, %v1572
  %v1574 = vpop.f32.mrb[0].mxu0
  %v1575 = vpop.f32.mrb[0].mxu0
  %v1576 = vadd.f32 0.0, %v1575
  %v1577 = vpop.f32.mrb[0].mxu0
  %1578 = vmatprep.mubr.bf16.mxu0 0
  %1579 = vmatmul.mubr.bf16.gmra.mrb[0].mxu0 %v911
  %v1580 = vpop.f32.mrb[0].mxu0
  %v1581 = vadd.f32 0.0, %v1580
  %v1582 = vpop.f32.mrb[0].mxu0
  %v1583 = vpop.f32.mrb[0].mxu0
  %v1584 = vadd.f32 0.0, %v1583
  %v1585 = vpop.f32.mrb[0].mxu0
  %1586 = vmatprep.mubr.bf16.mxu0 0
  %1587 = vmatmul.mubr.bf16.gmra.mrb[0].mxu0 %v914
  %v1588 = vpop.f32.mrb[0].mxu0
  %v1589 = vadd.f32 0.0, %v1588
  %v1590 = vpop.f32.mrb[0].mxu0
  %v1591 = vpop.f32.mrb[0].mxu0
  %v1592 = vadd.f32 0.0, %v1591
  %v1593 = vpop.f32.mrb[0].mxu0
  %1594 = vmatprep.mubr.bf16.mxu0 0
  %1595 = vmatmul.mubr.bf16.gmra.mrb[0].mxu0 %v917
  %v1596 = vpop.f32.mrb[0].mxu0
  %v1597 = vadd.f32 0.0, %v1596
  %v1598 = vpop.f32.mrb[0].mxu0
  %v1599 = vpop.f32.mrb[0].mxu0
  %v1600 = vadd.f32 0.0, %v1599
  %v1601 = vpop.f32.mrb[0].mxu0
  %1602 = vmatprep.mubr.bf16.mxu0 0
  %1603 = vmatmul.mubr.bf16.gmra.mrb[0].mxu0 %v920
  %v1604 = vpop.f32.mrb[0].mxu0
  %v1605 = vadd.f32 0.0, %v1604
  %v1606 = vpop.f32.mrb[0].mxu0
  %v1607 = vpop.f32.mrb[0].mxu0
  %v1608 = vadd.f32 0.0, %v1607
  %v1609 = vpop.f32.mrb[0].mxu0
  %1610 = vmatprep.mubr.bf16.mxu0 0
  %1611 = vmatmul.mubr.bf16.gmra.mrb[0].mxu0 %v923
  %v1612 = vpop.f32.mrb[0].mxu0
  %v1613 = vadd.f32 0.0, %v1612
  %v1614 = vpop.f32.mrb[0].mxu0
  %v1615 = vpop.f32.mrb[0].mxu0
  %v1616 = vadd.f32 0.0, %v1615
  %v1617 = vpop.f32.mrb[0].mxu0
  %1618 = vmatprep.mubr.bf16.mxu0 0
  %1619 = vmatmul.mubr.bf16.gmra.mrb[0].mxu0 %v926
  %v1620 = vpop.f32.mrb[0].mxu0
  %v1621 = vadd.f32 0.0, %v1620
  %v1622 = vpop.f32.mrb[0].mxu0
  %v1623 = vpop.f32.mrb[0].mxu0
  %v1624 = vadd.f32 0.0, %v1623
  %v1625 = vpop.f32.mrb[0].mxu0
  %1626 = vmatprep.mubr.bf16.mxu0 0
  %1627 = vmatmul.mubr.bf16.gmra.mrb[0].mxu0 %v929
  %v1628 = vpop.f32.mrb[0].mxu0
  %v1629 = vadd.f32 0.0, %v1628
  %v1630 = vpop.f32.mrb[0].mxu0
  %v1631 = vpop.f32.mrb[0].mxu0
  %v1632 = vadd.f32 0.0, %v1631
  %v1633 = vpop.f32.mrb[0].mxu0
  %1634 = vmatprep.mubr.bf16.mxu0 0
  %1635 = vmatmul.mubr.bf16.gmra.mrb[0].mxu0 %v932
  %v1636 = vpop.f32.mrb[0].mxu0
  %v1637 = vadd.f32 0.0, %v1636
  %v1638 = vpop.f32.mrb[0].mxu0
  %v1639 = vpop.f32.mrb[0].mxu0
  %v1640 = vadd.f32 0.0, %v1639
  %v1641 = vpop.f32.mrb[0].mxu0
  %1642 = vmatprep.mubr.bf16.mxu0 0
  %1643 = vmatmul.mubr.bf16.gmra.mrb[0].mxu0 %v935
  %v1644 = vpop.f32.mrb[0].mxu0
  %v1645 = vadd.f32 0.0, %v1644
  %v1646 = vpop.f32.mrb[0].mxu0
  %v1647 = vpop.f32.mrb[0].mxu0
  %v1648 = vadd.f32 0.0, %v1647
  %v1649 = vpop.f32.mrb[0].mxu0
  %1650 = vmatprep.mubr.bf16.mxu0 0
  %1651 = vmatmul.mubr.bf16.gmra.mrb[0].mxu0 %v938
  %v1652 = vpop.f32.mrb[0].mxu0
  %v1653 = vadd.f32 0.0, %v1652
  %v1654 = vpop.f32.mrb[0].mxu0
  %v1655 = vpop.f32.mrb[0].mxu0
  %v1656 = vadd.f32 0.0, %v1655
  %v1657 = vpop.f32.mrb[0].mxu0
  %1658 = vmatprep.mubr.bf16.mxu0 0
  %1659 = vmatmul.mubr.bf16.gmra.mrb[0].mxu0 %v941
  %v1660 = vpop.f32.mrb[0].mxu0
  %v1661 = vadd.f32 0.0, %v1660
  %v1662 = vpop.f32.mrb[0].mxu0
  %v1663 = vpop.f32.mrb[0].mxu0
  %v1664 = vadd.f32 0.0, %v1663
  %v1665 = vpop.f32.mrb[0].mxu0
  %1666 = vmatprep.mubr.bf16.mxu0 0
  %1667 = vmatmul.mubr.bf16.gmra.mrb[0].mxu0 %v944
  %v1668 = vpop.f32.mrb[0].mxu0
  %v1669 = vadd.f32 0.0, %v1668
  %v1670 = vpop.f32.mrb[0].mxu0
  %v1671 = vpop.f32.mrb[0].mxu0
  %v1672 = vadd.f32 0.0, %v1671
  %v1673 = vpop.f32.mrb[0].mxu0
  %1674 = vmatprep.mubr.bf16.mxu0 0
  %1675 = vmatmul.mubr.bf16.gmra.mrb[0].mxu0 %v947
  %v1676 = vpop.f32.mrb[0].mxu0
  %v1677 = vadd.f32 0.0, %v1676
  %v1678 = vpop.f32.mrb[0].mxu0
  %v1679 = vpop.f32.mrb[0].mxu0
  %v1680 = vadd.f32 0.0, %v1679
  %v1681 = vpop.f32.mrb[0].mxu0
  %1682 = vmatprep.mubr.bf16.mxu0 0
  %1683 = vmatmul.mubr.bf16.gmra.mrb[0].mxu0 %v950
  %v1684 = vpop.f32.mrb[0].mxu0
  %v1685 = vadd.f32 0.0, %v1684
  %v1686 = vpop.f32.mrb[0].mxu0
  %v1687 = vpop.f32.mrb[0].mxu0
  %v1688 = vadd.f32 0.0, %v1687
  %v1689 = vpop.f32.mrb[0].mxu0
  %1690 = vmatprep.mubr.bf16.mxu0 0
  %1691 = vmatmul.mubr.bf16.gmra.mrb[0].mxu0 %v953
  %v1692 = vpop.f32.mrb[0].mxu0
  %v1693 = vadd.f32 0.0, %v1692
  %v1694 = vpop.f32.mrb[0].mxu0
  %v1695 = vpop.f32.mrb[0].mxu0
  %v1696 = vadd.f32 0.0, %v1695
  %v1697 = vpop.f32.mrb[0].mxu0
  %1698 = vmatprep.mubr.bf16.mxu0 0
  %1699 = vmatmul.mubr.bf16.gmra.mrb[0].mxu0 %v956
  %v1700 = vpop.f32.mrb[0].mxu0
  %v1701 = vadd.f32 0.0, %v1700
  %v1702 = vpop.f32.mrb[0].mxu0
  %v1703 = vpop.f32.mrb[0].mxu0
  %v1704 = vadd.f32 0.0, %v1703
  %v1705 = vpop.f32.mrb[0].mxu0
  %1706 = vmatprep.mubr.bf16.mxu0 0
  %1707 = vmatmul.mubr.bf16.gmra.mrb[0].mxu0 %v959
  %v1708 = vpop.f32.mrb[0].mxu0
  %v1709 = vadd.f32 0.0, %v1708
  %v1710 = vpop.f32.mrb[0].mxu0
  %v1711 = vpop.f32.mrb[0].mxu0
  %v1712 = vadd.f32 0.0, %v1711
  %v1713 = vpop.f32.mrb[0].mxu0
  %1714 = vmatprep.mubr.bf16.mxu0 0
  %1715 = vmatmul.mubr.bf16.gmra.mrb[0].mxu0 %v962
  %v1716 = vpop.f32.mrb[0].mxu0
  %v1717 = vadd.f32 0.0, %v1716
  %v1718 = vpop.f32.mrb[0].mxu0
  %v1719 = vpop.f32.mrb[0].mxu0
  %v1720 = vadd.f32 0.0, %v1719
  %v1721 = vpop.f32.mrb[0].mxu0
  %1722 = vmatprep.mubr.bf16.mxu0 0
  %1723 = vmatmul.mubr.bf16.gmra.mrb[0].mxu0 %v965
  %v1724 = vpop.f32.mrb[0].mxu0
  %v1725 = vadd.f32 0.0, %v1724
  %v1726 = vpop.f32.mrb[0].mxu0
  %v1727 = vpop.f32.mrb[0].mxu0
  %v1728 = vadd.f32 0.0, %v1727
  %v1729 = vpop.f32.mrb[0].mxu0
  %1730 = vmatprep.mubr.bf16.mxu0 0
  %1731 = vmatmul.mubr.bf16.gmra.mrb[0].mxu0 %v968
  %v1732 = vpop.f32.mrb[0].mxu0
  %v1733 = vadd.f32 0.0, %v1732
  %v1734 = vpop.f32.mrb[0].mxu0
  %v1735 = vpop.f32.mrb[0].mxu0
  %v1736 = vadd.f32 0.0, %v1735
  %v1737 = vpop.f32.mrb[0].mxu0
  %1738 = vmatprep.mubr.bf16.mxu0 0
  %1739 = vmatmul.mubr.bf16.gmra.mrb[0].mxu0 %v971
  %v1740 = vpop.f32.mrb[0].mxu0
  %v1741 = vadd.f32 0.0, %v1740
  %v1742 = vpop.f32.mrb[0].mxu0
  %v1743 = vpop.f32.mrb[0].mxu0
  %v1744 = vadd.f32 0.0, %v1743
  %v1745 = vpop.f32.mrb[0].mxu0
  %1746 = vmatprep.mubr.bf16.mxu0 0
  %1747 = vmatmul.mubr.bf16.gmra.mrb[0].mxu0 %v974
  %v1748 = vpop.f32.mrb[0].mxu0
  %v1749 = vadd.f32 0.0, %v1748
  %v1750 = vpop.f32.mrb[0].mxu0
  %v1751 = vpop.f32.mrb[0].mxu0
  %v1752 = vadd.f32 0.0, %v1751
  %v1753 = vpop.f32.mrb[0].mxu0
  %1754 = vmatprep.mubr.bf16.mxu0 0
  %1755 = vmatmul.mubr.bf16.gmra.mrb[0].mxu0 %v977
  %v1756 = vpop.f32.mrb[0].mxu0
  %v1757 = vadd.f32 0.0, %v1756
  %v1758 = vpop.f32.mrb[0].mxu0
  %v1759 = vpop.f32.mrb[0].mxu0
  %v1760 = vadd.f32 0.0, %v1759
  %v1761 = vpop.f32.mrb[0].mxu0
  %1762 = vmatprep.mubr.bf16.mxu0 0
  %1763 = vmatmul.mubr.bf16.gmra.mrb[0].mxu0 %v980
  %v1764 = vpop.f32.mrb[0].mxu0
  %v1765 = vadd.f32 0.0, %v1764
  %v1766 = vpop.f32.mrb[0].mxu0
  %v1767 = vpop.f32.mrb[0].mxu0
  %v1768 = vadd.f32 0.0, %v1767
  %v1769 = vpop.f32.mrb[0].mxu0
  %1770 = vmatprep.mubr.bf16.mxu0 0
  %1771 = vmatmul.mubr.bf16.gmra.mrb[0].mxu0 %v983
  %v1772 = vpop.f32.mrb[0].mxu0
  %v1773 = vadd.f32 0.0, %v1772
  %v1774 = vpop.f32.mrb[0].mxu0
  %v1775 = vpop.f32.mrb[0].mxu0
  %v1776 = vadd.f32 0.0, %v1775
  %v1777 = vpop.f32.mrb[0].mxu0
  %1778 = vmatprep.mubr.bf16.mxu0 0
  %1779 = vmatmul.mubr.bf16.gmra.mrb[0].mxu0 %v986
  %v1780 = vpop.f32.mrb[0].mxu0
  %v1781 = vadd.f32 0.0, %v1780
  %v1782 = vpop.f32.mrb[0].mxu0
  %v1783 = vpop.f32.mrb[0].mxu0
  %v1784 = vadd.f32 0.0, %v1783
  %v1785 = vpop.f32.mrb[0].mxu0
  %1786 = vmatprep.mubr.bf16.mxu0 0
  %1787 = vmatmul.mubr.bf16.gmra.mrb[0].mxu0 %v989
  %v1788 = vpop.f32.mrb[0].mxu0
  %v1789 = vadd.f32 0.0, %v1788
  %v1790 = vpop.f32.mrb[0].mxu0
  %v1791 = vpop.f32.mrb[0].mxu0
  %v1792 = vadd.f32 0.0, %v1791
  %v1793 = vpop.f32.mrb[0].mxu0
  %1794 = vmatprep.mubr.bf16.mxu0 0
  %1795 = vmatmul.mubr.bf16.gmra.mrb[0].mxu0 %v992
  %v1796 = vpop.f32.mrb[0].mxu0
  %v1797 = vadd.f32 0.0, %v1796
  %v1798 = vpop.f32.mrb[0].mxu0
  %v1799 = vpop.f32.mrb[0].mxu0
  %v1800 = vadd.f32 0.0, %v1799
  %v1801 = vpop.f32.mrb[0].mxu0
  %1802 = vmatprep.mubr.bf16.mxu0 0
  %1803 = vmatmul.mubr.bf16.gmra.mrb[0].mxu0 %v995
  %v1804 = vpop.f32.mrb[0].mxu0
  %v1805 = vadd.f32 0.0, %v1804
  %v1806 = vpop.f32.mrb[0].mxu0
  %v1807 = vpop.f32.mrb[0].mxu0
  %v1808 = vadd.f32 0.0, %v1807
  %v1809 = vpop.f32.mrb[0].mxu0
  %1810 = vmatprep.mubr.bf16.mxu0 0
  %1811 = vmatmul.mubr.bf16.gmra.mrb[0].mxu0 %v998
  %v1812 = vpop.f32.mrb[0].mxu0
  %v1813 = vadd.f32 0.0, %v1812
  %v1814 = vpop.f32.mrb[0].mxu0
  %v1815 = vpop.f32.mrb[0].mxu0
  %v1816 = vadd.f32 0.0, %v1815
  %v1817 = vpop.f32.mrb[0].mxu0
  %1818 = vmatprep.mubr.bf16.mxu0 0
  %1819 = vmatmul.mubr.bf16.gmra.mrb[0].mxu0 %v1001
  %v1820 = vpop.f32.mrb[0].mxu0
  %v1821 = vadd.f32 0.0, %v1820
  %v1822 = vpop.f32.mrb[0].mxu0
  %v1823 = vpop.f32.mrb[0].mxu0
  %v1824 = vadd.f32 0.0, %v1823
  %v1825 = vpop.f32.mrb[0].mxu0
  %1826 = vdwg.mxu0
  %v1827 = vmax.f32 %v1045, %v1240
  %v1828 = vmax.f32 %v1048, %v1245
  %v1829 = vmax.f32 %v1053, %v1248
  %v1830 = vmax.f32 %v1056, %v1253
  %v1831 = vmax.f32 %v1061, %v1256
  %v1832 = vmax.f32 %v1064, %v1261
  %v1833 = vmax.f32 %v1069, %v1264
  %v1834 = vmax.f32 %v1072, %v1269
  %v1835 = vmax.f32 %v1077, %v1272
  %v1836 = vmax.f32 %v1080, %v1277
  %v1837 = vmax.f32 %v1085, %v1280
  %v1838 = vmax.f32 %v1088, %v1285
  %v1839 = vmax.f32 %v1093, %v1288
  %v1840 = vmax.f32 %v1096, %v1293
  %v1841 = vmax.f32 %v1101, %v1296
  %v1842 = vmax.f32 %v1104, %v1301
  %v1843 = vmax.f32 %v1109, %v1304
  %v1844 = vmax.f32 %v1112, %v1309
  %v1845 = vmax.f32 %v1117, %v1312
  %v1846 = vmax.f32 %v1120, %v1317
  %v1847 = vmax.f32 %v1125, %v1320
  %v1848 = vmax.f32 %v1128, %v1325
  %v1849 = vmax.f32 %v1133, %v1328
  %v1850 = vmax.f32 %v1136, %v1333
  %v1851 = vmax.f32 %v1141, %v1336
  %v1852 = vmax.f32 %v1144, %v1341
  %v1853 = vmax.f32 %v1149, %v1344
  %v1854 = vmax.f32 %v1152, %v1349
  %v1855 = vmax.f32 %v1157, %v1352
  %v1856 = vmax.f32 %v1160, %v1357
  %v1857 = vmax.f32 %v1165, %v1360
  %v1858 = vmax.f32 %v1168, %v1365
  %v1859 = vmax.f32 %v1173, %v1368
  %v1860 = vmax.f32 %v1176, %v1373
  %v1861 = vmax.f32 %v1181, %v1376
  %v1862 = vmax.f32 %v1184, %v1381
  %v1863 = vmax.f32 %v1189, %v1384
  %v1864 = vmax.f32 %v1192, %v1389
  %v1865 = vmax.f32 %v1197, %v1392
  %v1866 = vmax.f32 %v1200, %v1397
  %v1867 = vmax.f32 %v1205, %v1400
  %v1868 = vmax.f32 %v1208, %v1405
  %v1869 = vmax.f32 %v1213, %v1408
  %v1870 = vmax.f32 %v1216, %v1413
  %v1871 = vmax.f32 %v1221, %v1416
  %v1872 = vmax.f32 %v1224, %v1421
  %v1873 = vmax.f32 %v1229, %v1424
  %v1874 = vmax.f32 %v1232, %v1429
  %v1875 = vmax.f32 %v1237, %v1432
  %v1876 = vmax.f32 %v1437, %v1632
  %v1877 = vmax.f32 %v1440, %v1637
  %v1878 = vmax.f32 %v1445, %v1640
  %v1879 = vmax.f32 %v1448, %v1645
  %v1880 = vmax.f32 %v1453, %v1648
  %v1881 = vmax.f32 %v1456, %v1653
  %v1882 = vmax.f32 %v1461, %v1656
  %v1883 = vmax.f32 %v1464, %v1661
  %v1884 = vmax.f32 %v1469, %v1664
  %v1885 = vmax.f32 %v1472, %v1669
  %v1886 = vmax.f32 %v1477, %v1672
  %v1887 = vmax.f32 %v1480, %v1677
  %v1888 = vmax.f32 %v1485, %v1680
  %v1889 = vmax.f32 %v1488, %v1685
  %v1890 = vmax.f32 %v1493, %v1688
  %v1891 = vmax.f32 %v1496, %v1693
  %v1892 = vmax.f32 %v1501, %v1696
  %v1893 = vmax.f32 %v1504, %v1701
  %v1894 = vmax.f32 %v1509, %v1704
  %v1895 = vmax.f32 %v1512, %v1709
  %v1896 = vmax.f32 %v1517, %v1712
  %v1897 = vmax.f32 %v1520, %v1717
  %v1898 = vmax.f32 %v1525, %v1720
  %v1899 = vmax.f32 %v1528, %v1725
  %v1900 = vmax.f32 %v1533, %v1728
  %v1901 = vmax.f32 %v1536, %v1733
  %v1902 = vmax.f32 %v1541, %v1736
  %v1903 = vmax.f32 %v1544, %v1741
  %v1904 = vmax.f32 %v1549, %v1744
  %v1905 = vmax.f32 %v1552, %v1749
  %v1906 = vmax.f32 %v1557, %v1752
  %v1907 = vmax.f32 %v1560, %v1757
  %v1908 = vmax.f32 %v1565, %v1760
  %v1909 = vmax.f32 %v1568, %v1765
  %v1910 = vmax.f32 %v1573, %v1768
  %v1911 = vmax.f32 %v1576, %v1773
  %v1912 = vmax.f32 %v1581, %v1776
  %v1913 = vmax.f32 %v1584, %v1781
  %v1914 = vmax.f32 %v1589, %v1784
  %v1915 = vmax.f32 %v1592, %v1789
  %v1916 = vmax.f32 %v1597, %v1792
  %v1917 = vmax.f32 %v1600, %v1797
  %v1918 = vmax.f32 %v1605, %v1800
  %v1919 = vmax.f32 %v1608, %v1805
  %v1920 = vmax.f32 %v1613, %v1808
  %v1921 = vmax.f32 %v1616, %v1813
  %v1922 = vmax.f32 %v1621, %v1816
  %v1923 = vmax.f32 %v1624, %v1821
  %v1924 = vmax.f32 %v1629, %v1824
  %v1925 = vmax.f32 %v1827, %v1876
  %v1926 = vmax.f32 %v1828, %v1877
  %v1927 = vmax.f32 %v1829, %v1878
  %v1928 = vmax.f32 %v1830, %v1879
  %v1929 = vmax.f32 %v1831, %v1880
  %v1930 = vmax.f32 %v1832, %v1881
  %v1931 = vmax.f32 %v1833, %v1882
  %v1932 = vmax.f32 %v1834, %v1883
  %v1933 = vmax.f32 %v1835, %v1884
  %v1934 = vmax.f32 %v1836, %v1885
  %v1935 = vmax.f32 %v1837, %v1886
  %v1936 = vmax.f32 %v1838, %v1887
  %v1937 = vmax.f32 %v1839, %v1888
  %v1938 = vmax.f32 %v1840, %v1889
  %v1939 = vmax.f32 %v1841, %v1890
  %v1940 = vmax.f32 %v1842, %v1891
  %v1941 = vmax.f32 %v1843, %v1892
  %v1942 = vmax.f32 %v1844, %v1893
  %v1943 = vmax.f32 %v1845, %v1894
  %v1944 = vmax.f32 %v1846, %v1895
  %v1945 = vmax.f32 %v1847, %v1896
  %v1946 = vmax.f32 %v1848, %v1897
  %v1947 = vmax.f32 %v1849, %v1898
  %v1948 = vmax.f32 %v1850, %v1899
  %v1949 = vmax.f32 %v1851, %v1900
  %v1950 = vmax.f32 %v1852, %v1901
  %v1951 = vmax.f32 %v1853, %v1902
  %v1952 = vmax.f32 %v1854, %v1903
  %v1953 = vmax.f32 %v1855, %v1904
  %v1954 = vmax.f32 %v1856, %v1905
  %v1955 = vmax.f32 %v1857, %v1906
  %v1956 = vmax.f32 %v1858, %v1907
  %v1957 = vmax.f32 %v1859, %v1908
  %v1958 = vmax.f32 %v1860, %v1909
  %v1959 = vmax.f32 %v1861, %v1910
  %v1960 = vmax.f32 %v1862, %v1911
  %v1961 = vmax.f32 %v1863, %v1912
  %v1962 = vmax.f32 %v1864, %v1913
  %v1963 = vmax.f32 %v1865, %v1914
  %v1964 = vmax.f32 %v1866, %v1915
  %v1965 = vmax.f32 %v1867, %v1916
  %v1966 = vmax.f32 %v1868, %v1917
  %v1967 = vmax.f32 %v1869, %v1918
  %v1968 = vmax.f32 %v1870, %v1919
  %v1969 = vmax.f32 %v1871, %v1920
  %v1970 = vmax.f32 %v1872, %v1921
  %v1971 = vmax.f32 %v1873, %v1922
  %v1972 = vmax.f32 %v1874, %v1923
  %v1973 = vmax.f32 %v1875, %v1924
  %v1974 = vld [vmem:[%s2] sm:$0x1]
  %v1976 = vlaneseq
  %v1977 = vshrl.u32 %v1976, 7
  %v1978 = vsub.s32 0, %v1977
  %v1979 = vrot.slane %v1974, %v1978
  %v1981 = vadd.f32 %v1925, %v1979
  %v1982 = vadd.f32 %v1926, %v1979
  %v1983 = vadd.f32 %v1927, %v1979
  %v1984 = vadd.f32 %v1928, %v1979
  %v1985 = vadd.f32 %v1929, %v1979
  %v1986 = vadd.f32 %v1930, %v1979
  %v1987 = vadd.f32 %v1931, %v1979
  %v1988 = vadd.f32 %v1932, %v1979
  %v1989 = vadd.f32 %v1933, %v1979
  %v1990 = vadd.f32 %v1934, %v1979
  %v1991 = vadd.f32 %v1935, %v1979
  %v1992 = vadd.f32 %v1936, %v1979
  %v1993 = vadd.f32 %v1937, %v1979
  %v1994 = vadd.f32 %v1938, %v1979
  %v1995 = vadd.f32 %v1939, %v1979
  %v1996 = vadd.f32 %v1940, %v1979
  %v1997 = vadd.f32 %v1941, %v1979
  %v1998 = vadd.f32 %v1942, %v1979
  %v1999 = vadd.f32 %v1943, %v1979
  %v2000 = vadd.f32 %v1944, %v1979
  %v2001 = vadd.f32 %v1945, %v1979
  %v2002 = vadd.f32 %v1946, %v1979
  %v2003 = vadd.f32 %v1947, %v1979
  %v2004 = vadd.f32 %v1948, %v1979
  %v2005 = vadd.f32 %v1949, %v1979
  %v2006 = vadd.f32 %v1950, %v1979
  %v2007 = vadd.f32 %v1951, %v1979
  %v2008 = vadd.f32 %v1952, %v1979
  %v2009 = vadd.f32 %v1953, %v1979
  %v2010 = vadd.f32 %v1954, %v1979
  %v2011 = vadd.f32 %v1955, %v1979
  %v2012 = vadd.f32 %v1956, %v1979
  %v2013 = vadd.f32 %v1957, %v1979
  %v2014 = vadd.f32 %v1958, %v1979
  %v2015 = vadd.f32 %v1959, %v1979
  %v2016 = vadd.f32 %v1960, %v1979
  %v2017 = vadd.f32 %v1961, %v1979
  %v2018 = vadd.f32 %v1962, %v1979
  %v2019 = vadd.f32 %v1963, %v1979
  %v2020 = vadd.f32 %v1964, %v1979
  %v2021 = vadd.f32 %v1965, %v1979
  %v2022 = vadd.f32 %v1966, %v1979
  %v2023 = vadd.f32 %v1967, %v1979
  %v2024 = vadd.f32 %v1968, %v1979
  %v2025 = vadd.f32 %v1969, %v1979
  %v2026 = vadd.f32 %v1970, %v1979
  %v2027 = vadd.f32 %v1971, %v1979
  %v2028 = vadd.f32 %v1972, %v1979
  %v2029 = vadd.f32 %v1973, %v1979
  %v2030 = vmax.f32 %v1981, 0.0
  %v2031 = vmax.f32 %v1982, 0.0
  %v2032 = vmax.f32 %v1983, 0.0
  %v2033 = vmax.f32 %v1984, 0.0
  %v2034 = vmax.f32 %v1985, 0.0
  %v2035 = vmax.f32 %v1986, 0.0
  %v2036 = vmax.f32 %v1987, 0.0
  %v2037 = vmax.f32 %v1988, 0.0
  %v2038 = vmax.f32 %v1989, 0.0
  %v2039 = vmax.f32 %v1990, 0.0
  %v2040 = vmax.f32 %v1991, 0.0
  %v2041 = vmax.f32 %v1992, 0.0
  %v2042 = vmax.f32 %v1993, 0.0
  %v2043 = vmax.f32 %v1994, 0.0
  %v2044 = vmax.f32 %v1995, 0.0
  %v2045 = vmax.f32 %v1996, 0.0
  %v2046 = vmax.f32 %v1997, 0.0
  %v2047 = vmax.f32 %v1998, 0.0
  %v2048 = vmax.f32 %v1999, 0.0
  %v2049 = vmax.f32 %v2000, 0.0
  %v2050 = vmax.f32 %v2001, 0.0
  %v2051 = vmax.f32 %v2002, 0.0
  %v2052 = vmax.f32 %v2003, 0.0
  %v2053 = vmax.f32 %v2004, 0.0
  %v2054 = vmax.f32 %v2005, 0.0
  %v2055 = vmax.f32 %v2006, 0.0
  %v2056 = vmax.f32 %v2007, 0.0
  %v2057 = vmax.f32 %v2008, 0.0
  %v2058 = vmax.f32 %v2009, 0.0
  %v2059 = vmax.f32 %v2010, 0.0
  %v2060 = vmax.f32 %v2011, 0.0
  %v2061 = vmax.f32 %v2012, 0.0
  %v2062 = vmax.f32 %v2013, 0.0
  %v2063 = vmax.f32 %v2014, 0.0
  %v2064 = vmax.f32 %v2015, 0.0
  %v2065 = vmax.f32 %v2016, 0.0
  %v2066 = vmax.f32 %v2017, 0.0
  %v2067 = vmax.f32 %v2018, 0.0
  %v2068 = vmax.f32 %v2019, 0.0
  %v2069 = vmax.f32 %v2020, 0.0
  %v2070 = vmax.f32 %v2021, 0.0
  %v2071 = vmax.f32 %v2022, 0.0
  %v2072 = vmax.f32 %v2023, 0.0
  %v2073 = vmax.f32 %v2024, 0.0
  %v2074 = vmax.f32 %v2025, 0.0
  %v2075 = vmax.f32 %v2026, 0.0
  %v2076 = vmax.f32 %v2027, 0.0
  %v2077 = vmax.f32 %v2028, 0.0
  %v2078 = vmax.f32 %v2029, 0.0
  %vm2079 = vcmask 261120
  %2080 = vst.msk [vmem:[%s3] sm:$0xff] %vm2079, %v2030
  %2081 = vst.msk [vmem:[%s3 + $0x8] sm:$0xff] %vm2079, %v2031
  %2082 = vst.msk [vmem:[%s3 + $0x10] sm:$0xff] %vm2079, %v2032
  %2083 = vst.msk [vmem:[%s3 + $0x18] sm:$0xff] %vm2079, %v2033
  %2084 = vst.msk [vmem:[%s3 + $0x20] sm:$0xff] %vm2079, %v2034
  %2085 = vst.msk [vmem:[%s3 + $0x28] sm:$0xff] %vm2079, %v2035
  %2086 = vst.msk [vmem:[%s3 + $0x30] sm:$0xff] %vm2079, %v2036
  %2087 = vst.msk [vmem:[%s3 + $0x38] sm:$0xff] %vm2079, %v2037
  %2088 = vst.msk [vmem:[%s3 + $0x40] sm:$0xff] %vm2079, %v2038
  %2089 = vst.msk [vmem:[%s3 + $0x48] sm:$0xff] %vm2079, %v2039
  %2090 = vst.msk [vmem:[%s3 + $0x50] sm:$0xff] %vm2079, %v2040
  %2091 = vst.msk [vmem:[%s3 + $0x58] sm:$0xff] %vm2079, %v2041
  %2092 = vst.msk [vmem:[%s3 + $0x60] sm:$0xff] %vm2079, %v2042
  %2093 = vst.msk [vmem:[%s3 + $0x68] sm:$0xff] %vm2079, %v2043
  %2094 = vst.msk [vmem:[%s3 + $0x70] sm:$0xff] %vm2079, %v2044
  %2095 = vst.msk [vmem:[%s3 + $0x78] sm:$0xff] %vm2079, %v2045
  %2096 = vst.msk [vmem:[%s3 + $0x80] sm:$0xff] %vm2079, %v2046
  %2097 = vst.msk [vmem:[%s3 + $0x88] sm:$0xff] %vm2079, %v2047
  %2098 = vst.msk [vmem:[%s3 + $0x90] sm:$0xff] %vm2079, %v2048
  %2099 = vst.msk [vmem:[%s3 + $0x98] sm:$0xff] %vm2079, %v2049
  %2100 = vst.msk [vmem:[%s3 + $0xa0] sm:$0xff] %vm2079, %v2050
  %2101 = vst.msk [vmem:[%s3 + $0xa8] sm:$0xff] %vm2079, %v2051
  %2102 = vst.msk [vmem:[%s3 + $0xb0] sm:$0xff] %vm2079, %v2052
  %2103 = vst.msk [vmem:[%s3 + $0xb8] sm:$0xff] %vm2079, %v2053
  %2104 = vst.msk [vmem:[%s3 + $0xc0] sm:$0xff] %vm2079, %v2054
  %2105 = vst.msk [vmem:[%s3 + $0xc8] sm:$0xff] %vm2079, %v2055
  %2106 = vst.msk [vmem:[%s3 + $0xd0] sm:$0xff] %vm2079, %v2056
  %2107 = vst.msk [vmem:[%s3 + $0xd8] sm:$0xff] %vm2079, %v2057
  %2108 = vst.msk [vmem:[%s3 + $0xe0] sm:$0xff] %vm2079, %v2058
  %2109 = vst.msk [vmem:[%s3 + $0xe8] sm:$0xff] %vm2079, %v2059
  %2110 = vst.msk [vmem:[%s3 + $0xf0] sm:$0xff] %vm2079, %v2060
  %2111 = vst.msk [vmem:[%s3 + $0xf8] sm:$0xff] %vm2079, %v2061
  %2112 = vst.msk [vmem:[%s3 + $0x100] sm:$0xff] %vm2079, %v2062
  %2113 = vst.msk [vmem:[%s3 + $0x108] sm:$0xff] %vm2079, %v2063
  %2114 = vst.msk [vmem:[%s3 + $0x110] sm:$0xff] %vm2079, %v2064
  %2115 = vst.msk [vmem:[%s3 + $0x118] sm:$0xff] %vm2079, %v2065
  %2116 = vst.msk [vmem:[%s3 + $0x120] sm:$0xff] %vm2079, %v2066
  %2117 = vst.msk [vmem:[%s3 + $0x128] sm:$0xff] %vm2079, %v2067
  %2118 = vst.msk [vmem:[%s3 + $0x130] sm:$0xff] %vm2079, %v2068
  %2119 = vst.msk [vmem:[%s3 + $0x138] sm:$0xff] %vm2079, %v2069
  %2120 = vst.msk [vmem:[%s3 + $0x140] sm:$0xff] %vm2079, %v2070
  %2121 = vst.msk [vmem:[%s3 + $0x148] sm:$0xff] %vm2079, %v2071
  %2122 = vst.msk [vmem:[%s3 + $0x150] sm:$0xff] %vm2079, %v2072
  %2123 = vst.msk [vmem:[%s3 + $0x158] sm:$0xff] %vm2079, %v2073
  %2124 = vst.msk [vmem:[%s3 + $0x160] sm:$0xff] %vm2079, %v2074
  %2125 = vst.msk [vmem:[%s3 + $0x168] sm:$0xff] %vm2079, %v2075
  %2126 = vst.msk [vmem:[%s3 + $0x170] sm:$0xff] %vm2079, %v2076
  %2127 = vst.msk [vmem:[%s3 + $0x178] sm:$0xff] %vm2079, %v2077
  %2128 = vst.msk [vmem:[%s3 + $0x180] sm:$0xff] %vm2079, %v2078
  // Predicated region
  $region14: #{mnist_cnn_forward.3} parent=0 // pred_check
    _
  $region15: #{mnist_cnn_forward.3} parent=0 // pred_check_branch
    %2130 = sbr.rel (0) target = $region17
  $region16: #{mnist_cnn_forward.3} parent=0 // pred_region
    _
  $region17: #{mnist_cnn_forward.3} parent=0 // pred_fallthru
    _
  // Predicated region
  $region18: #{mnist_cnn_forward.3} parent=0 // pred_check
    _
  $region19: #{mnist_cnn_forward.3} parent=0 // pred_check_branch
    %2132 = sbr.rel (0) target = $region21
  $region20: #{mnist_cnn_forward.3} parent=0 // pred_region
    _
  $region21: #{mnist_cnn_forward.3} parent=0 // pred_fallthru
    _

// kernel: mnist_cnn_forward.4
$region0: #{mnist_cnn_forward.4}
  #allocation0 [shape = 'u32[]', space=smem, size = 0x4, offset = 0x4, fixed_abs, tag = 'smem constant byte address 0x4 - core index']
  #allocation1 [shape = 'u32[144,128]{1,0:T(1,128)}', space=vmem, size = 0x12000, scoped, tag = 'internal scratch']
  %s0 = inlined_call_operand.vmem [shape: bf16[416,288], index: 0, kind: input, shape index: {}]
  %s1 = inlined_call_operand.vmem [shape: bf16[288,64], index: 1, kind: input, shape index: {}]
  %s2 = inlined_call_operand.vmem [shape: f32[1,64], index: 2, kind: input, shape index: {}]
  %s3 = inlined_call_operand.vmem [shape: f32[104,64], index: 3, kind: output, shape index: {}]
  %s4 = sld [smem:[#allocation0]]
  $region22: #{mnist_cnn_forward.4} parent=0
    _
  %s6 = ssub.s32 1, %s4
  %s7 = scalar_select 0, %s6, %s4
  // Predicated region
  $region2: #{mnist_cnn_forward.4} parent=0 // pred_check
    _
  $region3: #{mnist_cnn_forward.4} parent=0 // pred_check_branch
    %9 = sbr.rel (0) target = $region5
  $region4: #{mnist_cnn_forward.4} parent=0 // pred_region
    _
  $region5: #{mnist_cnn_forward.4} parent=0 // pred_fallthru
    _
  // Predicated region
  $region6: #{mnist_cnn_forward.4} parent=0 // pred_check
    _
  $region7: #{mnist_cnn_forward.4} parent=0 // pred_check_branch
    %11 = sbr.rel (0) target = $region9
  $region8: #{mnist_cnn_forward.4} parent=0 // pred_region
    _
  $region9: #{mnist_cnn_forward.4} parent=0 // pred_fallthru
    _
  // Predicated region
  $region10: #{mnist_cnn_forward.4} parent=0 // pred_check
    _
  $region11: #{mnist_cnn_forward.4} parent=0 // pred_check_branch
    %13 = sbr.rel (0) target = $region13
  $region12: #{mnist_cnn_forward.4} parent=0 // pred_region
    _
  $region13: #{mnist_cnn_forward.4} parent=0 // pred_fallthru
    _
  %v15 = vld [vmem:[%s0] sm:$0xff]
  %v16 = vld [vmem:[%s0 + $0x8] sm:$0xf]
  %v17 = vld [vmem:[%s0 + $0xc] sm:$0xff]
  %v18 = vld [vmem:[%s0 + $0x14] sm:$0xf]
  %v19 = vld [vmem:[%s0 + $0x18] sm:$0xff]
  %v20 = vld [vmem:[%s0 + $0x20] sm:$0xf]
  %v21 = vld [vmem:[%s0 + $0x24] sm:$0xff]
  %v22 = vld [vmem:[%s0 + $0x2c] sm:$0xf]
  %v23 = vld [vmem:[%s0 + $0x30] sm:$0xff]
  %v24 = vld [vmem:[%s0 + $0x38] sm:$0xf]
  %v25 = vld [vmem:[%s0 + $0x3c] sm:$0xff]
  %v26 = vld [vmem:[%s0 + $0x44] sm:$0xf]
  %v27 = vld [vmem:[%s0 + $0x48] sm:$0xff]
  %v28 = vld [vmem:[%s0 + $0x50] sm:$0xf]
  %v29 = vld [vmem:[%s0 + $0x54] sm:$0xff]
  %v30 = vld [vmem:[%s0 + $0x5c] sm:$0xf]
  %v31 = vld [vmem:[%s0 + $0x60] sm:$0xff]
  %v32 = vld [vmem:[%s0 + $0x68] sm:$0xf]
  %v33 = vld [vmem:[%s0 + $0x6c] sm:$0xff]
  %v34 = vld [vmem:[%s0 + $0x74] sm:$0xf]
  %v35 = vld [vmem:[%s0 + $0x78] sm:$0xff]
  %v36 = vld [vmem:[%s0 + $0x80] sm:$0xf]
  %v37 = vld [vmem:[%s0 + $0x84] sm:$0xff]
  %v38 = vld [vmem:[%s0 + $0x8c] sm:$0xf]
  %v39 = vld [vmem:[%s0 + $0x90] sm:$0xff]
  %v40 = vld [vmem:[%s0 + $0x98] sm:$0xf]
  %v41 = vld [vmem:[%s0 + $0x9c] sm:$0xff]
  %v42 = vld [vmem:[%s0 + $0xa4] sm:$0xf]
  %v43 = vld [vmem:[%s0 + $0xa8] sm:$0xff]
  %v44 = vld [vmem:[%s0 + $0xb0] sm:$0xf]
  %v45 = vld [vmem:[%s0 + $0xb4] sm:$0xff]
  %v46 = vld [vmem:[%s0 + $0xbc] sm:$0xf]
  %v47 = vld [vmem:[%s0 + $0xc0] sm:$0xff]
  %v48 = vld [vmem:[%s0 + $0xc8] sm:$0xf]
  %v49 = vld [vmem:[%s0 + $0xcc] sm:$0xff]
  %v50 = vld [vmem:[%s0 + $0xd4] sm:$0xf]
  %v51 = vld [vmem:[%s0 + $0xd8] sm:$0xff]
  %v52 = vld [vmem:[%s0 + $0xe0] sm:$0xf]
  %v53 = vld [vmem:[%s0 + $0xe4] sm:$0xff]
  %v54 = vld [vmem:[%s0 + $0xec] sm:$0xf]
  %v55 = vld [vmem:[%s0 + $0xf0] sm:$0xff]
  %v56 = vld [vmem:[%s0 + $0xf8] sm:$0xf]
  %v57 = vld [vmem:[%s0 + $0xfc] sm:$0xff]
  %v58 = vld [vmem:[%s0 + $0x104] sm:$0xf]
  %v59 = vld [vmem:[%s0 + $0x108] sm:$0xff]
  %v60 = vld [vmem:[%s0 + $0x110] sm:$0xf]
  %v61 = vld [vmem:[%s0 + $0x114] sm:$0xff]
  %v62 = vld [vmem:[%s0 + $0x11c] sm:$0xf]
  %v63 = vld [vmem:[%s0 + $0x120] sm:$0xff]
  %v64 = vld [vmem:[%s0 + $0x128] sm:$0xf]
  %v65 = vld [vmem:[%s0 + $0x12c] sm:$0xff]
  %v66 = vld [vmem:[%s0 + $0x134] sm:$0xf]
  %v67 = vld [vmem:[%s0 + $0x138] sm:$0xff]
  %v68 = vld [vmem:[%s0 + $0x140] sm:$0xf]
  %v69 = vld [vmem:[%s0 + $0x144] sm:$0xff]
  %v70 = vld [vmem:[%s0 + $0x14c] sm:$0xf]
  %v71 = vld [vmem:[%s0 + $0x150] sm:$0xff]
  %v72 = vld [vmem:[%s0 + $0x158] sm:$0xf]
  %v73 = vld [vmem:[%s0 + $0x15c] sm:$0xff]
  %v74 = vld [vmem:[%s0 + $0x164] sm:$0xf]
  %v75 = vld [vmem:[%s0 + $0x168] sm:$0xff]
  %v76 = vld [vmem:[%s0 + $0x170] sm:$0xf]
  %v77 = vld [vmem:[%s0 + $0x174] sm:$0xff]
  %v78 = vld [vmem:[%s0 + $0x17c] sm:$0xf]
  %v79 = vld [vmem:[%s0 + $0x180] sm:$0xff]
  %v80 = vld [vmem:[%s0 + $0x188] sm:$0xf]
  %v81 = vld [vmem:[%s0 + $0x18c] sm:$0xff]
  %v82 = vld [vmem:[%s0 + $0x194] sm:$0xf]
  %v83 = vld [vmem:[%s0 + $0x198] sm:$0xff]
  %v84 = vld [vmem:[%s0 + $0x1a0] sm:$0xf]
  %v85 = vld [vmem:[%s0 + $0x1a4] sm:$0xff]
  %v86 = vld [vmem:[%s0 + $0x1ac] sm:$0xf]
  %v87 = vld [vmem:[%s0 + $0x1b0] sm:$0xff]
  %v88 = vld [vmem:[%s0 + $0x1b8] sm:$0xf]
  %v89 = vld [vmem:[%s0 + $0x1bc] sm:$0xff]
  %v90 = vld [vmem:[%s0 + $0x1c4] sm:$0xf]
  %v91 = vld [vmem:[%s0 + $0x1c8] sm:$0xff]
  %v92 = vld [vmem:[%s0 + $0x1d0] sm:$0xf]
  %v93 = vld [vmem:[%s0 + $0x1d4] sm:$0xff]
  %v94 = vld [vmem:[%s0 + $0x1dc] sm:$0xf]
  %v95 = vld [vmem:[%s0 + $0x1e0] sm:$0xff]
  %v96 = vld [vmem:[%s0 + $0x1e8] sm:$0xf]
  %v97 = vld [vmem:[%s0 + $0x1ec] sm:$0xff]
  %v98 = vld [vmem:[%s0 + $0x1f4] sm:$0xf]
  %v99 = vld [vmem:[%s0 + $0x1f8] sm:$0xff]
  %v100 = vld [vmem:[%s0 + $0x200] sm:$0xf]
  %v101 = vld [vmem:[%s0 + $0x204] sm:$0xff]
  %v102 = vld [vmem:[%s0 + $0x20c] sm:$0xf]
  %v103 = vld [vmem:[%s0 + $0x210] sm:$0xff]
  %v104 = vld [vmem:[%s0 + $0x218] sm:$0xf]
  %v105 = vld [vmem:[%s0 + $0x21c] sm:$0xff]
  %v106 = vld [vmem:[%s0 + $0x224] sm:$0xf]
  %v107 = vld [vmem:[%s0 + $0x228] sm:$0xff]
  %v108 = vld [vmem:[%s0 + $0x230] sm:$0xf]
  %v109 = vld [vmem:[%s0 + $0x234] sm:$0xff]
  %v110 = vld [vmem:[%s0 + $0x23c] sm:$0xf]
  %v111 = vld [vmem:[%s0 + $0x240] sm:$0xff]
  %v112 = vld [vmem:[%s0 + $0x248] sm:$0xf]
  %v113 = vld [vmem:[%s0 + $0x24c] sm:$0xff]
  %v114 = vld [vmem:[%s0 + $0x254] sm:$0xf]
  %v115 = vld [vmem:[%s0 + $0x258] sm:$0xff]
  %v116 = vld [vmem:[%s0 + $0x260] sm:$0xf]
  %v117 = vld [vmem:[%s0 + $0x264] sm:$0xff]
  %v118 = vld [vmem:[%s0 + $0x26c] sm:$0xf]
  %v119 = vld [vmem:[%s1] sm:$0xf]
  %v120 = vld [vmem:[%s1 + $0x4] sm:$0xf]
  %v121 = vld [vmem:[%s1 + $0x8] sm:$0xf]
  %v122 = vld [vmem:[%s1 + $0xc] sm:$0xf]
  %v123 = vld [vmem:[%s1 + $0x10] sm:$0xf]
  %v124 = vld [vmem:[%s1 + $0x14] sm:$0xf]
  %v125 = vld [vmem:[%s1 + $0x18] sm:$0xf]
  %v126 = vld [vmem:[%s1 + $0x1c] sm:$0xf]
  %v127 = vld [vmem:[%s1 + $0x20] sm:$0xf]
  %v128 = vld [vmem:[%s1 + $0x24] sm:$0xf]
  %v129 = vld [vmem:[%s1 + $0x28] sm:$0xf]
  %v130 = vld [vmem:[%s1 + $0x2c] sm:$0xf]
  %v131 = vld [vmem:[%s1 + $0x30] sm:$0xf]
  %v132 = vld [vmem:[%s1 + $0x34] sm:$0xf]
  %v133 = vld [vmem:[%s1 + $0x38] sm:$0xf]
  %v134 = vld [vmem:[%s1 + $0x3c] sm:$0xf]
  %v135 = vld [vmem:[%s1 + $0x40] sm:$0xf]
  %v136 = vld [vmem:[%s1 + $0x44] sm:$0xf]
  %v137 = vld [vmem:[%s1 + $0x48] sm:$0xf]
  %v138 = vld [vmem:[%s1 + $0x4c] sm:$0xf]
  %v139 = vld [vmem:[%s1 + $0x50] sm:$0xf]
  %v140 = vld [vmem:[%s1 + $0x54] sm:$0xf]
  %v141 = vld [vmem:[%s1 + $0x58] sm:$0xf]
  %v142 = vld [vmem:[%s1 + $0x5c] sm:$0xf]
  %v143 = vld [vmem:[%s1 + $0x60] sm:$0xf]
  %v144 = vld [vmem:[%s1 + $0x64] sm:$0xf]
  %v145 = vld [vmem:[%s1 + $0x68] sm:$0xf]
  %v146 = vld [vmem:[%s1 + $0x6c] sm:$0xf]
  %v147 = vld [vmem:[%s1 + $0x70] sm:$0xf]
  %v148 = vld [vmem:[%s1 + $0x74] sm:$0xf]
  %v149 = vld [vmem:[%s1 + $0x78] sm:$0xf]
  %v150 = vld [vmem:[%s1 + $0x7c] sm:$0xf]
  %v151 = vld [vmem:[%s1 + $0x80] sm:$0xf]
  %v152 = vld [vmem:[%s1 + $0x84] sm:$0xf]
  %v153 = vld [vmem:[%s1 + $0x88] sm:$0xf]
  %v154 = vld [vmem:[%s1 + $0x8c] sm:$0xf]
  %v259 = vunpack.c.l.b16 %v15
  %v260 = vunpack.c.h.b16 %v15
  %v261 = vunpack.c.l.b16 %v16
  %v262 = vunpack.c.l.b16 %v17
  %v263 = vunpack.c.h.b16 %v17
  %v264 = vunpack.c.l.b16 %v18
  %v265 = vunpack.c.l.b16 %v19
  %v266 = vunpack.c.h.b16 %v19
  %v267 = vunpack.c.l.b16 %v20
  %v268 = vunpack.c.l.b16 %v21
  %v269 = vunpack.c.h.b16 %v21
  %v270 = vunpack.c.l.b16 %v22
  %v271 = vunpack.c.l.b16 %v23
  %v272 = vunpack.c.h.b16 %v23
  %v273 = vunpack.c.l.b16 %v24
  %v274 = vunpack.c.l.b16 %v25
  %v275 = vunpack.c.h.b16 %v25
  %v276 = vunpack.c.l.b16 %v26
  %v277 = vunpack.c.l.b16 %v27
  %v278 = vunpack.c.h.b16 %v27
  %v279 = vunpack.c.l.b16 %v28
  %v280 = vunpack.c.l.b16 %v29
  %v281 = vunpack.c.h.b16 %v29
  %v282 = vunpack.c.l.b16 %v30
  %v283 = vunpack.c.l.b16 %v31
  %v284 = vunpack.c.h.b16 %v31
  %v285 = vunpack.c.l.b16 %v32
  %v286 = vunpack.c.l.b16 %v33
  %v287 = vunpack.c.h.b16 %v33
  %v288 = vunpack.c.l.b16 %v34
  %v289 = vunpack.c.l.b16 %v35
  %v290 = vunpack.c.h.b16 %v35
  %v291 = vunpack.c.l.b16 %v36
  %v292 = vunpack.c.l.b16 %v37
  %v293 = vunpack.c.h.b16 %v37
  %v294 = vunpack.c.l.b16 %v38
  %v295 = vunpack.c.l.b16 %v39
  %v296 = vunpack.c.h.b16 %v39
  %v297 = vunpack.c.l.b16 %v40
  %v298 = vunpack.c.l.b16 %v41
  %v299 = vunpack.c.h.b16 %v41
  %v300 = vunpack.c.l.b16 %v42
  %v301 = vunpack.c.l.b16 %v43
  %v302 = vunpack.c.h.b16 %v43
  %v303 = vunpack.c.l.b16 %v44
  %v304 = vunpack.c.l.b16 %v45
  %v305 = vunpack.c.h.b16 %v45
  %v306 = vunpack.c.l.b16 %v46
  %v307 = vunpack.c.l.b16 %v47
  %v308 = vunpack.c.h.b16 %v47
  %v309 = vunpack.c.l.b16 %v48
  %v310 = vunpack.c.l.b16 %v49
  %v311 = vunpack.c.h.b16 %v49
  %v312 = vunpack.c.l.b16 %v50
  %v313 = vunpack.c.l.b16 %v51
  %v314 = vunpack.c.h.b16 %v51
  %v315 = vunpack.c.l.b16 %v52
  %v316 = vunpack.c.l.b16 %v53
  %v317 = vunpack.c.h.b16 %v53
  %v318 = vunpack.c.l.b16 %v54
  %v319 = vunpack.c.l.b16 %v55
  %v320 = vunpack.c.h.b16 %v55
  %v321 = vunpack.c.l.b16 %v56
  %v322 = vunpack.c.l.b16 %v57
  %v323 = vunpack.c.h.b16 %v57
  %v324 = vunpack.c.l.b16 %v58
  %v325 = vunpack.c.l.b16 %v59
  %v326 = vunpack.c.h.b16 %v59
  %v327 = vunpack.c.l.b16 %v60
  %v328 = vunpack.c.l.b16 %v61
  %v329 = vunpack.c.h.b16 %v61
  %v330 = vunpack.c.l.b16 %v62
  %v331 = vunpack.c.l.b16 %v63
  %v332 = vunpack.c.h.b16 %v63
  %v333 = vunpack.c.l.b16 %v64
  %v334 = vunpack.c.l.b16 %v65
  %v335 = vunpack.c.h.b16 %v65
  %v336 = vunpack.c.l.b16 %v66
  %v337 = vunpack.c.l.b16 %v67
  %v338 = vunpack.c.h.b16 %v67
  %v339 = vunpack.c.l.b16 %v68
  %v340 = vunpack.c.l.b16 %v69
  %v341 = vunpack.c.h.b16 %v69
  %v342 = vunpack.c.l.b16 %v70
  %v343 = vunpack.c.l.b16 %v71
  %v344 = vunpack.c.h.b16 %v71
  %v345 = vunpack.c.l.b16 %v72
  %v346 = vunpack.c.l.b16 %v73
  %v347 = vunpack.c.h.b16 %v73
  %v348 = vunpack.c.l.b16 %v74
  %v349 = vunpack.c.l.b16 %v75
  %v350 = vunpack.c.h.b16 %v75
  %v351 = vunpack.c.l.b16 %v76
  %v352 = vunpack.c.l.b16 %v77
  %v353 = vunpack.c.h.b16 %v77
  %v354 = vunpack.c.l.b16 %v78
  %v355 = vunpack.c.l.b16 %v79
  %v356 = vunpack.c.h.b16 %v79
  %v357 = vunpack.c.l.b16 %v80
  %v358 = vunpack.c.l.b16 %v81
  %v359 = vunpack.c.h.b16 %v81
  %v360 = vunpack.c.l.b16 %v82
  %v361 = vunpack.c.l.b16 %v83
  %v362 = vunpack.c.h.b16 %v83
  %v363 = vunpack.c.l.b16 %v84
  %v364 = vunpack.c.l.b16 %v85
  %v365 = vunpack.c.h.b16 %v85
  %v366 = vunpack.c.l.b16 %v86
  %v367 = vunpack.c.l.b16 %v87
  %v368 = vunpack.c.h.b16 %v87
  %v369 = vunpack.c.l.b16 %v88
  %v370 = vunpack.c.l.b16 %v89
  %v371 = vunpack.c.h.b16 %v89
  %v372 = vunpack.c.l.b16 %v90
  %v373 = vunpack.c.l.b16 %v91
  %v374 = vunpack.c.h.b16 %v91
  %v375 = vunpack.c.l.b16 %v92
  %v376 = vunpack.c.l.b16 %v93
  %v377 = vunpack.c.h.b16 %v93
  %v378 = vunpack.c.l.b16 %v94
  %v379 = vunpack.c.l.b16 %v95
  %v380 = vunpack.c.h.b16 %v95
  %v381 = vunpack.c.l.b16 %v96
  %v382 = vunpack.c.l.b16 %v97
  %v383 = vunpack.c.h.b16 %v97
  %v384 = vunpack.c.l.b16 %v98
  %v385 = vunpack.c.l.b16 %v99
  %v386 = vunpack.c.h.b16 %v99
  %v387 = vunpack.c.l.b16 %v100
  %v388 = vunpack.c.l.b16 %v101
  %v389 = vunpack.c.h.b16 %v101
  %v390 = vunpack.c.l.b16 %v102
  %v391 = vunpack.c.l.b16 %v103
  %v392 = vunpack.c.h.b16 %v103
  %v393 = vunpack.c.l.b16 %v104
  %v394 = vunpack.c.l.b16 %v105
  %v395 = vunpack.c.h.b16 %v105
  %v396 = vunpack.c.l.b16 %v106
  %v397 = vunpack.c.l.b16 %v107
  %v398 = vunpack.c.h.b16 %v107
  %v399 = vunpack.c.l.b16 %v108
  %v400 = vunpack.c.l.b16 %v109
  %v401 = vunpack.c.h.b16 %v109
  %v402 = vunpack.c.l.b16 %v110
  %v403 = vunpack.c.l.b16 %v111
  %v404 = vunpack.c.h.b16 %v111
  %v405 = vunpack.c.l.b16 %v112
  %v406 = vunpack.c.l.b16 %v113
  %v407 = vunpack.c.h.b16 %v113
  %v408 = vunpack.c.l.b16 %v114
  %v409 = vunpack.c.l.b16 %v115
  %v410 = vunpack.c.h.b16 %v115
  %v411 = vunpack.c.l.b16 %v116
  %v412 = vunpack.c.l.b16 %v117
  %v413 = vunpack.c.h.b16 %v117
  %v414 = vunpack.c.l.b16 %v118
  %v415 = vpack.c.b16 %v262, %v259
  %v416 = vpack.c.b16 %v263, %v260
  %v417 = vpack.c.b16 %v264, %v261
  %v418 = vpack.c.b16 %v268, %v265
  %v419 = vpack.c.b16 %v269, %v266
  %v420 = vpack.c.b16 %v270, %v267
  %v421 = vpack.c.b16 %v274, %v271
  %v422 = vpack.c.b16 %v275, %v272
  %v423 = vpack.c.b16 %v276, %v273
  %v424 = vpack.c.b16 %v280, %v277
  %v425 = vpack.c.b16 %v281, %v278
  %v426 = vpack.c.b16 %v282, %v279
  %v427 = vpack.c.b16 %v286, %v283
  %v428 = vpack.c.b16 %v287, %v284
  %v429 = vpack.c.b16 %v288, %v285
  %v430 = vpack.c.b16 %v292, %v289
  %v431 = vpack.c.b16 %v293, %v290
  %v432 = vpack.c.b16 %v294, %v291
  %v433 = vpack.c.b16 %v298, %v295
  %v434 = vpack.c.b16 %v299, %v296
  %v435 = vpack.c.b16 %v300, %v297
  %v436 = vpack.c.b16 %v304, %v301
  %v437 = vpack.c.b16 %v305, %v302
  %v438 = vpack.c.b16 %v306, %v303
  %v439 = vpack.c.b16 %v310, %v307
  %v440 = vpack.c.b16 %v311, %v308
  %v441 = vpack.c.b16 %v312, %v309
  %v442 = vpack.c.b16 %v316, %v313
  %v443 = vpack.c.b16 %v317, %v314
  %v444 = vpack.c.b16 %v318, %v315
  %v445 = vpack.c.b16 %v322, %v319
  %v446 = vpack.c.b16 %v323, %v320
  %v447 = vpack.c.b16 %v324, %v321
  %v448 = vpack.c.b16 %v328, %v325
  %v449 = vpack.c.b16 %v329, %v326
  %v450 = vpack.c.b16 %v330, %v327
  %v451 = vpack.c.b16 %v334, %v331
  %v452 = vpack.c.b16 %v335, %v332
  %v453 = vpack.c.b16 %v336, %v333
  %v454 = vpack.c.b16 %v340, %v337
  %v455 = vpack.c.b16 %v341, %v338
  %v456 = vpack.c.b16 %v342, %v339
  %v457 = vpack.c.b16 %v346, %v343
  %v458 = vpack.c.b16 %v347, %v344
  %v459 = vpack.c.b16 %v348, %v345
  %v460 = vpack.c.b16 %v352, %v349
  %v461 = vpack.c.b16 %v353, %v350
  %v462 = vpack.c.b16 %v354, %v351
  %v463 = vpack.c.b16 %v358, %v355
  %v464 = vpack.c.b16 %v359, %v356
  %v465 = vpack.c.b16 %v360, %v357
  %v466 = vpack.c.b16 %v364, %v361
  %v467 = vpack.c.b16 %v365, %v362
  %v468 = vpack.c.b16 %v366, %v363
  %v469 = vpack.c.b16 %v370, %v367
  %v470 = vpack.c.b16 %v371, %v368
  %v471 = vpack.c.b16 %v372, %v369
  %v472 = vpack.c.b16 %v376, %v373
  %v473 = vpack.c.b16 %v377, %v374
  %v474 = vpack.c.b16 %v378, %v375
  %v475 = vpack.c.b16 %v382, %v379
  %v476 = vpack.c.b16 %v383, %v380
  %v477 = vpack.c.b16 %v384, %v381
  %v478 = vpack.c.b16 %v388, %v385
  %v479 = vpack.c.b16 %v389, %v386
  %v480 = vpack.c.b16 %v390, %v387
  %v481 = vpack.c.b16 %v394, %v391
  %v482 = vpack.c.b16 %v395, %v392
  %v483 = vpack.c.b16 %v396, %v393
  %v484 = vpack.c.b16 %v400, %v397
  %v485 = vpack.c.b16 %v401, %v398
  %v486 = vpack.c.b16 %v402, %v399
  %v487 = vpack.c.b16 %v406, %v403
  %v488 = vpack.c.b16 %v407, %v404
  %v489 = vpack.c.b16 %v408, %v405
  %v490 = vpack.c.b16 %v412, %v409
  %v491 = vpack.c.b16 %v413, %v410
  %v492 = vpack.c.b16 %v414, %v411
  %v581 = vunpack.c.l.b16 %v119
  %v582 = vunpack.c.l.b16 %v120
  %v583 = vunpack.c.l.b16 %v121
  %v584 = vunpack.c.l.b16 %v122
  %v585 = vunpack.c.l.b16 %v123
  %v586 = vunpack.c.l.b16 %v124
  %v587 = vunpack.c.l.b16 %v125
  %v588 = vunpack.c.l.b16 %v126
  %v589 = vunpack.c.l.b16 %v127
  %v590 = vunpack.c.l.b16 %v128
  %v591 = vunpack.c.l.b16 %v129
  %v592 = vunpack.c.l.b16 %v130
  %v593 = vunpack.c.l.b16 %v131
  %v594 = vunpack.c.l.b16 %v132
  %v595 = vunpack.c.l.b16 %v133
  %v596 = vunpack.c.l.b16 %v134
  %v597 = vunpack.c.l.b16 %v135
  %v598 = vunpack.c.l.b16 %v136
  %v599 = vunpack.c.l.b16 %v137
  %v600 = vunpack.c.l.b16 %v138
  %v601 = vunpack.c.l.b16 %v139
  %v602 = vunpack.c.l.b16 %v140
  %v603 = vunpack.c.l.b16 %v141
  %v604 = vunpack.c.l.b16 %v142
  %v605 = vunpack.c.l.b16 %v143
  %v606 = vunpack.c.l.b16 %v144
  %v607 = vunpack.c.l.b16 %v145
  %v608 = vunpack.c.l.b16 %v146
  %v609 = vunpack.c.l.b16 %v147
  %v610 = vunpack.c.l.b16 %v148
  %v611 = vunpack.c.l.b16 %v149
  %v612 = vunpack.c.l.b16 %v150
  %v613 = vunpack.c.l.b16 %v151
  %v614 = vunpack.c.l.b16 %v152
  %v615 = vunpack.c.l.b16 %v153
  %v616 = vunpack.c.l.b16 %v154
  %v617 = vpack.c.b16 %v582, %v581
  %v618 = vpack.c.b16 %v584, %v583
  %v619 = vpack.c.b16 %v586, %v585
  %v620 = vpack.c.b16 %v588, %v587
  %v621 = vpack.c.b16 %v590, %v589
  %v622 = vpack.c.b16 %v592, %v591
  %v623 = vpack.c.b16 %v594, %v593
  %v624 = vpack.c.b16 %v596, %v595
  %v625 = vpack.c.b16 %v598, %v597
  %v626 = vpack.c.b16 %v600, %v599
  %v627 = vpack.c.b16 %v602, %v601
  %v628 = vpack.c.b16 %v604, %v603
  %v629 = vpack.c.b16 %v606, %v605
  %v630 = vpack.c.b16 %v608, %v607
  %v631 = vpack.c.b16 %v610, %v609
  %v632 = vpack.c.b16 %v612, %v611
  %v633 = vpack.c.b16 %v614, %v613
  %v634 = vpack.c.b16 %v616, %v615
  %vm653 = vcmask 261120
  %v655 = vsel %vm653, %v417, 0
  %v658 = vsel %vm653, %v420, 0
  %v661 = vsel %vm653, %v423, 0
  %v664 = vsel %vm653, %v426, 0
  %v667 = vsel %vm653, %v429, 0
  %v670 = vsel %vm653, %v432, 0
  %v673 = vsel %vm653, %v435, 0
  %v676 = vsel %vm653, %v438, 0
  %v679 = vsel %vm653, %v441, 0
  %v682 = vsel %vm653, %v444, 0
  %v685 = vsel %vm653, %v447, 0
  %v688 = vsel %vm653, %v450, 0
  %v691 = vsel %vm653, %v453, 0
  %v694 = vsel %vm653, %v456, 0
  %v697 = vsel %vm653, %v459, 0
  %v700 = vsel %vm653, %v462, 0
  %v703 = vsel %vm653, %v465, 0
  %v706 = vsel %vm653, %v468, 0
  %v709 = vsel %vm653, %v471, 0
  %v712 = vsel %vm653, %v474, 0
  %v715 = vsel %vm653, %v477, 0
  %v718 = vsel %vm653, %v480, 0
  %v721 = vsel %vm653, %v483, 0
  %v724 = vsel %vm653, %v486, 0
  %v727 = vsel %vm653, %v489, 0
  %v730 = vsel %vm653, %v492, 0
  %732 = vmatprep.subr.bf16.mxu0 0
  %733 = vmatpush1.bf16.msra.mxu0 %v617
  %734 = vmatprep.subr.bf16.mxu0 0
  %735 = vmatpush1.bf16.msra.mxu0 %v618
  %736 = vmatprep.subr.bf16.mxu0 0
  %737 = vmatpush1.bf16.msra.mxu0 %v619
  %738 = vmatprep.subr.bf16.mxu0 0
  %739 = vmatpush1.bf16.msra.mxu0 %v620
  %740 = vmatprep.subr.bf16.mxu0 0
  %741 = vmatpush1.bf16.msra.mxu0 %v621
  %742 = vmatprep.subr.bf16.mxu0 0
  %743 = vmatpush1.bf16.msra.mxu0 %v622
  %744 = vmatprep.subr.bf16.mxu0 0
  %745 = vmatpush1.bf16.msra.mxu0 %v623
  %746 = vmatprep.subr.bf16.mxu0 0
  %747 = vmatpush1.bf16.msra.mxu0 %v624
  %748 = vmatprep.subr.bf16.mxu0 0
  %749 = vmatpush1.bf16.msra.mxu0 %v625
  %750 = vmatprep.subr.bf16.mxu0 0
  %751 = vmatpush1.bf16.msra.mxu0 %v626
  %752 = vmatprep.subr.bf16.mxu0 0
  %753 = vmatpush1.bf16.msra.mxu0 %v627
  %754 = vmatprep.subr.bf16.mxu0 0
  %755 = vmatpush1.bf16.msra.mxu0 %v628
  %756 = vmatprep.subr.bf16.mxu0 0
  %757 = vmatpush1.bf16.msra.mxu0 %v629
  %758 = vmatprep.subr.bf16.mxu0 0
  %759 = vmatpush1.bf16.msra.mxu0 %v630
  %760 = vmatprep.subr.bf16.mxu0 0
  %761 = vmatpush1.bf16.msra.mxu0 %v631
  %762 = vmatprep.subr.bf16.mxu0 0
  %763 = vmatpush1.bf16.msra.mxu0 %v632
  %764 = vmatprep.mubr.bf16.mxu0 %v416
  %765 = vmatmul.mubr.bf16.gmra.mrb[0].mxu0 %v415
  %v766 = vpop.f32.mrb[0].mxu0
  %v767 = vadd.f32 0.0, %v766
  %v768 = vpop.f32.mrb[0].mxu0
  %v769 = vpop.f32.mrb[0].mxu0
  %v770 = vadd.f32 0.0, %v769
  %v771 = vpop.f32.mrb[0].mxu0
  %772 = vmatprep.mubr.bf16.mxu0 %v419
  %773 = vmatmul.mubr.bf16.gmra.mrb[0].mxu0 %v418
  %v774 = vpop.f32.mrb[0].mxu0
  %v775 = vadd.f32 0.0, %v774
  %v776 = vpop.f32.mrb[0].mxu0
  %v777 = vpop.f32.mrb[0].mxu0
  %v778 = vadd.f32 0.0, %v777
  %v779 = vpop.f32.mrb[0].mxu0
  %780 = vmatprep.mubr.bf16.mxu0 %v422
  %781 = vmatmul.mubr.bf16.gmra.mrb[0].mxu0 %v421
  %v782 = vpop.f32.mrb[0].mxu0
  %v783 = vadd.f32 0.0, %v782
  %v784 = vpop.f32.mrb[0].mxu0
  %v785 = vpop.f32.mrb[0].mxu0
  %v786 = vadd.f32 0.0, %v785
  %v787 = vpop.f32.mrb[0].mxu0
  %788 = vmatprep.mubr.bf16.mxu0 %v425
  %789 = vmatmul.mubr.bf16.gmra.mrb[0].mxu0 %v424
  %v790 = vpop.f32.mrb[0].mxu0
  %v791 = vadd.f32 0.0, %v790
  %v792 = vpop.f32.mrb[0].mxu0
  %v793 = vpop.f32.mrb[0].mxu0
  %v794 = vadd.f32 0.0, %v793
  %v795 = vpop.f32.mrb[0].mxu0
  %796 = vmatprep.mubr.bf16.mxu0 %v428
  %797 = vmatmul.mubr.bf16.gmra.mrb[0].mxu0 %v427
  %v798 = vpop.f32.mrb[0].mxu0
  %v799 = vadd.f32 0.0, %v798
  %v800 = vpop.f32.mrb[0].mxu0
  %v801 = vpop.f32.mrb[0].mxu0
  %v802 = vadd.f32 0.0, %v801
  %v803 = vpop.f32.mrb[0].mxu0
  %804 = vmatprep.mubr.bf16.mxu0 %v431
  %805 = vmatmul.mubr.bf16.gmra.mrb[0].mxu0 %v430
  %v806 = vpop.f32.mrb[0].mxu0
  %v807 = vadd.f32 0.0, %v806
  %v808 = vpop.f32.mrb[0].mxu0
  %v809 = vpop.f32.mrb[0].mxu0
  %v810 = vadd.f32 0.0, %v809
  %v811 = vpop.f32.mrb[0].mxu0
  %812 = vmatprep.mubr.bf16.mxu0 %v434
  %813 = vmatmul.mubr.bf16.gmra.mrb[0].mxu0 %v433
  %v814 = vpop.f32.mrb[0].mxu0
  %v815 = vadd.f32 0.0, %v814
  %v816 = vpop.f32.mrb[0].mxu0
  %v817 = vpop.f32.mrb[0].mxu0
  %v818 = vadd.f32 0.0, %v817
  %v819 = vpop.f32.mrb[0].mxu0
  %820 = vmatprep.mubr.bf16.mxu0 %v437
  %821 = vmatmul.mubr.bf16.gmra.mrb[0].mxu0 %v436
  %v822 = vpop.f32.mrb[0].mxu0
  %v823 = vadd.f32 0.0, %v822
  %v824 = vpop.f32.mrb[0].mxu0
  %v825 = vpop.f32.mrb[0].mxu0
  %v826 = vadd.f32 0.0, %v825
  %v827 = vpop.f32.mrb[0].mxu0
  %828 = vmatprep.mubr.bf16.mxu0 %v440
  %829 = vmatmul.mubr.bf16.gmra.mrb[0].mxu0 %v439
  %v830 = vpop.f32.mrb[0].mxu0
  %v831 = vadd.f32 0.0, %v830
  %v832 = vpop.f32.mrb[0].mxu0
  %v833 = vpop.f32.mrb[0].mxu0
  %v834 = vadd.f32 0.0, %v833
  %v835 = vpop.f32.mrb[0].mxu0
  %836 = vmatprep.mubr.bf16.mxu0 %v443
  %837 = vmatmul.mubr.bf16.gmra.mrb[0].mxu0 %v442
  %v838 = vpop.f32.mrb[0].mxu0
  %v839 = vadd.f32 0.0, %v838
  %v840 = vpop.f32.mrb[0].mxu0
  %v841 = vpop.f32.mrb[0].mxu0
  %v842 = vadd.f32 0.0, %v841
  %v843 = vpop.f32.mrb[0].mxu0
  %844 = vmatprep.mubr.bf16.mxu0 %v446
  %845 = vmatmul.mubr.bf16.gmra.mrb[0].mxu0 %v445
  %v846 = vpop.f32.mrb[0].mxu0
  %v847 = vadd.f32 0.0, %v846
  %v848 = vpop.f32.mrb[0].mxu0
  %v849 = vpop.f32.mrb[0].mxu0
  %v850 = vadd.f32 0.0, %v849
  %v851 = vpop.f32.mrb[0].mxu0
  %852 = vmatprep.mubr.bf16.mxu0 %v449
  %853 = vmatmul.mubr.bf16.gmra.mrb[0].mxu0 %v448
  %v854 = vpop.f32.mrb[0].mxu0
  %v855 = vadd.f32 0.0, %v854
  %v856 = vpop.f32.mrb[0].mxu0
  %v857 = vpop.f32.mrb[0].mxu0
  %v858 = vadd.f32 0.0, %v857
  %v859 = vpop.f32.mrb[0].mxu0
  %860 = vmatprep.mubr.bf16.mxu0 %v452
  %861 = vmatmul.mubr.bf16.gmra.mrb[0].mxu0 %v451
  %v862 = vpop.f32.mrb[0].mxu0
  %v863 = vadd.f32 0.0, %v862
  %v864 = vpop.f32.mrb[0].mxu0
  %v865 = vpop.f32.mrb[0].mxu0
  %v866 = vadd.f32 0.0, %v865
  %v867 = vpop.f32.mrb[0].mxu0
  %868 = vmatprep.mubr.bf16.mxu0 %v455
  %869 = vmatmul.mubr.bf16.gmra.mrb[0].mxu0 %v454
  %v870 = vpop.f32.mrb[0].mxu0
  %v871 = vadd.f32 0.0, %v870
  %v872 = vpop.f32.mrb[0].mxu0
  %v873 = vpop.f32.mrb[0].mxu0
  %v874 = vadd.f32 0.0, %v873
  %v875 = vpop.f32.mrb[0].mxu0
  %876 = vmatprep.mubr.bf16.mxu0 %v458
  %877 = vmatmul.mubr.bf16.gmra.mrb[0].mxu0 %v457
  %v878 = vpop.f32.mrb[0].mxu0
  %v879 = vadd.f32 0.0, %v878
  %v880 = vpop.f32.mrb[0].mxu0
  %v881 = vpop.f32.mrb[0].mxu0
  %v882 = vadd.f32 0.0, %v881
  %v883 = vpop.f32.mrb[0].mxu0
  %884 = vmatprep.mubr.bf16.mxu0 %v461
  %885 = vmatmul.mubr.bf16.gmra.mrb[0].mxu0 %v460
  %v886 = vpop.f32.mrb[0].mxu0
  %v887 = vadd.f32 0.0, %v886
  %v888 = vpop.f32.mrb[0].mxu0
  %v889 = vpop.f32.mrb[0].mxu0
  %v890 = vadd.f32 0.0, %v889
  %v891 = vpop.f32.mrb[0].mxu0
  %892 = vmatprep.mubr.bf16.mxu0 %v464
  %893 = vmatmul.mubr.bf16.gmra.mrb[0].mxu0 %v463
  %v894 = vpop.f32.mrb[0].mxu0
  %v895 = vadd.f32 0.0, %v894
  %v896 = vpop.f32.mrb[0].mxu0
  %v897 = vpop.f32.mrb[0].mxu0
  %v898 = vadd.f32 0.0, %v897
  %v899 = vpop.f32.mrb[0].mxu0
  %900 = vmatprep.mubr.bf16.mxu0 %v467
  %901 = vmatmul.mubr.bf16.gmra.mrb[0].mxu0 %v466
  %v902 = vpop.f32.mrb[0].mxu0
  %v903 = vadd.f32 0.0, %v902
  %v904 = vpop.f32.mrb[0].mxu0
  %v905 = vpop.f32.mrb[0].mxu0
  %v906 = vadd.f32 0.0, %v905
  %v907 = vpop.f32.mrb[0].mxu0
  %908 = vmatprep.mubr.bf16.mxu0 %v470
  %909 = vmatmul.mubr.bf16.gmra.mrb[0].mxu0 %v469
  %v910 = vpop.f32.mrb[0].mxu0
  %v911 = vadd.f32 0.0, %v910
  %v912 = vpop.f32.mrb[0].mxu0
  %v913 = vpop.f32.mrb[0].mxu0
  %v914 = vadd.f32 0.0, %v913
  %v915 = vpop.f32.mrb[0].mxu0
  %916 = vmatprep.mubr.bf16.mxu0 %v473
  %917 = vmatmul.mubr.bf16.gmra.mrb[0].mxu0 %v472
  %v918 = vpop.f32.mrb[0].mxu0
  %v919 = vadd.f32 0.0, %v918
  %v920 = vpop.f32.mrb[0].mxu0
  %v921 = vpop.f32.mrb[0].mxu0
  %v922 = vadd.f32 0.0, %v921
  %v923 = vpop.f32.mrb[0].mxu0
  %924 = vmatprep.mubr.bf16.mxu0 %v476
  %925 = vmatmul.mubr.bf16.gmra.mrb[0].mxu0 %v475
  %v926 = vpop.f32.mrb[0].mxu0
  %v927 = vadd.f32 0.0, %v926
  %v928 = vpop.f32.mrb[0].mxu0
  %v929 = vpop.f32.mrb[0].mxu0
  %v930 = vadd.f32 0.0, %v929
  %v931 = vpop.f32.mrb[0].mxu0
  %932 = vmatprep.mubr.bf16.mxu0 %v479
  %933 = vmatmul.mubr.bf16.gmra.mrb[0].mxu0 %v478
  %v934 = vpop.f32.mrb[0].mxu0
  %v935 = vadd.f32 0.0, %v934
  %v936 = vpop.f32.mrb[0].mxu0
  %v937 = vpop.f32.mrb[0].mxu0
  %v938 = vadd.f32 0.0, %v937
  %v939 = vpop.f32.mrb[0].mxu0
  %940 = vmatprep.mubr.bf16.mxu0 %v482
  %941 = vmatmul.mubr.bf16.gmra.mrb[0].mxu0 %v481
  %v942 = vpop.f32.mrb[0].mxu0
  %v943 = vadd.f32 0.0, %v942
  %v944 = vpop.f32.mrb[0].mxu0
  %v945 = vpop.f32.mrb[0].mxu0
  %v946 = vadd.f32 0.0, %v945
  %v947 = vpop.f32.mrb[0].mxu0
  %948 = vmatprep.mubr.bf16.mxu0 %v485
  %949 = vmatmul.mubr.bf16.gmra.mrb[0].mxu0 %v484
  %v950 = vpop.f32.mrb[0].mxu0
  %v951 = vadd.f32 0.0, %v950
  %v952 = vpop.f32.mrb[0].mxu0
  %v953 = vpop.f32.mrb[0].mxu0
  %v954 = vadd.f32 0.0, %v953
  %v955 = vpop.f32.mrb[0].mxu0
  %956 = vmatprep.mubr.bf16.mxu0 %v488
  %957 = vmatmul.mubr.bf16.gmra.mrb[0].mxu0 %v487
  %v958 = vpop.f32.mrb[0].mxu0
  %v959 = vadd.f32 0.0, %v958
  %v960 = vpop.f32.mrb[0].mxu0
  %v961 = vpop.f32.mrb[0].mxu0
  %v962 = vadd.f32 0.0, %v961
  %v963 = vpop.f32.mrb[0].mxu0
  %964 = vmatprep.mubr.bf16.mxu0 %v491
  %965 = vmatmul.mubr.bf16.gmra.mrb[0].mxu0 %v490
  %v966 = vpop.f32.mrb[0].mxu0
  %v967 = vadd.f32 0.0, %v966
  %v968 = vpop.f32.mrb[0].mxu0
  %v969 = vpop.f32.mrb[0].mxu0
  %v970 = vadd.f32 0.0, %v969
  %v971 = vpop.f32.mrb[0].mxu0
  %972 = vdwg.mxu0
  %973 = vmatprep.subr.bf16.mxu0 0
  %974 = vmatpush1.bf16.msra.mxu0 %v633
  %975 = vmatprep.subr.bf16.mxu0 0
  %976 = vmatpush1.bf16.msra.mxu0 %v634
  %977 = vmatprep.subr.bf16.mxu0 0
  %978 = vmatpush1.bf16.msra.mxu0 0
  %979 = vmatprep.subr.bf16.mxu0 0
  %980 = vmatpush1.bf16.msra.mxu0 0
  %981 = vmatprep.subr.bf16.mxu0 0
  %982 = vmatpush1.bf16.msra.mxu0 0
  %983 = vmatprep.subr.bf16.mxu0 0
  %984 = vmatpush1.bf16.msra.mxu0 0
  %985 = vmatprep.subr.bf16.mxu0 0
  %986 = vmatpush1.bf16.msra.mxu0 0
  %987 = vmatprep.subr.bf16.mxu0 0
  %988 = vmatpush1.bf16.msra.mxu0 0
  %989 = vmatprep.subr.bf16.mxu0 0
  %990 = vmatpush1.bf16.msra.mxu0 0
  %991 = vmatprep.subr.bf16.mxu0 0
  %992 = vmatpush1.bf16.msra.mxu0 0
  %993 = vmatprep.subr.bf16.mxu0 0
  %994 = vmatpush1.bf16.msra.mxu0 0
  %995 = vmatprep.subr.bf16.mxu0 0
  %996 = vmatpush1.bf16.msra.mxu0 0
  %997 = vmatprep.subr.bf16.mxu0 0
  %998 = vmatpush1.bf16.msra.mxu0 0
  %999 = vmatprep.subr.bf16.mxu0 0
  %1000 = vmatpush1.bf16.msra.mxu0 0
  %1001 = vmatprep.subr.bf16.mxu0 0
  %1002 = vmatpush1.bf16.msra.mxu0 0
  %1003 = vmatprep.subr.bf16.mxu0 0
  %1004 = vmatpush1.bf16.msra.mxu0 0
  %1005 = vmatprep.mubr.bf16.mxu0 0
  %1006 = vmatmul.mubr.bf16.gmra.mrb[0].mxu0 %v655
  %v1007 = vpop.f32.mrb[0].mxu0
  %v1008 = vadd.f32 %v767, %v1007
  %v1009 = vpop.f32.mrb[0].mxu0
  %v1010 = vpop.f32.mrb[0].mxu0
  %v1011 = vadd.f32 %v770, %v1010
  %v1012 = vpop.f32.mrb[0].mxu0
  %1013 = vmatprep.mubr.bf16.mxu0 0
  %1014 = vmatmul.mubr.bf16.gmra.mrb[0].mxu0 %v658
  %v1015 = vpop.f32.mrb[0].mxu0
  %v1016 = vadd.f32 %v775, %v1015
  %v1017 = vpop.f32.mrb[0].mxu0
  %v1018 = vpop.f32.mrb[0].mxu0
  %v1019 = vadd.f32 %v778, %v1018
  %v1020 = vpop.f32.mrb[0].mxu0
  %1021 = vmatprep.mubr.bf16.mxu0 0
  %1022 = vmatmul.mubr.bf16.gmra.mrb[0].mxu0 %v661
  %v1023 = vpop.f32.mrb[0].mxu0
  %v1024 = vadd.f32 %v783, %v1023
  %v1025 = vpop.f32.mrb[0].mxu0
  %v1026 = vpop.f32.mrb[0].mxu0
  %v1027 = vadd.f32 %v786, %v1026
  %v1028 = vpop.f32.mrb[0].mxu0
  %1029 = vmatprep.mubr.bf16.mxu0 0
  %1030 = vmatmul.mubr.bf16.gmra.mrb[0].mxu0 %v664
  %v1031 = vpop.f32.mrb[0].mxu0
  %v1032 = vadd.f32 %v791, %v1031
  %v1033 = vpop.f32.mrb[0].mxu0
  %v1034 = vpop.f32.mrb[0].mxu0
  %v1035 = vadd.f32 %v794, %v1034
  %v1036 = vpop.f32.mrb[0].mxu0
  %1037 = vmatprep.mubr.bf16.mxu0 0
  %1038 = vmatmul.mubr.bf16.gmra.mrb[0].mxu0 %v667
  %v1039 = vpop.f32.mrb[0].mxu0
  %v1040 = vadd.f32 %v799, %v1039
  %v1041 = vpop.f32.mrb[0].mxu0
  %v1042 = vpop.f32.mrb[0].mxu0
  %v1043 = vadd.f32 %v802, %v1042
  %v1044 = vpop.f32.mrb[0].mxu0
  %1045 = vmatprep.mubr.bf16.mxu0 0
  %1046 = vmatmul.mubr.bf16.gmra.mrb[0].mxu0 %v670
  %v1047 = vpop.f32.mrb[0].mxu0
  %v1048 = vadd.f32 %v807, %v1047
  %v1049 = vpop.f32.mrb[0].mxu0
  %v1050 = vpop.f32.mrb[0].mxu0
  %v1051 = vadd.f32 %v810, %v1050
  %v1052 = vpop.f32.mrb[0].mxu0
  %1053 = vmatprep.mubr.bf16.mxu0 0
  %1054 = vmatmul.mubr.bf16.gmra.mrb[0].mxu0 %v673
  %v1055 = vpop.f32.mrb[0].mxu0
  %v1056 = vadd.f32 %v815, %v1055
  %v1057 = vpop.f32.mrb[0].mxu0
  %v1058 = vpop.f32.mrb[0].mxu0
  %v1059 = vadd.f32 %v818, %v1058
  %v1060 = vpop.f32.mrb[0].mxu0
  %1061 = vmatprep.mubr.bf16.mxu0 0
  %1062 = vmatmul.mubr.bf16.gmra.mrb[0].mxu0 %v676
  %v1063 = vpop.f32.mrb[0].mxu0
  %v1064 = vadd.f32 %v823, %v1063
  %v1065 = vpop.f32.mrb[0].mxu0
  %v1066 = vpop.f32.mrb[0].mxu0
  %v1067 = vadd.f32 %v826, %v1066
  %v1068 = vpop.f32.mrb[0].mxu0
  %1069 = vmatprep.mubr.bf16.mxu0 0
  %1070 = vmatmul.mubr.bf16.gmra.mrb[0].mxu0 %v679
  %v1071 = vpop.f32.mrb[0].mxu0
  %v1072 = vadd.f32 %v831, %v1071
  %v1073 = vpop.f32.mrb[0].mxu0
  %v1074 = vpop.f32.mrb[0].mxu0
  %v1075 = vadd.f32 %v834, %v1074
  %v1076 = vpop.f32.mrb[0].mxu0
  %1077 = vmatprep.mubr.bf16.mxu0 0
  %1078 = vmatmul.mubr.bf16.gmra.mrb[0].mxu0 %v682
  %v1079 = vpop.f32.mrb[0].mxu0
  %v1080 = vadd.f32 %v839, %v1079
  %v1081 = vpop.f32.mrb[0].mxu0
  %v1082 = vpop.f32.mrb[0].mxu0
  %v1083 = vadd.f32 %v842, %v1082
  %v1084 = vpop.f32.mrb[0].mxu0
  %1085 = vmatprep.mubr.bf16.mxu0 0
  %1086 = vmatmul.mubr.bf16.gmra.mrb[0].mxu0 %v685
  %v1087 = vpop.f32.mrb[0].mxu0
  %v1088 = vadd.f32 %v847, %v1087
  %v1089 = vpop.f32.mrb[0].mxu0
  %v1090 = vpop.f32.mrb[0].mxu0
  %v1091 = vadd.f32 %v850, %v1090
  %v1092 = vpop.f32.mrb[0].mxu0
  %1093 = vmatprep.mubr.bf16.mxu0 0
  %1094 = vmatmul.mubr.bf16.gmra.mrb[0].mxu0 %v688
  %v1095 = vpop.f32.mrb[0].mxu0
  %v1096 = vadd.f32 %v855, %v1095
  %v1097 = vpop.f32.mrb[0].mxu0
  %v1098 = vpop.f32.mrb[0].mxu0
  %v1099 = vadd.f32 %v858, %v1098
  %v1100 = vpop.f32.mrb[0].mxu0
  %1101 = vmatprep.mubr.bf16.mxu0 0
  %1102 = vmatmul.mubr.bf16.gmra.mrb[0].mxu0 %v691
  %v1103 = vpop.f32.mrb[0].mxu0
  %v1104 = vadd.f32 %v863, %v1103
  %v1105 = vpop.f32.mrb[0].mxu0
  %v1106 = vpop.f32.mrb[0].mxu0
  %v1107 = vadd.f32 %v866, %v1106
  %v1108 = vpop.f32.mrb[0].mxu0
  %1109 = vmatprep.mubr.bf16.mxu0 0
  %1110 = vmatmul.mubr.bf16.gmra.mrb[0].mxu0 %v694
  %v1111 = vpop.f32.mrb[0].mxu0
  %v1112 = vadd.f32 %v871, %v1111
  %v1113 = vpop.f32.mrb[0].mxu0
  %v1114 = vpop.f32.mrb[0].mxu0
  %v1115 = vadd.f32 %v874, %v1114
  %v1116 = vpop.f32.mrb[0].mxu0
  %1117 = vmatprep.mubr.bf16.mxu0 0
  %1118 = vmatmul.mubr.bf16.gmra.mrb[0].mxu0 %v697
  %v1119 = vpop.f32.mrb[0].mxu0
  %v1120 = vadd.f32 %v879, %v1119
  %v1121 = vpop.f32.mrb[0].mxu0
  %v1122 = vpop.f32.mrb[0].mxu0
  %v1123 = vadd.f32 %v882, %v1122
  %v1124 = vpop.f32.mrb[0].mxu0
  %1125 = vmatprep.mubr.bf16.mxu0 0
  %1126 = vmatmul.mubr.bf16.gmra.mrb[0].mxu0 %v700
  %v1127 = vpop.f32.mrb[0].mxu0
  %v1128 = vadd.f32 %v887, %v1127
  %v1129 = vpop.f32.mrb[0].mxu0
  %v1130 = vpop.f32.mrb[0].mxu0
  %v1131 = vadd.f32 %v890, %v1130
  %v1132 = vpop.f32.mrb[0].mxu0
  %1133 = vmatprep.mubr.bf16.mxu0 0
  %1134 = vmatmul.mubr.bf16.gmra.mrb[0].mxu0 %v703
  %v1135 = vpop.f32.mrb[0].mxu0
  %v1136 = vadd.f32 %v895, %v1135
  %v1137 = vpop.f32.mrb[0].mxu0
  %v1138 = vpop.f32.mrb[0].mxu0
  %v1139 = vadd.f32 %v898, %v1138
  %v1140 = vpop.f32.mrb[0].mxu0
  %1141 = vmatprep.mubr.bf16.mxu0 0
  %1142 = vmatmul.mubr.bf16.gmra.mrb[0].mxu0 %v706
  %v1143 = vpop.f32.mrb[0].mxu0
  %v1144 = vadd.f32 %v903, %v1143
  %v1145 = vpop.f32.mrb[0].mxu0
  %v1146 = vpop.f32.mrb[0].mxu0
  %v1147 = vadd.f32 %v906, %v1146
  %v1148 = vpop.f32.mrb[0].mxu0
  %1149 = vmatprep.mubr.bf16.mxu0 0
  %1150 = vmatmul.mubr.bf16.gmra.mrb[0].mxu0 %v709
  %v1151 = vpop.f32.mrb[0].mxu0
  %v1152 = vadd.f32 %v911, %v1151
  %v1153 = vpop.f32.mrb[0].mxu0
  %v1154 = vpop.f32.mrb[0].mxu0
  %v1155 = vadd.f32 %v914, %v1154
  %v1156 = vpop.f32.mrb[0].mxu0
  %1157 = vmatprep.mubr.bf16.mxu0 0
  %1158 = vmatmul.mubr.bf16.gmra.mrb[0].mxu0 %v712
  %v1159 = vpop.f32.mrb[0].mxu0
  %v1160 = vadd.f32 %v919, %v1159
  %v1161 = vpop.f32.mrb[0].mxu0
  %v1162 = vpop.f32.mrb[0].mxu0
  %v1163 = vadd.f32 %v922, %v1162
  %v1164 = vpop.f32.mrb[0].mxu0
  %1165 = vmatprep.mubr.bf16.mxu0 0
  %1166 = vmatmul.mubr.bf16.gmra.mrb[0].mxu0 %v715
  %v1167 = vpop.f32.mrb[0].mxu0
  %v1168 = vadd.f32 %v927, %v1167
  %v1169 = vpop.f32.mrb[0].mxu0
  %v1170 = vpop.f32.mrb[0].mxu0
  %v1171 = vadd.f32 %v930, %v1170
  %v1172 = vpop.f32.mrb[0].mxu0
  %1173 = vmatprep.mubr.bf16.mxu0 0
  %1174 = vmatmul.mubr.bf16.gmra.mrb[0].mxu0 %v718
  %v1175 = vpop.f32.mrb[0].mxu0
  %v1176 = vadd.f32 %v935, %v1175
  %v1177 = vpop.f32.mrb[0].mxu0
  %v1178 = vpop.f32.mrb[0].mxu0
  %v1179 = vadd.f32 %v938, %v1178
  %v1180 = vpop.f32.mrb[0].mxu0
  %1181 = vmatprep.mubr.bf16.mxu0 0
  %1182 = vmatmul.mubr.bf16.gmra.mrb[0].mxu0 %v721
  %v1183 = vpop.f32.mrb[0].mxu0
  %v1184 = vadd.f32 %v943, %v1183
  %v1185 = vpop.f32.mrb[0].mxu0
  %v1186 = vpop.f32.mrb[0].mxu0
  %v1187 = vadd.f32 %v946, %v1186
  %v1188 = vpop.f32.mrb[0].mxu0
  %1189 = vmatprep.mubr.bf16.mxu0 0
  %1190 = vmatmul.mubr.bf16.gmra.mrb[0].mxu0 %v724
  %v1191 = vpop.f32.mrb[0].mxu0
  %v1192 = vadd.f32 %v951, %v1191
  %v1193 = vpop.f32.mrb[0].mxu0
  %v1194 = vpop.f32.mrb[0].mxu0
  %v1195 = vadd.f32 %v954, %v1194
  %v1196 = vpop.f32.mrb[0].mxu0
  %1197 = vmatprep.mubr.bf16.mxu0 0
  %1198 = vmatmul.mubr.bf16.gmra.mrb[0].mxu0 %v727
  %v1199 = vpop.f32.mrb[0].mxu0
  %v1200 = vadd.f32 %v959, %v1199
  %v1201 = vpop.f32.mrb[0].mxu0
  %v1202 = vpop.f32.mrb[0].mxu0
  %v1203 = vadd.f32 %v962, %v1202
  %v1204 = vpop.f32.mrb[0].mxu0
  %1205 = vmatprep.mubr.bf16.mxu0 0
  %1206 = vmatmul.mubr.bf16.gmra.mrb[0].mxu0 %v730
  %v1207 = vpop.f32.mrb[0].mxu0
  %v1208 = vadd.f32 %v967, %v1207
  %v1209 = vpop.f32.mrb[0].mxu0
  %v1210 = vpop.f32.mrb[0].mxu0
  %v1211 = vadd.f32 %v970, %v1210
  %v1212 = vpop.f32.mrb[0].mxu0
  %1213 = vdwg.mxu0
  %v1214 = vmax.f32 %v1008, %v1059
  %v1215 = vmax.f32 %v1011, %v1064
  %v1216 = vmax.f32 %v1016, %v1067
  %v1217 = vmax.f32 %v1019, %v1072
  %v1218 = vmax.f32 %v1024, %v1075
  %v1219 = vmax.f32 %v1027, %v1080
  %v1220 = vmax.f32 %v1032, %v1083
  %v1221 = vmax.f32 %v1035, %v1088
  %v1222 = vmax.f32 %v1040, %v1091
  %v1223 = vmax.f32 %v1043, %v1096
  %v1224 = vmax.f32 %v1048, %v1099
  %v1225 = vmax.f32 %v1051, %v1104
  %v1226 = vmax.f32 %v1056, %v1107
  %v1227 = vmax.f32 %v1112, %v1163
  %v1228 = vmax.f32 %v1115, %v1168
  %v1229 = vmax.f32 %v1120, %v1171
  %v1230 = vmax.f32 %v1123, %v1176
  %v1231 = vmax.f32 %v1128, %v1179
  %v1232 = vmax.f32 %v1131, %v1184
  %v1233 = vmax.f32 %v1136, %v1187
  %v1234 = vmax.f32 %v1139, %v1192
  %v1235 = vmax.f32 %v1144, %v1195
  %v1236 = vmax.f32 %v1147, %v1200
  %v1237 = vmax.f32 %v1152, %v1203
  %v1238 = vmax.f32 %v1155, %v1208
  %v1239 = vmax.f32 %v1160, %v1211
  %v1240 = vmax.f32 %v1214, %v1227
  %v1241 = vmax.f32 %v1215, %v1228
  %v1242 = vmax.f32 %v1216, %v1229
  %v1243 = vmax.f32 %v1217, %v1230
  %v1244 = vmax.f32 %v1218, %v1231
  %v1245 = vmax.f32 %v1219, %v1232
  %v1246 = vmax.f32 %v1220, %v1233
  %v1247 = vmax.f32 %v1221, %v1234
  %v1248 = vmax.f32 %v1222, %v1235
  %v1249 = vmax.f32 %v1223, %v1236
  %v1250 = vmax.f32 %v1224, %v1237
  %v1251 = vmax.f32 %v1225, %v1238
  %v1252 = vmax.f32 %v1226, %v1239
  %v1253 = vld [vmem:[%s2] sm:$0x1]
  %v1255 = vlaneseq
  %v1256 = vshrl.u32 %v1255, 7
  %v1257 = vsub.s32 0, %v1256
  %v1258 = vrot.slane %v1253, %v1257
  %v1260 = vadd.f32 %v1240, %v1258
  %v1261 = vadd.f32 %v1241, %v1258
  %v1262 = vadd.f32 %v1242, %v1258
  %v1263 = vadd.f32 %v1243, %v1258
  %v1264 = vadd.f32 %v1244, %v1258
  %v1265 = vadd.f32 %v1245, %v1258
  %v1266 = vadd.f32 %v1246, %v1258
  %v1267 = vadd.f32 %v1247, %v1258
  %v1268 = vadd.f32 %v1248, %v1258
  %v1269 = vadd.f32 %v1249, %v1258
  %v1270 = vadd.f32 %v1250, %v1258
  %v1271 = vadd.f32 %v1251, %v1258
  %v1272 = vadd.f32 %v1252, %v1258
  %v1273 = vmax.f32 %v1260, 0.0
  %v1274 = vmax.f32 %v1261, 0.0
  %v1275 = vmax.f32 %v1262, 0.0
  %v1276 = vmax.f32 %v1263, 0.0
  %v1277 = vmax.f32 %v1264, 0.0
  %v1278 = vmax.f32 %v1265, 0.0
  %v1279 = vmax.f32 %v1266, 0.0
  %v1280 = vmax.f32 %v1267, 0.0
  %v1281 = vmax.f32 %v1268, 0.0
  %v1282 = vmax.f32 %v1269, 0.0
  %v1283 = vmax.f32 %v1270, 0.0
  %v1284 = vmax.f32 %v1271, 0.0
  %v1285 = vmax.f32 %v1272, 0.0
  %vm1286 = vcmask 523264
  %1287 = vst.msk [vmem:[%s3] sm:$0xff] %vm1286, %v1273
  %1288 = vst.msk [vmem:[%s3 + $0x8] sm:$0xff] %vm1286, %v1274
  %1289 = vst.msk [vmem:[%s3 + $0x10] sm:$0xff] %vm1286, %v1275
  %1290 = vst.msk [vmem:[%s3 + $0x18] sm:$0xff] %vm1286, %v1276
  %1291 = vst.msk [vmem:[%s3 + $0x20] sm:$0xff] %vm1286, %v1277
  %1292 = vst.msk [vmem:[%s3 + $0x28] sm:$0xff] %vm1286, %v1278
  %1293 = vst.msk [vmem:[%s3 + $0x30] sm:$0xff] %vm1286, %v1279
  %1294 = vst.msk [vmem:[%s3 + $0x38] sm:$0xff] %vm1286, %v1280
  %1295 = vst.msk [vmem:[%s3 + $0x40] sm:$0xff] %vm1286, %v1281
  %1296 = vst.msk [vmem:[%s3 + $0x48] sm:$0xff] %vm1286, %v1282
  %1297 = vst.msk [vmem:[%s3 + $0x50] sm:$0xff] %vm1286, %v1283
  %1298 = vst.msk [vmem:[%s3 + $0x58] sm:$0xff] %vm1286, %v1284
  %1299 = vst.msk [vmem:[%s3 + $0x60] sm:$0xff] %vm1286, %v1285
  // Predicated region
  $region14: #{mnist_cnn_forward.4} parent=0 // pred_check
    _
  $region15: #{mnist_cnn_forward.4} parent=0 // pred_check_branch
    %1301 = sbr.rel (0) target = $region17
  $region16: #{mnist_cnn_forward.4} parent=0 // pred_region
    _
  $region17: #{mnist_cnn_forward.4} parent=0 // pred_fallthru
    _
  // Predicated region
  $region18: #{mnist_cnn_forward.4} parent=0 // pred_check
    _
  $region19: #{mnist_cnn_forward.4} parent=0 // pred_check_branch
    %1303 = sbr.rel (0) target = $region21
  $region20: #{mnist_cnn_forward.4} parent=0 // pred_region
    _
  $region21: #{mnist_cnn_forward.4} parent=0 // pred_fallthru
    _

// kernel: mnist_cnn_forward.5
$region0: #{mnist_cnn_forward.5}
  #allocation0 [shape = 'u32[]', space=smem, size = 0x4, offset = 0x4, fixed_abs, tag = 'smem constant byte address 0x4 - core index']
  #allocation1 [shape = 'u32[144,128]{1,0:T(1,128)}', space=vmem, size = 0x12000, scoped, tag = 'internal scratch']
  %s0 = inlined_call_operand.vmem [shape: bf16[2,3136], index: 0, kind: input, shape index: {}]
  %s1 = inlined_call_operand.vmem [shape: bf16[3136,128], index: 1, kind: input, shape index: {}]
  %s2 = inlined_call_operand.vmem [shape: f32[1,128], index: 2, kind: input, shape index: {}]
  %s3 = inlined_call_operand.vmem [shape: bf16[128,10], index: 3, kind: input, shape index: {}]
  %s4 = inlined_call_operand.vmem [shape: f32[1,10], index: 4, kind: input, shape index: {}]
  %s5 = inlined_call_operand.hbm [shape: f32[2,10], index: 5, kind: output, shape index: {}]
  %s6 = sld [smem:[#allocation0]]
  $region30: #{mnist_cnn_forward.5} parent=0
    _
  %s8 = ssub.s32 1, %s6
  %s9 = scalar_select 0, %s8, %s6
  $region1: #{mnist_cnn_forward.5} parent=0
    #allocation2 [shape = 'u8[1024]{0}', space=vmem, size = 0x400, scoped, tag = 'output window, operand 0, single buffered']
    #allocation3 [shape = 's32[1]{0}', space=sflag, size = 0x4, scoped, tag = 'scoped memory for mnist_cnn_forward.5']
    %10 = vsyncpa [#allocation3], 0
    // Predicated region
    $region2: #{mnist_cnn_forward.5} parent=1 // pred_check
      _
    $region3: #{mnist_cnn_forward.5} parent=1 // pred_check_branch
      %12 = sbr.rel (0) target = $region5
    $region4: #{mnist_cnn_forward.5} parent=1 // pred_region
      _
    $region5: #{mnist_cnn_forward.5} parent=1 // pred_fallthru
      _
    // Predicated region
    $region6: #{mnist_cnn_forward.5} parent=1 // pred_check
      _
    $region7: #{mnist_cnn_forward.5} parent=1 // pred_check_branch
      %14 = sbr.rel (0) target = $region9
    $region8: #{mnist_cnn_forward.5} parent=1 // pred_region
      _
    $region9: #{mnist_cnn_forward.5} parent=1 // pred_fallthru
      _
    // Predicated region
    $region10: #{mnist_cnn_forward.5} parent=1 // pred_check
      _
    $region11: #{mnist_cnn_forward.5} parent=1 // pred_check_branch
      %16 = sbr.rel (0) target = $region13
    $region12: #{mnist_cnn_forward.5} parent=1 // pred_region
      _
    $region13: #{mnist_cnn_forward.5} parent=1 // pred_fallthru
      _
    // Predicated region
    $region14: #{mnist_cnn_forward.5} parent=1 // pred_check
      _
    $region15: #{mnist_cnn_forward.5} parent=1 // pred_check_branch
      %18 = sbr.rel (0) target = $region17
    $region16: #{mnist_cnn_forward.5} parent=1 // pred_region
      _
    $region17: #{mnist_cnn_forward.5} parent=1 // pred_fallthru
      _
    // Predicated region
    $region18: #{mnist_cnn_forward.5} parent=1 // pred_check
      _
    $region19: #{mnist_cnn_forward.5} parent=1 // pred_check_branch
      %20 = sbr.rel (0) target = $region21
    $region20: #{mnist_cnn_forward.5} parent=1 // pred_region
      _
    $region21: #{mnist_cnn_forward.5} parent=1 // pred_fallthru
      _
    %v22 = vld [vmem:[%s0] sm:$0xff]
    %v23 = vld [vmem:[%s0 + $0x8] sm:$0xff]
    %v24 = vld [vmem:[%s0 + $0x10] sm:$0xff]
    %v25 = vld [vmem:[%s0 + $0x18] sm:$0x1]
    %v26 = vld [vmem:[%s1] sm:$0xf]
    %v27 = vld [vmem:[%s1 + $0x4] sm:$0xf]
    %v28 = vld [vmem:[%s1 + $0x8] sm:$0xf]
    %v29 = vld [vmem:[%s1 + $0xc] sm:$0xf]
    %v30 = vld [vmem:[%s1 + $0x10] sm:$0xf]
    %v31 = vld [vmem:[%s1 + $0x14] sm:$0xf]
    %v32 = vld [vmem:[%s1 + $0x18] sm:$0xf]
    %v33 = vld [vmem:[%s1 + $0x1c] sm:$0xf]
    %v34 = vld [vmem:[%s1 + $0x20] sm:$0xf]
    %v35 = vld [vmem:[%s1 + $0x24] sm:$0xf]
    %v36 = vld [vmem:[%s1 + $0x28] sm:$0xf]
    %v37 = vld [vmem:[%s1 + $0x2c] sm:$0xf]
    %v38 = vld [vmem:[%s1 + $0x30] sm:$0xf]
    %v39 = vld [vmem:[%s1 + $0x34] sm:$0xf]
    %v40 = vld [vmem:[%s1 + $0x38] sm:$0xf]
    %v41 = vld [vmem:[%s1 + $0x3c] sm:$0xf]
    %v42 = vld [vmem:[%s1 + $0x40] sm:$0xf]
    %v43 = vld [vmem:[%s1 + $0x44] sm:$0xf]
    %v44 = vld [vmem:[%s1 + $0x48] sm:$0xf]
    %v45 = vld [vmem:[%s1 + $0x4c] sm:$0xf]
    %v46 = vld [vmem:[%s1 + $0x50] sm:$0xf]
    %v47 = vld [vmem:[%s1 + $0x54] sm:$0xf]
    %v48 = vld [vmem:[%s1 + $0x58] sm:$0xf]
    %v49 = vld [vmem:[%s1 + $0x5c] sm:$0xf]
    %v50 = vld [vmem:[%s1 + $0x60] sm:$0xf]
    %v51 = vld [vmem:[%s1 + $0x64] sm:$0xf]
    %v52 = vld [vmem:[%s1 + $0x68] sm:$0xf]
    %v53 = vld [vmem:[%s1 + $0x6c] sm:$0xf]
    %v54 = vld [vmem:[%s1 + $0x70] sm:$0xf]
    %v55 = vld [vmem:[%s1 + $0x74] sm:$0xf]
    %v56 = vld [vmem:[%s1 + $0x78] sm:$0xf]
    %v57 = vld [vmem:[%s1 + $0x7c] sm:$0xf]
    %v58 = vld [vmem:[%s1 + $0x80] sm:$0xf]
    %v59 = vld [vmem:[%s1 + $0x84] sm:$0xf]
    %v60 = vld [vmem:[%s1 + $0x88] sm:$0xf]
    %v61 = vld [vmem:[%s1 + $0x8c] sm:$0xf]
    %v62 = vld [vmem:[%s1 + $0x90] sm:$0xf]
    %v63 = vld [vmem:[%s1 + $0x94] sm:$0xf]
    %v64 = vld [vmem:[%s1 + $0x98] sm:$0xf]
    %v65 = vld [vmem:[%s1 + $0x9c] sm:$0xf]
    %v66 = vld [vmem:[%s1 + $0xa0] sm:$0xf]
    %v67 = vld [vmem:[%s1 + $0xa4] sm:$0xf]
    %v68 = vld [vmem:[%s1 + $0xa8] sm:$0xf]
    %v69 = vld [vmem:[%s1 + $0xac] sm:$0xf]
    %v70 = vld [vmem:[%s1 + $0xb0] sm:$0xf]
    %v71 = vld [vmem:[%s1 + $0xb4] sm:$0xf]
    %v72 = vld [vmem:[%s1 + $0xb8] sm:$0xf]
    %v73 = vld [vmem:[%s1 + $0xbc] sm:$0xf]
    %v74 = vld [vmem:[%s1 + $0xc0] sm:$0xf]
    %v75 = vld [vmem:[%s1 + $0xc4] sm:$0xf]
    %v76 = vld [vmem:[%s1 + $0xc8] sm:$0xf]
    %v77 = vld [vmem:[%s1 + $0xcc] sm:$0xf]
    %v78 = vld [vmem:[%s1 + $0xd0] sm:$0xf]
    %v79 = vld [vmem:[%s1 + $0xd4] sm:$0xf]
    %v80 = vld [vmem:[%s1 + $0xd8] sm:$0xf]
    %v81 = vld [vmem:[%s1 + $0xdc] sm:$0xf]
    %v82 = vld [vmem:[%s1 + $0xe0] sm:$0xf]
    %v83 = vld [vmem:[%s1 + $0xe4] sm:$0xf]
    %v84 = vld [vmem:[%s1 + $0xe8] sm:$0xf]
    %v85 = vld [vmem:[%s1 + $0xec] sm:$0xf]
    %v86 = vld [vmem:[%s1 + $0xf0] sm:$0xf]
    %v87 = vld [vmem:[%s1 + $0xf4] sm:$0xf]
    %v88 = vld [vmem:[%s1 + $0xf8] sm:$0xf]
    %v89 = vld [vmem:[%s1 + $0xfc] sm:$0xf]
    %v90 = vld [vmem:[%s1 + $0x100] sm:$0xf]
    %v91 = vld [vmem:[%s1 + $0x104] sm:$0xf]
    %v92 = vld [vmem:[%s1 + $0x108] sm:$0xf]
    %v93 = vld [vmem:[%s1 + $0x10c] sm:$0xf]
    %v94 = vld [vmem:[%s1 + $0x110] sm:$0xf]
    %v95 = vld [vmem:[%s1 + $0x114] sm:$0xf]
    %v96 = vld [vmem:[%s1 + $0x118] sm:$0xf]
    %v97 = vld [vmem:[%s1 + $0x11c] sm:$0xf]
    %v98 = vld [vmem:[%s1 + $0x120] sm:$0xf]
    %v99 = vld [vmem:[%s1 + $0x124] sm:$0xf]
    %v100 = vld [vmem:[%s1 + $0x128] sm:$0xf]
    %v101 = vld [vmem:[%s1 + $0x12c] sm:$0xf]
    %v102 = vld [vmem:[%s1 + $0x130] sm:$0xf]
    %v103 = vld [vmem:[%s1 + $0x134] sm:$0xf]
    %v104 = vld [vmem:[%s1 + $0x138] sm:$0xf]
    %v105 = vld [vmem:[%s1 + $0x13c] sm:$0xf]
    %v106 = vld [vmem:[%s1 + $0x140] sm:$0xf]
    %v107 = vld [vmem:[%s1 + $0x144] sm:$0xf]
    %v108 = vld [vmem:[%s1 + $0x148] sm:$0xf]
    %v109 = vld [vmem:[%s1 + $0x14c] sm:$0xf]
    %v110 = vld [vmem:[%s1 + $0x150] sm:$0xf]
    %v111 = vld [vmem:[%s1 + $0x154] sm:$0xf]
    %v112 = vld [vmem:[%s1 + $0x158] sm:$0xf]
    %v113 = vld [vmem:[%s1 + $0x15c] sm:$0xf]
    %v114 = vld [vmem:[%s1 + $0x160] sm:$0xf]
    %v115 = vld [vmem:[%s1 + $0x164] sm:$0xf]
    %v116 = vld [vmem:[%s1 + $0x168] sm:$0xf]
    %v117 = vld [vmem:[%s1 + $0x16c] sm:$0xf]
    %v118 = vld [vmem:[%s1 + $0x170] sm:$0xf]
    %v119 = vld [vmem:[%s1 + $0x174] sm:$0xf]
    %v120 = vld [vmem:[%s1 + $0x178] sm:$0xf]
    %v121 = vld [vmem:[%s1 + $0x17c] sm:$0xf]
    %v122 = vld [vmem:[%s1 + $0x180] sm:$0xf]
    %v123 = vld [vmem:[%s1 + $0x184] sm:$0xf]
    %v124 = vld [vmem:[%s1 + $0x188] sm:$0xf]
    %v125 = vld [vmem:[%s1 + $0x18c] sm:$0xf]
    %v126 = vld [vmem:[%s1 + $0x190] sm:$0xf]
    %v127 = vld [vmem:[%s1 + $0x194] sm:$0xf]
    %v128 = vld [vmem:[%s1 + $0x198] sm:$0xf]
    %v129 = vld [vmem:[%s1 + $0x19c] sm:$0xf]
    %v130 = vld [vmem:[%s1 + $0x1a0] sm:$0xf]
    %v131 = vld [vmem:[%s1 + $0x1a4] sm:$0xf]
    %v132 = vld [vmem:[%s1 + $0x1a8] sm:$0xf]
    %v133 = vld [vmem:[%s1 + $0x1ac] sm:$0xf]
    %v134 = vld [vmem:[%s1 + $0x1b0] sm:$0xf]
    %v135 = vld [vmem:[%s1 + $0x1b4] sm:$0xf]
    %v136 = vld [vmem:[%s1 + $0x1b8] sm:$0xf]
    %v137 = vld [vmem:[%s1 + $0x1bc] sm:$0xf]
    %v138 = vld [vmem:[%s1 + $0x1c0] sm:$0xf]
    %v139 = vld [vmem:[%s1 + $0x1c4] sm:$0xf]
    %v140 = vld [vmem:[%s1 + $0x1c8] sm:$0xf]
    %v141 = vld [vmem:[%s1 + $0x1cc] sm:$0xf]
    %v142 = vld [vmem:[%s1 + $0x1d0] sm:$0xf]
    %v143 = vld [vmem:[%s1 + $0x1d4] sm:$0xf]
    %v144 = vld [vmem:[%s1 + $0x1d8] sm:$0xf]
    %v145 = vld [vmem:[%s1 + $0x1dc] sm:$0xf]
    %v146 = vld [vmem:[%s1 + $0x1e0] sm:$0xf]
    %v147 = vld [vmem:[%s1 + $0x1e4] sm:$0xf]
    %v148 = vld [vmem:[%s1 + $0x1e8] sm:$0xf]
    %v149 = vld [vmem:[%s1 + $0x1ec] sm:$0xf]
    %v150 = vld [vmem:[%s1 + $0x1f0] sm:$0xf]
    %v151 = vld [vmem:[%s1 + $0x1f4] sm:$0xf]
    %v152 = vld [vmem:[%s1 + $0x1f8] sm:$0xf]
    %v153 = vld [vmem:[%s1 + $0x1fc] sm:$0xf]
    %v154 = vld [vmem:[%s1 + $0x200] sm:$0xf]
    %v155 = vld [vmem:[%s1 + $0x204] sm:$0xf]
    %v156 = vld [vmem:[%s1 + $0x208] sm:$0xf]
    %v157 = vld [vmem:[%s1 + $0x20c] sm:$0xf]
    %v158 = vld [vmem:[%s1 + $0x210] sm:$0xf]
    %v159 = vld [vmem:[%s1 + $0x214] sm:$0xf]
    %v160 = vld [vmem:[%s1 + $0x218] sm:$0xf]
    %v161 = vld [vmem:[%s1 + $0x21c] sm:$0xf]
    %v162 = vld [vmem:[%s1 + $0x220] sm:$0xf]
    %v163 = vld [vmem:[%s1 + $0x224] sm:$0xf]
    %v164 = vld [vmem:[%s1 + $0x228] sm:$0xf]
    %v165 = vld [vmem:[%s1 + $0x22c] sm:$0xf]
    %v166 = vld [vmem:[%s1 + $0x230] sm:$0xf]
    %v167 = vld [vmem:[%s1 + $0x234] sm:$0xf]
    %v168 = vld [vmem:[%s1 + $0x238] sm:$0xf]
    %v169 = vld [vmem:[%s1 + $0x23c] sm:$0xf]
    %v170 = vld [vmem:[%s1 + $0x240] sm:$0xf]
    %v171 = vld [vmem:[%s1 + $0x244] sm:$0xf]
    %v172 = vld [vmem:[%s1 + $0x248] sm:$0xf]
    %v173 = vld [vmem:[%s1 + $0x24c] sm:$0xf]
    %v174 = vld [vmem:[%s1 + $0x250] sm:$0xf]
    %v175 = vld [vmem:[%s1 + $0x254] sm:$0xf]
    %v176 = vld [vmem:[%s1 + $0x258] sm:$0xf]
    %v177 = vld [vmem:[%s1 + $0x25c] sm:$0xf]
    %v178 = vld [vmem:[%s1 + $0x260] sm:$0xf]
    %v179 = vld [vmem:[%s1 + $0x264] sm:$0xf]
    %v180 = vld [vmem:[%s1 + $0x268] sm:$0xf]
    %v181 = vld [vmem:[%s1 + $0x26c] sm:$0xf]
    %v182 = vld [vmem:[%s1 + $0x270] sm:$0xf]
    %v183 = vld [vmem:[%s1 + $0x274] sm:$0xf]
    %v184 = vld [vmem:[%s1 + $0x278] sm:$0xf]
    %v185 = vld [vmem:[%s1 + $0x27c] sm:$0xf]
    %v186 = vld [vmem:[%s1 + $0x280] sm:$0xf]
    %v187 = vld [vmem:[%s1 + $0x284] sm:$0xf]
    %v188 = vld [vmem:[%s1 + $0x288] sm:$0xf]
    %v189 = vld [vmem:[%s1 + $0x28c] sm:$0xf]
    %v190 = vld [vmem:[%s1 + $0x290] sm:$0xf]
    %v191 = vld [vmem:[%s1 + $0x294] sm:$0xf]
    %v192 = vld [vmem:[%s1 + $0x298] sm:$0xf]
    %v193 = vld [vmem:[%s1 + $0x29c] sm:$0xf]
    %v194 = vld [vmem:[%s1 + $0x2a0] sm:$0xf]
    %v195 = vld [vmem:[%s1 + $0x2a4] sm:$0xf]
    %v196 = vld [vmem:[%s1 + $0x2a8] sm:$0xf]
    %v197 = vld [vmem:[%s1 + $0x2ac] sm:$0xf]
    %v198 = vld [vmem:[%s1 + $0x2b0] sm:$0xf]
    %v199 = vld [vmem:[%s1 + $0x2b4] sm:$0xf]
    %v200 = vld [vmem:[%s1 + $0x2b8] sm:$0xf]
    %v201 = vld [vmem:[%s1 + $0x2bc] sm:$0xf]
    %v202 = vld [vmem:[%s1 + $0x2c0] sm:$0xf]
    %v203 = vld [vmem:[%s1 + $0x2c4] sm:$0xf]
    %v204 = vld [vmem:[%s1 + $0x2c8] sm:$0xf]
    %v205 = vld [vmem:[%s1 + $0x2cc] sm:$0xf]
    %v206 = vld [vmem:[%s1 + $0x2d0] sm:$0xf]
    %v207 = vld [vmem:[%s1 + $0x2d4] sm:$0xf]
    %v208 = vld [vmem:[%s1 + $0x2d8] sm:$0xf]
    %v209 = vld [vmem:[%s1 + $0x2dc] sm:$0xf]
    %v210 = vld [vmem:[%s1 + $0x2e0] sm:$0xf]
    %v211 = vld [vmem:[%s1 + $0x2e4] sm:$0xf]
    %v212 = vld [vmem:[%s1 + $0x2e8] sm:$0xf]
    %v213 = vld [vmem:[%s1 + $0x2ec] sm:$0xf]
    %v214 = vld [vmem:[%s1 + $0x2f0] sm:$0xf]
    %v215 = vld [vmem:[%s1 + $0x2f4] sm:$0xf]
    %v216 = vld [vmem:[%s1 + $0x2f8] sm:$0xf]
    %v217 = vld [vmem:[%s1 + $0x2fc] sm:$0xf]
    %v218 = vld [vmem:[%s1 + $0x300] sm:$0xf]
    %v219 = vld [vmem:[%s1 + $0x304] sm:$0xf]
    %v220 = vld [vmem:[%s1 + $0x308] sm:$0xf]
    %v221 = vld [vmem:[%s1 + $0x30c] sm:$0xf]
    %v222 = vld [vmem:[%s1 + $0x310] sm:$0xf]
    %v223 = vld [vmem:[%s1 + $0x314] sm:$0xf]
    %v224 = vld [vmem:[%s1 + $0x318] sm:$0xf]
    %v225 = vld [vmem:[%s1 + $0x31c] sm:$0xf]
    %v226 = vld [vmem:[%s1 + $0x320] sm:$0xf]
    %v227 = vld [vmem:[%s1 + $0x324] sm:$0xf]
    %v228 = vld [vmem:[%s1 + $0x328] sm:$0xf]
    %v229 = vld [vmem:[%s1 + $0x32c] sm:$0xf]
    %v230 = vld [vmem:[%s1 + $0x330] sm:$0xf]
    %v231 = vld [vmem:[%s1 + $0x334] sm:$0xf]
    %v232 = vld [vmem:[%s1 + $0x338] sm:$0xf]
    %v233 = vld [vmem:[%s1 + $0x33c] sm:$0xf]
    %v234 = vld [vmem:[%s1 + $0x340] sm:$0xf]
    %v235 = vld [vmem:[%s1 + $0x344] sm:$0xf]
    %v236 = vld [vmem:[%s1 + $0x348] sm:$0xf]
    %v237 = vld [vmem:[%s1 + $0x34c] sm:$0xf]
    %v238 = vld [vmem:[%s1 + $0x350] sm:$0xf]
    %v239 = vld [vmem:[%s1 + $0x354] sm:$0xf]
    %v240 = vld [vmem:[%s1 + $0x358] sm:$0xf]
    %v241 = vld [vmem:[%s1 + $0x35c] sm:$0xf]
    %v242 = vld [vmem:[%s1 + $0x360] sm:$0xf]
    %v243 = vld [vmem:[%s1 + $0x364] sm:$0xf]
    %v244 = vld [vmem:[%s1 + $0x368] sm:$0xf]
    %v245 = vld [vmem:[%s1 + $0x36c] sm:$0xf]
    %v246 = vld [vmem:[%s1 + $0x370] sm:$0xf]
    %v247 = vld [vmem:[%s1 + $0x374] sm:$0xf]
    %v248 = vld [vmem:[%s1 + $0x378] sm:$0xf]
    %v249 = vld [vmem:[%s1 + $0x37c] sm:$0xf]
    %v250 = vld [vmem:[%s1 + $0x380] sm:$0xf]
    %v251 = vld [vmem:[%s1 + $0x384] sm:$0xf]
    %v252 = vld [vmem:[%s1 + $0x388] sm:$0xf]
    %v253 = vld [vmem:[%s1 + $0x38c] sm:$0xf]
    %v254 = vld [vmem:[%s1 + $0x390] sm:$0xf]
    %v255 = vld [vmem:[%s1 + $0x394] sm:$0xf]
    %v256 = vld [vmem:[%s1 + $0x398] sm:$0xf]
    %v257 = vld [vmem:[%s1 + $0x39c] sm:$0xf]
    %v258 = vld [vmem:[%s1 + $0x3a0] sm:$0xf]
    %v259 = vld [vmem:[%s1 + $0x3a4] sm:$0xf]
    %v260 = vld [vmem:[%s1 + $0x3a8] sm:$0xf]
    %v261 = vld [vmem:[%s1 + $0x3ac] sm:$0xf]
    %v262 = vld [vmem:[%s1 + $0x3b0] sm:$0xf]
    %v263 = vld [vmem:[%s1 + $0x3b4] sm:$0xf]
    %v264 = vld [vmem:[%s1 + $0x3b8] sm:$0xf]
    %v265 = vld [vmem:[%s1 + $0x3bc] sm:$0xf]
    %v266 = vld [vmem:[%s1 + $0x3c0] sm:$0xf]
    %v267 = vld [vmem:[%s1 + $0x3c4] sm:$0xf]
    %v268 = vld [vmem:[%s1 + $0x3c8] sm:$0xf]
    %v269 = vld [vmem:[%s1 + $0x3cc] sm:$0xf]
    %v270 = vld [vmem:[%s1 + $0x3d0] sm:$0xf]
    %v271 = vld [vmem:[%s1 + $0x3d4] sm:$0xf]
    %v272 = vld [vmem:[%s1 + $0x3d8] sm:$0xf]
    %v273 = vld [vmem:[%s1 + $0x3dc] sm:$0xf]
    %v274 = vld [vmem:[%s1 + $0x3e0] sm:$0xf]
    %v275 = vld [vmem:[%s1 + $0x3e4] sm:$0xf]
    %v276 = vld [vmem:[%s1 + $0x3e8] sm:$0xf]
    %v277 = vld [vmem:[%s1 + $0x3ec] sm:$0xf]
    %v278 = vld [vmem:[%s1 + $0x3f0] sm:$0xf]
    %v279 = vld [vmem:[%s1 + $0x3f4] sm:$0xf]
    %v280 = vld [vmem:[%s1 + $0x3f8] sm:$0xf]
    %v281 = vld [vmem:[%s1 + $0x3fc] sm:$0xf]
    %v282 = vld [vmem:[%s1 + $0x400] sm:$0xf]
    %v283 = vld [vmem:[%s1 + $0x404] sm:$0xf]
    %v284 = vld [vmem:[%s1 + $0x408] sm:$0xf]
    %v285 = vld [vmem:[%s1 + $0x40c] sm:$0xf]
    %v286 = vld [vmem:[%s1 + $0x410] sm:$0xf]
    %v287 = vld [vmem:[%s1 + $0x414] sm:$0xf]
    %v288 = vld [vmem:[%s1 + $0x418] sm:$0xf]
    %v289 = vld [vmem:[%s1 + $0x41c] sm:$0xf]
    %v290 = vld [vmem:[%s1 + $0x420] sm:$0xf]
    %v291 = vld [vmem:[%s1 + $0x424] sm:$0xf]
    %v292 = vld [vmem:[%s1 + $0x428] sm:$0xf]
    %v293 = vld [vmem:[%s1 + $0x42c] sm:$0xf]
    %v294 = vld [vmem:[%s1 + $0x430] sm:$0xf]
    %v295 = vld [vmem:[%s1 + $0x434] sm:$0xf]
    %v296 = vld [vmem:[%s1 + $0x438] sm:$0xf]
    %v297 = vld [vmem:[%s1 + $0x43c] sm:$0xf]
    %v298 = vld [vmem:[%s1 + $0x440] sm:$0xf]
    %v299 = vld [vmem:[%s1 + $0x444] sm:$0xf]
    %v300 = vld [vmem:[%s1 + $0x448] sm:$0xf]
    %v301 = vld [vmem:[%s1 + $0x44c] sm:$0xf]
    %v302 = vld [vmem:[%s1 + $0x450] sm:$0xf]
    %v303 = vld [vmem:[%s1 + $0x454] sm:$0xf]
    %v304 = vld [vmem:[%s1 + $0x458] sm:$0xf]
    %v305 = vld [vmem:[%s1 + $0x45c] sm:$0xf]
    %v306 = vld [vmem:[%s1 + $0x460] sm:$0xf]
    %v307 = vld [vmem:[%s1 + $0x464] sm:$0xf]
    %v308 = vld [vmem:[%s1 + $0x468] sm:$0xf]
    %v309 = vld [vmem:[%s1 + $0x46c] sm:$0xf]
    %v310 = vld [vmem:[%s1 + $0x470] sm:$0xf]
    %v311 = vld [vmem:[%s1 + $0x474] sm:$0xf]
    %v312 = vld [vmem:[%s1 + $0x478] sm:$0xf]
    %v313 = vld [vmem:[%s1 + $0x47c] sm:$0xf]
    %v314 = vld [vmem:[%s1 + $0x480] sm:$0xf]
    %v315 = vld [vmem:[%s1 + $0x484] sm:$0xf]
    %v316 = vld [vmem:[%s1 + $0x488] sm:$0xf]
    %v317 = vld [vmem:[%s1 + $0x48c] sm:$0xf]
    %v318 = vld [vmem:[%s1 + $0x490] sm:$0xf]
    %v319 = vld [vmem:[%s1 + $0x494] sm:$0xf]
    %v320 = vld [vmem:[%s1 + $0x498] sm:$0xf]
    %v321 = vld [vmem:[%s1 + $0x49c] sm:$0xf]
    %v322 = vld [vmem:[%s1 + $0x4a0] sm:$0xf]
    %v323 = vld [vmem:[%s1 + $0x4a4] sm:$0xf]
    %v324 = vld [vmem:[%s1 + $0x4a8] sm:$0xf]
    %v325 = vld [vmem:[%s1 + $0x4ac] sm:$0xf]
    %v326 = vld [vmem:[%s1 + $0x4b0] sm:$0xf]
    %v327 = vld [vmem:[%s1 + $0x4b4] sm:$0xf]
    %v328 = vld [vmem:[%s1 + $0x4b8] sm:$0xf]
    %v329 = vld [vmem:[%s1 + $0x4bc] sm:$0xf]
    %v330 = vld [vmem:[%s1 + $0x4c0] sm:$0xf]
    %v331 = vld [vmem:[%s1 + $0x4c4] sm:$0xf]
    %v332 = vld [vmem:[%s1 + $0x4c8] sm:$0xf]
    %v333 = vld [vmem:[%s1 + $0x4cc] sm:$0xf]
    %v334 = vld [vmem:[%s1 + $0x4d0] sm:$0xf]
    %v335 = vld [vmem:[%s1 + $0x4d4] sm:$0xf]
    %v336 = vld [vmem:[%s1 + $0x4d8] sm:$0xf]
    %v337 = vld [vmem:[%s1 + $0x4dc] sm:$0xf]
    %v338 = vld [vmem:[%s1 + $0x4e0] sm:$0xf]
    %v339 = vld [vmem:[%s1 + $0x4e4] sm:$0xf]
    %v340 = vld [vmem:[%s1 + $0x4e8] sm:$0xf]
    %v341 = vld [vmem:[%s1 + $0x4ec] sm:$0xf]
    %v342 = vld [vmem:[%s1 + $0x4f0] sm:$0xf]
    %v343 = vld [vmem:[%s1 + $0x4f4] sm:$0xf]
    %v344 = vld [vmem:[%s1 + $0x4f8] sm:$0xf]
    %v345 = vld [vmem:[%s1 + $0x4fc] sm:$0xf]
    %v346 = vld [vmem:[%s1 + $0x500] sm:$0xf]
    %v347 = vld [vmem:[%s1 + $0x504] sm:$0xf]
    %v348 = vld [vmem:[%s1 + $0x508] sm:$0xf]
    %v349 = vld [vmem:[%s1 + $0x50c] sm:$0xf]
    %v350 = vld [vmem:[%s1 + $0x510] sm:$0xf]
    %v351 = vld [vmem:[%s1 + $0x514] sm:$0xf]
    %v352 = vld [vmem:[%s1 + $0x518] sm:$0xf]
    %v353 = vld [vmem:[%s1 + $0x51c] sm:$0xf]
    %v354 = vld [vmem:[%s1 + $0x520] sm:$0xf]
    %v355 = vld [vmem:[%s1 + $0x524] sm:$0xf]
    %v356 = vld [vmem:[%s1 + $0x528] sm:$0xf]
    %v357 = vld [vmem:[%s1 + $0x52c] sm:$0xf]
    %v358 = vld [vmem:[%s1 + $0x530] sm:$0xf]
    %v359 = vld [vmem:[%s1 + $0x534] sm:$0xf]
    %v360 = vld [vmem:[%s1 + $0x538] sm:$0xf]
    %v361 = vld [vmem:[%s1 + $0x53c] sm:$0xf]
    %v362 = vld [vmem:[%s1 + $0x540] sm:$0xf]
    %v363 = vld [vmem:[%s1 + $0x544] sm:$0xf]
    %v364 = vld [vmem:[%s1 + $0x548] sm:$0xf]
    %v365 = vld [vmem:[%s1 + $0x54c] sm:$0xf]
    %v366 = vld [vmem:[%s1 + $0x550] sm:$0xf]
    %v367 = vld [vmem:[%s1 + $0x554] sm:$0xf]
    %v368 = vld [vmem:[%s1 + $0x558] sm:$0xf]
    %v369 = vld [vmem:[%s1 + $0x55c] sm:$0xf]
    %v370 = vld [vmem:[%s1 + $0x560] sm:$0xf]
    %v371 = vld [vmem:[%s1 + $0x564] sm:$0xf]
    %v372 = vld [vmem:[%s1 + $0x568] sm:$0xf]
    %v373 = vld [vmem:[%s1 + $0x56c] sm:$0xf]
    %v374 = vld [vmem:[%s1 + $0x570] sm:$0xf]
    %v375 = vld [vmem:[%s1 + $0x574] sm:$0xf]
    %v376 = vld [vmem:[%s1 + $0x578] sm:$0xf]
    %v377 = vld [vmem:[%s1 + $0x57c] sm:$0xf]
    %v378 = vld [vmem:[%s1 + $0x580] sm:$0xf]
    %v379 = vld [vmem:[%s1 + $0x584] sm:$0xf]
    %v380 = vld [vmem:[%s1 + $0x588] sm:$0xf]
    %v381 = vld [vmem:[%s1 + $0x58c] sm:$0xf]
    %v382 = vld [vmem:[%s1 + $0x590] sm:$0xf]
    %v383 = vld [vmem:[%s1 + $0x594] sm:$0xf]
    %v384 = vld [vmem:[%s1 + $0x598] sm:$0xf]
    %v385 = vld [vmem:[%s1 + $0x59c] sm:$0xf]
    %v386 = vld [vmem:[%s1 + $0x5a0] sm:$0xf]
    %v387 = vld [vmem:[%s1 + $0x5a4] sm:$0xf]
    %v388 = vld [vmem:[%s1 + $0x5a8] sm:$0xf]
    %v389 = vld [vmem:[%s1 + $0x5ac] sm:$0xf]
    %v390 = vld [vmem:[%s1 + $0x5b0] sm:$0xf]
    %v391 = vld [vmem:[%s1 + $0x5b4] sm:$0xf]
    %v392 = vld [vmem:[%s1 + $0x5b8] sm:$0xf]
    %v393 = vld [vmem:[%s1 + $0x5bc] sm:$0xf]
    %v394 = vld [vmem:[%s1 + $0x5c0] sm:$0xf]
    %v395 = vld [vmem:[%s1 + $0x5c4] sm:$0xf]
    %v396 = vld [vmem:[%s1 + $0x5c8] sm:$0xf]
    %v397 = vld [vmem:[%s1 + $0x5cc] sm:$0xf]
    %v398 = vld [vmem:[%s1 + $0x5d0] sm:$0xf]
    %v399 = vld [vmem:[%s1 + $0x5d4] sm:$0xf]
    %v400 = vld [vmem:[%s1 + $0x5d8] sm:$0xf]
    %v401 = vld [vmem:[%s1 + $0x5dc] sm:$0xf]
    %v402 = vld [vmem:[%s1 + $0x5e0] sm:$0xf]
    %v403 = vld [vmem:[%s1 + $0x5e4] sm:$0xf]
    %v404 = vld [vmem:[%s1 + $0x5e8] sm:$0xf]
    %v405 = vld [vmem:[%s1 + $0x5ec] sm:$0xf]
    %v406 = vld [vmem:[%s1 + $0x5f0] sm:$0xf]
    %v407 = vld [vmem:[%s1 + $0x5f4] sm:$0xf]
    %v408 = vld [vmem:[%s1 + $0x5f8] sm:$0xf]
    %v409 = vld [vmem:[%s1 + $0x5fc] sm:$0xf]
    %v410 = vld [vmem:[%s1 + $0x600] sm:$0xf]
    %v411 = vld [vmem:[%s1 + $0x604] sm:$0xf]
    %v412 = vld [vmem:[%s1 + $0x608] sm:$0xf]
    %v413 = vld [vmem:[%s1 + $0x60c] sm:$0xf]
    %v414 = vld [vmem:[%s1 + $0x610] sm:$0xf]
    %v415 = vld [vmem:[%s1 + $0x614] sm:$0xf]
    %v416 = vld [vmem:[%s1 + $0x618] sm:$0xf]
    %v417 = vld [vmem:[%s1 + $0x61c] sm:$0xf]
    %v418 = vld [vmem:[%s2] sm:$0x1]
    %v420 = vlaneseq
    %v421 = vshrl.u32 %v420, 7
    %v422 = vsub.s32 0, %v421
    %v423 = vrot.slane %v418, %v422
    %v429 = vcombine.high %v22, %v22
    %v431 = vunpack.c.l.s4 1966171168
    %v432 = vunpack.c.0.s8 %v431
    %v433 = vlaneseq
    %v434 = vshrl.u32 %v433, 7
    %v435 = vsub.s32 %v432, %v434
    %v436 = vrot.slane %v22, %v435
    %v438 = vunpack.c.l.s4 1966171168
    %v439 = vunpack.c.0.s8 %v438
    %v440 = vlaneseq
    %v441 = vshrl.u32 %v440, 7
    %v442 = vsub.s32 %v439, %v441
    %v443 = vrot.slane %v429, %v442
    %v444 = vcombine.high %v436, %v436
    %v445 = vcombine.high %v443, %v443
    %v447 = vunpack.c.l.s4 1966171168
    %v448 = vunpack.c.0.s8 %v447
    %v449 = vlaneseq
    %v450 = vshrl.u32 %v449, 7
    %v451 = vsub.s32 %v448, %v450
    %v452 = vrot.slane %v436, %v451
    %v454 = vunpack.c.l.s4 1966171168
    %v455 = vunpack.c.0.s8 %v454
    %v456 = vlaneseq
    %v457 = vshrl.u32 %v456, 7
    %v458 = vsub.s32 %v455, %v457
    %v459 = vrot.slane %v443, %v458
    %v461 = vunpack.c.l.s4 1966171168
    %v462 = vunpack.c.0.s8 %v461
    %v463 = vlaneseq
    %v464 = vshrl.u32 %v463, 7
    %v465 = vsub.s32 %v462, %v464
    %v466 = vrot.slane %v444, %v465
    %v468 = vunpack.c.l.s4 1966171168
    %v469 = vunpack.c.0.s8 %v468
    %v470 = vlaneseq
    %v471 = vshrl.u32 %v470, 7
    %v472 = vsub.s32 %v469, %v471
    %v473 = vrot.slane %v445, %v472
    %v474 = vcombine.high %v452, %v452
    %v475 = vcombine.high %v459, %v459
    %v476 = vcombine.high %v466, %v466
    %v477 = vcombine.high %v473, %v473
    %v478 = vcombine.high %v23, %v23
    %v480 = vunpack.c.l.s4 1966171168
    %v481 = vunpack.c.0.s8 %v480
    %v482 = vlaneseq
    %v483 = vshrl.u32 %v482, 7
    %v484 = vsub.s32 %v481, %v483
    %v485 = vrot.slane %v23, %v484
    %v487 = vunpack.c.l.s4 1966171168
    %v488 = vunpack.c.0.s8 %v487
    %v489 = vlaneseq
    %v490 = vshrl.u32 %v489, 7
    %v491 = vsub.s32 %v488, %v490
    %v492 = vrot.slane %v478, %v491
    %v493 = vcombine.high %v485, %v485
    %v494 = vcombine.high %v492, %v492
    %v496 = vunpack.c.l.s4 1966171168
    %v497 = vunpack.c.0.s8 %v496
    %v498 = vlaneseq
    %v499 = vshrl.u32 %v498, 7
    %v500 = vsub.s32 %v497, %v499
    %v501 = vrot.slane %v485, %v500
    %v503 = vunpack.c.l.s4 1966171168
    %v504 = vunpack.c.0.s8 %v503
    %v505 = vlaneseq
    %v506 = vshrl.u32 %v505, 7
    %v507 = vsub.s32 %v504, %v506
    %v508 = vrot.slane %v492, %v507
    %v510 = vunpack.c.l.s4 1966171168
    %v511 = vunpack.c.0.s8 %v510
    %v512 = vlaneseq
    %v513 = vshrl.u32 %v512, 7
    %v514 = vsub.s32 %v511, %v513
    %v515 = vrot.slane %v493, %v514
    %v517 = vunpack.c.l.s4 1966171168
    %v518 = vunpack.c.0.s8 %v517
    %v519 = vlaneseq
    %v520 = vshrl.u32 %v519, 7
    %v521 = vsub.s32 %v518, %v520
    %v522 = vrot.slane %v494, %v521
    %v523 = vcombine.high %v501, %v501
    %v524 = vcombine.high %v508, %v508
    %v525 = vcombine.high %v515, %v515
    %v526 = vcombine.high %v522, %v522
    %v527 = vcombine.high %v24, %v24
    %v529 = vunpack.c.l.s4 1966171168
    %v530 = vunpack.c.0.s8 %v529
    %v531 = vlaneseq
    %v532 = vshrl.u32 %v531, 7
    %v533 = vsub.s32 %v530, %v532
    %v534 = vrot.slane %v24, %v533
    %v536 = vunpack.c.l.s4 1966171168
    %v537 = vunpack.c.0.s8 %v536
    %v538 = vlaneseq
    %v539 = vshrl.u32 %v538, 7
    %v540 = vsub.s32 %v537, %v539
    %v541 = vrot.slane %v527, %v540
    %v542 = vcombine.high %v534, %v534
    %v543 = vcombine.high %v541, %v541
    %v545 = vunpack.c.l.s4 1966171168
    %v546 = vunpack.c.0.s8 %v545
    %v547 = vlaneseq
    %v548 = vshrl.u32 %v547, 7
    %v549 = vsub.s32 %v546, %v548
    %v550 = vrot.slane %v534, %v549
    %v552 = vunpack.c.l.s4 1966171168
    %v553 = vunpack.c.0.s8 %v552
    %v554 = vlaneseq
    %v555 = vshrl.u32 %v554, 7
    %v556 = vsub.s32 %v553, %v555
    %v557 = vrot.slane %v541, %v556
    %v559 = vunpack.c.l.s4 1966171168
    %v560 = vunpack.c.0.s8 %v559
    %v561 = vlaneseq
    %v562 = vshrl.u32 %v561, 7
    %v563 = vsub.s32 %v560, %v562
    %v564 = vrot.slane %v542, %v563
    %v566 = vunpack.c.l.s4 1966171168
    %v567 = vunpack.c.0.s8 %v566
    %v568 = vlaneseq
    %v569 = vshrl.u32 %v568, 7
    %v570 = vsub.s32 %v567, %v569
    %v571 = vrot.slane %v543, %v570
    %v572 = vcombine.high %v550, %v550
    %v573 = vcombine.high %v557, %v557
    %v574 = vcombine.high %v564, %v564
    %v575 = vcombine.high %v571, %v571
    %v577 = vunpack.c.l.s4 1966171168
    %v578 = vunpack.c.0.s8 %v577
    %v579 = vlaneseq
    %v580 = vshrl.u32 %v579, 7
    %v581 = vsub.s32 %v578, %v580
    %v582 = vrot.slane %v25, %v581
    %v584 = vunpack.c.l.s4 1966171168
    %v585 = vunpack.c.0.s8 %v584
    %v586 = vlaneseq
    %v587 = vshrl.u32 %v586, 7
    %v588 = vsub.s32 %v585, %v587
    %v589 = vrot.slane %v582, %v588
    %v1006 = vunpack.c.l.b16 %v26
    %v1007 = vunpack.c.l.b16 %v27
    %v1008 = vunpack.c.l.b16 %v28
    %v1009 = vunpack.c.l.b16 %v29
    %v1010 = vunpack.c.l.b16 %v30
    %v1011 = vunpack.c.l.b16 %v31
    %v1012 = vunpack.c.l.b16 %v32
    %v1013 = vunpack.c.l.b16 %v33
    %v1014 = vunpack.c.l.b16 %v34
    %v1015 = vunpack.c.l.b16 %v35
    %v1016 = vunpack.c.l.b16 %v36
    %v1017 = vunpack.c.l.b16 %v37
    %v1018 = vunpack.c.l.b16 %v38
    %v1019 = vunpack.c.l.b16 %v39
    %v1020 = vunpack.c.l.b16 %v40
    %v1021 = vunpack.c.l.b16 %v41
    %v1022 = vunpack.c.l.b16 %v42
    %v1023 = vunpack.c.l.b16 %v43
    %v1024 = vunpack.c.l.b16 %v44
    %v1025 = vunpack.c.l.b16 %v45
    %v1026 = vunpack.c.l.b16 %v46
    %v1027 = vunpack.c.l.b16 %v47
    %v1028 = vunpack.c.l.b16 %v48
    %v1029 = vunpack.c.l.b16 %v49
    %v1030 = vunpack.c.l.b16 %v50
    %v1031 = vunpack.c.l.b16 %v51
    %v1032 = vunpack.c.l.b16 %v52
    %v1033 = vunpack.c.l.b16 %v53
    %v1034 = vunpack.c.l.b16 %v54
    %v1035 = vunpack.c.l.b16 %v55
    %v1036 = vunpack.c.l.b16 %v56
    %v1037 = vunpack.c.l.b16 %v57
    %v1038 = vunpack.c.l.b16 %v58
    %v1039 = vunpack.c.l.b16 %v59
    %v1040 = vunpack.c.l.b16 %v60
    %v1041 = vunpack.c.l.b16 %v61
    %v1042 = vunpack.c.l.b16 %v62
    %v1043 = vunpack.c.l.b16 %v63
    %v1044 = vunpack.c.l.b16 %v64
    %v1045 = vunpack.c.l.b16 %v65
    %v1046 = vunpack.c.l.b16 %v66
    %v1047 = vunpack.c.l.b16 %v67
    %v1048 = vunpack.c.l.b16 %v68
    %v1049 = vunpack.c.l.b16 %v69
    %v1050 = vunpack.c.l.b16 %v70
    %v1051 = vunpack.c.l.b16 %v71
    %v1052 = vunpack.c.l.b16 %v72
    %v1053 = vunpack.c.l.b16 %v73
    %v1054 = vunpack.c.l.b16 %v74
    %v1055 = vunpack.c.l.b16 %v75
    %v1056 = vunpack.c.l.b16 %v76
    %v1057 = vunpack.c.l.b16 %v77
    %v1058 = vunpack.c.l.b16 %v78
    %v1059 = vunpack.c.l.b16 %v79
    %v1060 = vunpack.c.l.b16 %v80
    %v1061 = vunpack.c.l.b16 %v81
    %v1062 = vunpack.c.l.b16 %v82
    %v1063 = vunpack.c.l.b16 %v83
    %v1064 = vunpack.c.l.b16 %v84
    %v1065 = vunpack.c.l.b16 %v85
    %v1066 = vunpack.c.l.b16 %v86
    %v1067 = vunpack.c.l.b16 %v87
    %v1068 = vunpack.c.l.b16 %v88
    %v1069 = vunpack.c.l.b16 %v89
    %v1070 = vunpack.c.l.b16 %v90
    %v1071 = vunpack.c.l.b16 %v91
    %v1072 = vunpack.c.l.b16 %v92
    %v1073 = vunpack.c.l.b16 %v93
    %v1074 = vunpack.c.l.b16 %v94
    %v1075 = vunpack.c.l.b16 %v95
    %v1076 = vunpack.c.l.b16 %v96
    %v1077 = vunpack.c.l.b16 %v97
    %v1078 = vunpack.c.l.b16 %v98
    %v1079 = vunpack.c.l.b16 %v99
    %v1080 = vunpack.c.l.b16 %v100
    %v1081 = vunpack.c.l.b16 %v101
    %v1082 = vunpack.c.l.b16 %v102
    %v1083 = vunpack.c.l.b16 %v103
    %v1084 = vunpack.c.l.b16 %v104
    %v1085 = vunpack.c.l.b16 %v105
    %v1086 = vunpack.c.l.b16 %v106
    %v1087 = vunpack.c.l.b16 %v107
    %v1088 = vunpack.c.l.b16 %v108
    %v1089 = vunpack.c.l.b16 %v109
    %v1090 = vunpack.c.l.b16 %v110
    %v1091 = vunpack.c.l.b16 %v111
    %v1092 = vunpack.c.l.b16 %v112
    %v1093 = vunpack.c.l.b16 %v113
    %v1094 = vunpack.c.l.b16 %v114
    %v1095 = vunpack.c.l.b16 %v115
    %v1096 = vunpack.c.l.b16 %v116
    %v1097 = vunpack.c.l.b16 %v117
    %v1098 = vunpack.c.l.b16 %v118
    %v1099 = vunpack.c.l.b16 %v119
    %v1100 = vunpack.c.l.b16 %v120
    %v1101 = vunpack.c.l.b16 %v121
    %v1102 = vunpack.c.l.b16 %v122
    %v1103 = vunpack.c.l.b16 %v123
    %v1104 = vunpack.c.l.b16 %v124
    %v1105 = vunpack.c.l.b16 %v125
    %v1106 = vunpack.c.l.b16 %v126
    %v1107 = vunpack.c.l.b16 %v127
    %v1108 = vunpack.c.l.b16 %v128
    %v1109 = vunpack.c.l.b16 %v129
    %v1110 = vunpack.c.l.b16 %v130
    %v1111 = vunpack.c.l.b16 %v131
    %v1112 = vunpack.c.l.b16 %v132
    %v1113 = vunpack.c.l.b16 %v133
    %v1114 = vunpack.c.l.b16 %v134
    %v1115 = vunpack.c.l.b16 %v135
    %v1116 = vunpack.c.l.b16 %v136
    %v1117 = vunpack.c.l.b16 %v137
    %v1118 = vunpack.c.l.b16 %v138
    %v1119 = vunpack.c.l.b16 %v139
    %v1120 = vunpack.c.l.b16 %v140
    %v1121 = vunpack.c.l.b16 %v141
    %v1122 = vunpack.c.l.b16 %v142
    %v1123 = vunpack.c.l.b16 %v143
    %v1124 = vunpack.c.l.b16 %v144
    %v1125 = vunpack.c.l.b16 %v145
    %v1126 = vunpack.c.l.b16 %v146
    %v1127 = vunpack.c.l.b16 %v147
    %v1128 = vunpack.c.l.b16 %v148
    %v1129 = vunpack.c.l.b16 %v149
    %v1130 = vunpack.c.l.b16 %v150
    %v1131 = vunpack.c.l.b16 %v151
    %v1132 = vunpack.c.l.b16 %v152
    %v1133 = vunpack.c.l.b16 %v153
    %v1134 = vunpack.c.l.b16 %v154
    %v1135 = vunpack.c.l.b16 %v155
    %v1136 = vunpack.c.l.b16 %v156
    %v1137 = vunpack.c.l.b16 %v157
    %v1138 = vunpack.c.l.b16 %v158
    %v1139 = vunpack.c.l.b16 %v159
    %v1140 = vunpack.c.l.b16 %v160
    %v1141 = vunpack.c.l.b16 %v161
    %v1142 = vunpack.c.l.b16 %v162
    %v1143 = vunpack.c.l.b16 %v163
    %v1144 = vunpack.c.l.b16 %v164
    %v1145 = vunpack.c.l.b16 %v165
    %v1146 = vunpack.c.l.b16 %v166
    %v1147 = vunpack.c.l.b16 %v167
    %v1148 = vunpack.c.l.b16 %v168
    %v1149 = vunpack.c.l.b16 %v169
    %v1150 = vunpack.c.l.b16 %v170
    %v1151 = vunpack.c.l.b16 %v171
    %v1152 = vunpack.c.l.b16 %v172
    %v1153 = vunpack.c.l.b16 %v173
    %v1154 = vunpack.c.l.b16 %v174
    %v1155 = vunpack.c.l.b16 %v175
    %v1156 = vunpack.c.l.b16 %v176
    %v1157 = vunpack.c.l.b16 %v177
    %v1158 = vunpack.c.l.b16 %v178
    %v1159 = vunpack.c.l.b16 %v179
    %v1160 = vunpack.c.l.b16 %v180
    %v1161 = vunpack.c.l.b16 %v181
    %v1162 = vunpack.c.l.b16 %v182
    %v1163 = vunpack.c.l.b16 %v183
    %v1164 = vunpack.c.l.b16 %v184
    %v1165 = vunpack.c.l.b16 %v185
    %v1166 = vunpack.c.l.b16 %v186
    %v1167 = vunpack.c.l.b16 %v187
    %v1168 = vunpack.c.l.b16 %v188
    %v1169 = vunpack.c.l.b16 %v189
    %v1170 = vunpack.c.l.b16 %v190
    %v1171 = vunpack.c.l.b16 %v191
    %v1172 = vunpack.c.l.b16 %v192
    %v1173 = vunpack.c.l.b16 %v193
    %v1174 = vunpack.c.l.b16 %v194
    %v1175 = vunpack.c.l.b16 %v195
    %v1176 = vunpack.c.l.b16 %v196
    %v1177 = vunpack.c.l.b16 %v197
    %v1178 = vunpack.c.l.b16 %v198
    %v1179 = vunpack.c.l.b16 %v199
    %v1180 = vunpack.c.l.b16 %v200
    %v1181 = vunpack.c.l.b16 %v201
    %v1182 = vunpack.c.l.b16 %v202
    %v1183 = vunpack.c.l.b16 %v203
    %v1184 = vunpack.c.l.b16 %v204
    %v1185 = vunpack.c.l.b16 %v205
    %v1186 = vunpack.c.l.b16 %v206
    %v1187 = vunpack.c.l.b16 %v207
    %v1188 = vunpack.c.l.b16 %v208
    %v1189 = vunpack.c.l.b16 %v209
    %v1190 = vunpack.c.l.b16 %v210
    %v1191 = vunpack.c.l.b16 %v211
    %v1192 = vunpack.c.l.b16 %v212
    %v1193 = vunpack.c.l.b16 %v213
    %v1194 = vunpack.c.l.b16 %v214
    %v1195 = vunpack.c.l.b16 %v215
    %v1196 = vunpack.c.l.b16 %v216
    %v1197 = vunpack.c.l.b16 %v217
    %v1198 = vunpack.c.l.b16 %v218
    %v1199 = vunpack.c.l.b16 %v219
    %v1200 = vunpack.c.l.b16 %v220
    %v1201 = vunpack.c.l.b16 %v221
    %v1202 = vunpack.c.l.b16 %v222
    %v1203 = vunpack.c.l.b16 %v223
    %v1204 = vunpack.c.l.b16 %v224
    %v1205 = vunpack.c.l.b16 %v225
    %v1206 = vunpack.c.l.b16 %v226
    %v1207 = vunpack.c.l.b16 %v227
    %v1208 = vunpack.c.l.b16 %v228
    %v1209 = vunpack.c.l.b16 %v229
    %v1210 = vunpack.c.l.b16 %v230
    %v1211 = vunpack.c.l.b16 %v231
    %v1212 = vunpack.c.l.b16 %v232
    %v1213 = vunpack.c.l.b16 %v233
    %v1214 = vunpack.c.l.b16 %v234
    %v1215 = vunpack.c.l.b16 %v235
    %v1216 = vunpack.c.l.b16 %v236
    %v1217 = vunpack.c.l.b16 %v237
    %v1218 = vunpack.c.l.b16 %v238
    %v1219 = vunpack.c.l.b16 %v239
    %v1220 = vunpack.c.l.b16 %v240
    %v1221 = vunpack.c.l.b16 %v241
    %v1222 = vunpack.c.l.b16 %v242
    %v1223 = vunpack.c.l.b16 %v243
    %v1224 = vunpack.c.l.b16 %v244
    %v1225 = vunpack.c.l.b16 %v245
    %v1226 = vunpack.c.l.b16 %v246
    %v1227 = vunpack.c.l.b16 %v247
    %v1228 = vunpack.c.l.b16 %v248
    %v1229 = vunpack.c.l.b16 %v249
    %v1230 = vunpack.c.l.b16 %v250
    %v1231 = vunpack.c.l.b16 %v251
    %v1232 = vunpack.c.l.b16 %v252
    %v1233 = vunpack.c.l.b16 %v253
    %v1234 = vunpack.c.l.b16 %v254
    %v1235 = vunpack.c.l.b16 %v255
    %v1236 = vunpack.c.l.b16 %v256
    %v1237 = vunpack.c.l.b16 %v257
    %v1238 = vunpack.c.l.b16 %v258
    %v1239 = vunpack.c.l.b16 %v259
    %v1240 = vunpack.c.l.b16 %v260
    %v1241 = vunpack.c.l.b16 %v261
    %v1242 = vunpack.c.l.b16 %v262
    %v1243 = vunpack.c.l.b16 %v263
    %v1244 = vunpack.c.l.b16 %v264
    %v1245 = vunpack.c.l.b16 %v265
    %v1246 = vunpack.c.l.b16 %v266
    %v1247 = vunpack.c.l.b16 %v267
    %v1248 = vunpack.c.l.b16 %v268
    %v1249 = vunpack.c.l.b16 %v269
    %v1250 = vunpack.c.l.b16 %v270
    %v1251 = vunpack.c.l.b16 %v271
    %v1252 = vunpack.c.l.b16 %v272
    %v1253 = vunpack.c.l.b16 %v273
    %v1254 = vunpack.c.l.b16 %v274
    %v1255 = vunpack.c.l.b16 %v275
    %v1256 = vunpack.c.l.b16 %v276
    %v1257 = vunpack.c.l.b16 %v277
    %v1258 = vunpack.c.l.b16 %v278
    %v1259 = vunpack.c.l.b16 %v279
    %v1260 = vunpack.c.l.b16 %v280
    %v1261 = vunpack.c.l.b16 %v281
    %v1262 = vunpack.c.l.b16 %v282
    %v1263 = vunpack.c.l.b16 %v283
    %v1264 = vunpack.c.l.b16 %v284
    %v1265 = vunpack.c.l.b16 %v285
    %v1266 = vunpack.c.l.b16 %v286
    %v1267 = vunpack.c.l.b16 %v287
    %v1268 = vunpack.c.l.b16 %v288
    %v1269 = vunpack.c.l.b16 %v289
    %v1270 = vunpack.c.l.b16 %v290
    %v1271 = vunpack.c.l.b16 %v291
    %v1272 = vunpack.c.l.b16 %v292
    %v1273 = vunpack.c.l.b16 %v293
    %v1274 = vunpack.c.l.b16 %v294
    %v1275 = vunpack.c.l.b16 %v295
    %v1276 = vunpack.c.l.b16 %v296
    %v1277 = vunpack.c.l.b16 %v297
    %v1278 = vunpack.c.l.b16 %v298
    %v1279 = vunpack.c.l.b16 %v299
    %v1280 = vunpack.c.l.b16 %v300
    %v1281 = vunpack.c.l.b16 %v301
    %v1282 = vunpack.c.l.b16 %v302
    %v1283 = vunpack.c.l.b16 %v303
    %v1284 = vunpack.c.l.b16 %v304
    %v1285 = vunpack.c.l.b16 %v305
    %v1286 = vunpack.c.l.b16 %v306
    %v1287 = vunpack.c.l.b16 %v307
    %v1288 = vunpack.c.l.b16 %v308
    %v1289 = vunpack.c.l.b16 %v309
    %v1290 = vunpack.c.l.b16 %v310
    %v1291 = vunpack.c.l.b16 %v311
    %v1292 = vunpack.c.l.b16 %v312
    %v1293 = vunpack.c.l.b16 %v313
    %v1294 = vunpack.c.l.b16 %v314
    %v1295 = vunpack.c.l.b16 %v315
    %v1296 = vunpack.c.l.b16 %v316
    %v1297 = vunpack.c.l.b16 %v317
    %v1298 = vunpack.c.l.b16 %v318
    %v1299 = vunpack.c.l.b16 %v319
    %v1300 = vunpack.c.l.b16 %v320
    %v1301 = vunpack.c.l.b16 %v321
    %v1302 = vunpack.c.l.b16 %v322
    %v1303 = vunpack.c.l.b16 %v323
    %v1304 = vunpack.c.l.b16 %v324
    %v1305 = vunpack.c.l.b16 %v325
    %v1306 = vunpack.c.l.b16 %v326
    %v1307 = vunpack.c.l.b16 %v327
    %v1308 = vunpack.c.l.b16 %v328
    %v1309 = vunpack.c.l.b16 %v329
    %v1310 = vunpack.c.l.b16 %v330
    %v1311 = vunpack.c.l.b16 %v331
    %v1312 = vunpack.c.l.b16 %v332
    %v1313 = vunpack.c.l.b16 %v333
    %v1314 = vunpack.c.l.b16 %v334
    %v1315 = vunpack.c.l.b16 %v335
    %v1316 = vunpack.c.l.b16 %v336
    %v1317 = vunpack.c.l.b16 %v337
    %v1318 = vunpack.c.l.b16 %v338
    %v1319 = vunpack.c.l.b16 %v339
    %v1320 = vunpack.c.l.b16 %v340
    %v1321 = vunpack.c.l.b16 %v341
    %v1322 = vunpack.c.l.b16 %v342
    %v1323 = vunpack.c.l.b16 %v343
    %v1324 = vunpack.c.l.b16 %v344
    %v1325 = vunpack.c.l.b16 %v345
    %v1326 = vunpack.c.l.b16 %v346
    %v1327 = vunpack.c.l.b16 %v347
    %v1328 = vunpack.c.l.b16 %v348
    %v1329 = vunpack.c.l.b16 %v349
    %v1330 = vunpack.c.l.b16 %v350
    %v1331 = vunpack.c.l.b16 %v351
    %v1332 = vunpack.c.l.b16 %v352
    %v1333 = vunpack.c.l.b16 %v353
    %v1334 = vunpack.c.l.b16 %v354
    %v1335 = vunpack.c.l.b16 %v355
    %v1336 = vunpack.c.l.b16 %v356
    %v1337 = vunpack.c.l.b16 %v357
    %v1338 = vunpack.c.l.b16 %v358
    %v1339 = vunpack.c.l.b16 %v359
    %v1340 = vunpack.c.l.b16 %v360
    %v1341 = vunpack.c.l.b16 %v361
    %v1342 = vunpack.c.l.b16 %v362
    %v1343 = vunpack.c.l.b16 %v363
    %v1344 = vunpack.c.l.b16 %v364
    %v1345 = vunpack.c.l.b16 %v365
    %v1346 = vunpack.c.l.b16 %v366
    %v1347 = vunpack.c.l.b16 %v367
    %v1348 = vunpack.c.l.b16 %v368
    %v1349 = vunpack.c.l.b16 %v369
    %v1350 = vunpack.c.l.b16 %v370
    %v1351 = vunpack.c.l.b16 %v371
    %v1352 = vunpack.c.l.b16 %v372
    %v1353 = vunpack.c.l.b16 %v373
    %v1354 = vunpack.c.l.b16 %v374
    %v1355 = vunpack.c.l.b16 %v375
    %v1356 = vunpack.c.l.b16 %v376
    %v1357 = vunpack.c.l.b16 %v377
    %v1358 = vunpack.c.l.b16 %v378
    %v1359 = vunpack.c.l.b16 %v379
    %v1360 = vunpack.c.l.b16 %v380
    %v1361 = vunpack.c.l.b16 %v381
    %v1362 = vunpack.c.l.b16 %v382
    %v1363 = vunpack.c.l.b16 %v383
    %v1364 = vunpack.c.l.b16 %v384
    %v1365 = vunpack.c.l.b16 %v385
    %v1366 = vunpack.c.l.b16 %v386
    %v1367 = vunpack.c.l.b16 %v387
    %v1368 = vunpack.c.l.b16 %v388
    %v1369 = vunpack.c.l.b16 %v389
    %v1370 = vunpack.c.l.b16 %v390
    %v1371 = vunpack.c.l.b16 %v391
    %v1372 = vunpack.c.l.b16 %v392
    %v1373 = vunpack.c.l.b16 %v393
    %v1374 = vunpack.c.l.b16 %v394
    %v1375 = vunpack.c.l.b16 %v395
    %v1376 = vunpack.c.l.b16 %v396
    %v1377 = vunpack.c.l.b16 %v397
    %v1378 = vunpack.c.l.b16 %v398
    %v1379 = vunpack.c.l.b16 %v399
    %v1380 = vunpack.c.l.b16 %v400
    %v1381 = vunpack.c.l.b16 %v401
    %v1382 = vunpack.c.l.b16 %v402
    %v1383 = vunpack.c.l.b16 %v403
    %v1384 = vunpack.c.l.b16 %v404
    %v1385 = vunpack.c.l.b16 %v405
    %v1386 = vunpack.c.l.b16 %v406
    %v1387 = vunpack.c.l.b16 %v407
    %v1388 = vunpack.c.l.b16 %v408
    %v1389 = vunpack.c.l.b16 %v409
    %v1390 = vunpack.c.l.b16 %v410
    %v1391 = vunpack.c.l.b16 %v411
    %v1392 = vunpack.c.l.b16 %v412
    %v1393 = vunpack.c.l.b16 %v413
    %v1394 = vunpack.c.l.b16 %v414
    %v1395 = vunpack.c.l.b16 %v415
    %v1396 = vunpack.c.l.b16 %v416
    %v1397 = vunpack.c.l.b16 %v417
    %v1398 = vpack.c.b16 %v1007, %v1006
    %v1399 = vpack.c.b16 %v1009, %v1008
    %v1400 = vpack.c.b16 %v1011, %v1010
    %v1401 = vpack.c.b16 %v1013, %v1012
    %v1402 = vpack.c.b16 %v1015, %v1014
    %v1403 = vpack.c.b16 %v1017, %v1016
    %v1404 = vpack.c.b16 %v1019, %v1018
    %v1405 = vpack.c.b16 %v1021, %v1020
    %v1406 = vpack.c.b16 %v1023, %v1022
    %v1407 = vpack.c.b16 %v1025, %v1024
    %v1408 = vpack.c.b16 %v1027, %v1026
    %v1409 = vpack.c.b16 %v1029, %v1028
    %v1410 = vpack.c.b16 %v1031, %v1030
    %v1411 = vpack.c.b16 %v1033, %v1032
    %v1412 = vpack.c.b16 %v1035, %v1034
    %v1413 = vpack.c.b16 %v1037, %v1036
    %v1414 = vpack.c.b16 %v1039, %v1038
    %v1415 = vpack.c.b16 %v1041, %v1040
    %v1416 = vpack.c.b16 %v1043, %v1042
    %v1417 = vpack.c.b16 %v1045, %v1044
    %v1418 = vpack.c.b16 %v1047, %v1046
    %v1419 = vpack.c.b16 %v1049, %v1048
    %v1420 = vpack.c.b16 %v1051, %v1050
    %v1421 = vpack.c.b16 %v1053, %v1052
    %v1422 = vpack.c.b16 %v1055, %v1054
    %v1423 = vpack.c.b16 %v1057, %v1056
    %v1424 = vpack.c.b16 %v1059, %v1058
    %v1425 = vpack.c.b16 %v1061, %v1060
    %v1426 = vpack.c.b16 %v1063, %v1062
    %v1427 = vpack.c.b16 %v1065, %v1064
    %v1428 = vpack.c.b16 %v1067, %v1066
    %v1429 = vpack.c.b16 %v1069, %v1068
    %v1430 = vpack.c.b16 %v1071, %v1070
    %v1431 = vpack.c.b16 %v1073, %v1072
    %v1432 = vpack.c.b16 %v1075, %v1074
    %v1433 = vpack.c.b16 %v1077, %v1076
    %v1434 = vpack.c.b16 %v1079, %v1078
    %v1435 = vpack.c.b16 %v1081, %v1080
    %v1436 = vpack.c.b16 %v1083, %v1082
    %v1437 = vpack.c.b16 %v1085, %v1084
    %v1438 = vpack.c.b16 %v1087, %v1086
    %v1439 = vpack.c.b16 %v1089, %v1088
    %v1440 = vpack.c.b16 %v1091, %v1090
    %v1441 = vpack.c.b16 %v1093, %v1092
    %v1442 = vpack.c.b16 %v1095, %v1094
    %v1443 = vpack.c.b16 %v1097, %v1096
    %v1444 = vpack.c.b16 %v1099, %v1098
    %v1445 = vpack.c.b16 %v1101, %v1100
    %v1446 = vpack.c.b16 %v1103, %v1102
    %v1447 = vpack.c.b16 %v1105, %v1104
    %v1448 = vpack.c.b16 %v1107, %v1106
    %v1449 = vpack.c.b16 %v1109, %v1108
    %v1450 = vpack.c.b16 %v1111, %v1110
    %v1451 = vpack.c.b16 %v1113, %v1112
    %v1452 = vpack.c.b16 %v1115, %v1114
    %v1453 = vpack.c.b16 %v1117, %v1116
    %v1454 = vpack.c.b16 %v1119, %v1118
    %v1455 = vpack.c.b16 %v1121, %v1120
    %v1456 = vpack.c.b16 %v1123, %v1122
    %v1457 = vpack.c.b16 %v1125, %v1124
    %v1458 = vpack.c.b16 %v1127, %v1126
    %v1459 = vpack.c.b16 %v1129, %v1128
    %v1460 = vpack.c.b16 %v1131, %v1130
    %v1461 = vpack.c.b16 %v1133, %v1132
    %v1462 = vpack.c.b16 %v1135, %v1134
    %v1463 = vpack.c.b16 %v1137, %v1136
    %v1464 = vpack.c.b16 %v1139, %v1138
    %v1465 = vpack.c.b16 %v1141, %v1140
    %v1466 = vpack.c.b16 %v1143, %v1142
    %v1467 = vpack.c.b16 %v1145, %v1144
    %v1468 = vpack.c.b16 %v1147, %v1146
    %v1469 = vpack.c.b16 %v1149, %v1148
    %v1470 = vpack.c.b16 %v1151, %v1150
    %v1471 = vpack.c.b16 %v1153, %v1152
    %v1472 = vpack.c.b16 %v1155, %v1154
    %v1473 = vpack.c.b16 %v1157, %v1156
    %v1474 = vpack.c.b16 %v1159, %v1158
    %v1475 = vpack.c.b16 %v1161, %v1160
    %v1476 = vpack.c.b16 %v1163, %v1162
    %v1477 = vpack.c.b16 %v1165, %v1164
    %v1478 = vpack.c.b16 %v1167, %v1166
    %v1479 = vpack.c.b16 %v1169, %v1168
    %v1480 = vpack.c.b16 %v1171, %v1170
    %v1481 = vpack.c.b16 %v1173, %v1172
    %v1482 = vpack.c.b16 %v1175, %v1174
    %v1483 = vpack.c.b16 %v1177, %v1176
    %v1484 = vpack.c.b16 %v1179, %v1178
    %v1485 = vpack.c.b16 %v1181, %v1180
    %v1486 = vpack.c.b16 %v1183, %v1182
    %v1487 = vpack.c.b16 %v1185, %v1184
    %v1488 = vpack.c.b16 %v1187, %v1186
    %v1489 = vpack.c.b16 %v1189, %v1188
    %v1490 = vpack.c.b16 %v1191, %v1190
    %v1491 = vpack.c.b16 %v1193, %v1192
    %v1492 = vpack.c.b16 %v1195, %v1194
    %v1493 = vpack.c.b16 %v1197, %v1196
    %v1494 = vpack.c.b16 %v1199, %v1198
    %v1495 = vpack.c.b16 %v1201, %v1200
    %v1496 = vpack.c.b16 %v1203, %v1202
    %v1497 = vpack.c.b16 %v1205, %v1204
    %v1498 = vpack.c.b16 %v1207, %v1206
    %v1499 = vpack.c.b16 %v1209, %v1208
    %v1500 = vpack.c.b16 %v1211, %v1210
    %v1501 = vpack.c.b16 %v1213, %v1212
    %v1502 = vpack.c.b16 %v1215, %v1214
    %v1503 = vpack.c.b16 %v1217, %v1216
    %v1504 = vpack.c.b16 %v1219, %v1218
    %v1505 = vpack.c.b16 %v1221, %v1220
    %v1506 = vpack.c.b16 %v1223, %v1222
    %v1507 = vpack.c.b16 %v1225, %v1224
    %v1508 = vpack.c.b16 %v1227, %v1226
    %v1509 = vpack.c.b16 %v1229, %v1228
    %v1510 = vpack.c.b16 %v1231, %v1230
    %v1511 = vpack.c.b16 %v1233, %v1232
    %v1512 = vpack.c.b16 %v1235, %v1234
    %v1513 = vpack.c.b16 %v1237, %v1236
    %v1514 = vpack.c.b16 %v1239, %v1238
    %v1515 = vpack.c.b16 %v1241, %v1240
    %v1516 = vpack.c.b16 %v1243, %v1242
    %v1517 = vpack.c.b16 %v1245, %v1244
    %v1518 = vpack.c.b16 %v1247, %v1246
    %v1519 = vpack.c.b16 %v1249, %v1248
    %v1520 = vpack.c.b16 %v1251, %v1250
    %v1521 = vpack.c.b16 %v1253, %v1252
    %v1522 = vpack.c.b16 %v1255, %v1254
    %v1523 = vpack.c.b16 %v1257, %v1256
    %v1524 = vpack.c.b16 %v1259, %v1258
    %v1525 = vpack.c.b16 %v1261, %v1260
    %v1526 = vpack.c.b16 %v1263, %v1262
    %v1527 = vpack.c.b16 %v1265, %v1264
    %v1528 = vpack.c.b16 %v1267, %v1266
    %v1529 = vpack.c.b16 %v1269, %v1268
    %v1530 = vpack.c.b16 %v1271, %v1270
    %v1531 = vpack.c.b16 %v1273, %v1272
    %v1532 = vpack.c.b16 %v1275, %v1274
    %v1533 = vpack.c.b16 %v1277, %v1276
    %v1534 = vpack.c.b16 %v1279, %v1278
    %v1535 = vpack.c.b16 %v1281, %v1280
    %v1536 = vpack.c.b16 %v1283, %v1282
    %v1537 = vpack.c.b16 %v1285, %v1284
    %v1538 = vpack.c.b16 %v1287, %v1286
    %v1539 = vpack.c.b16 %v1289, %v1288
    %v1540 = vpack.c.b16 %v1291, %v1290
    %v1541 = vpack.c.b16 %v1293, %v1292
    %v1542 = vpack.c.b16 %v1295, %v1294
    %v1543 = vpack.c.b16 %v1297, %v1296
    %v1544 = vpack.c.b16 %v1299, %v1298
    %v1545 = vpack.c.b16 %v1301, %v1300
    %v1546 = vpack.c.b16 %v1303, %v1302
    %v1547 = vpack.c.b16 %v1305, %v1304
    %v1548 = vpack.c.b16 %v1307, %v1306
    %v1549 = vpack.c.b16 %v1309, %v1308
    %v1550 = vpack.c.b16 %v1311, %v1310
    %v1551 = vpack.c.b16 %v1313, %v1312
    %v1552 = vpack.c.b16 %v1315, %v1314
    %v1553 = vpack.c.b16 %v1317, %v1316
    %v1554 = vpack.c.b16 %v1319, %v1318
    %v1555 = vpack.c.b16 %v1321, %v1320
    %v1556 = vpack.c.b16 %v1323, %v1322
    %v1557 = vpack.c.b16 %v1325, %v1324
    %v1558 = vpack.c.b16 %v1327, %v1326
    %v1559 = vpack.c.b16 %v1329, %v1328
    %v1560 = vpack.c.b16 %v1331, %v1330
    %v1561 = vpack.c.b16 %v1333, %v1332
    %v1562 = vpack.c.b16 %v1335, %v1334
    %v1563 = vpack.c.b16 %v1337, %v1336
    %v1564 = vpack.c.b16 %v1339, %v1338
    %v1565 = vpack.c.b16 %v1341, %v1340
    %v1566 = vpack.c.b16 %v1343, %v1342
    %v1567 = vpack.c.b16 %v1345, %v1344
    %v1568 = vpack.c.b16 %v1347, %v1346
    %v1569 = vpack.c.b16 %v1349, %v1348
    %v1570 = vpack.c.b16 %v1351, %v1350
    %v1571 = vpack.c.b16 %v1353, %v1352
    %v1572 = vpack.c.b16 %v1355, %v1354
    %v1573 = vpack.c.b16 %v1357, %v1356
    %v1574 = vpack.c.b16 %v1359, %v1358
    %v1575 = vpack.c.b16 %v1361, %v1360
    %v1576 = vpack.c.b16 %v1363, %v1362
    %v1577 = vpack.c.b16 %v1365, %v1364
    %v1578 = vpack.c.b16 %v1367, %v1366
    %v1579 = vpack.c.b16 %v1369, %v1368
    %v1580 = vpack.c.b16 %v1371, %v1370
    %v1581 = vpack.c.b16 %v1373, %v1372
    %v1582 = vpack.c.b16 %v1375, %v1374
    %v1583 = vpack.c.b16 %v1377, %v1376
    %v1584 = vpack.c.b16 %v1379, %v1378
    %v1585 = vpack.c.b16 %v1381, %v1380
    %v1586 = vpack.c.b16 %v1383, %v1382
    %v1587 = vpack.c.b16 %v1385, %v1384
    %v1588 = vpack.c.b16 %v1387, %v1386
    %v1589 = vpack.c.b16 %v1389, %v1388
    %v1590 = vpack.c.b16 %v1391, %v1390
    %v1591 = vpack.c.b16 %v1393, %v1392
    %v1592 = vpack.c.b16 %v1395, %v1394
    %v1593 = vpack.c.b16 %v1397, %v1396
    %vm1790 = vcmask 523264
    %v1792 = vsel %vm1790, %v589, 0
    %1794 = vmatprep.subr.bf16.mxu0 0
    %1795 = vmatpush1.bf16.msra.mxu0 %v1398
    %1796 = vmatprep.subr.bf16.mxu0 0
    %1797 = vmatpush1.bf16.msra.mxu0 %v1399
    %1798 = vmatprep.subr.bf16.mxu0 0
    %1799 = vmatpush1.bf16.msra.mxu0 %v1400
    %1800 = vmatprep.subr.bf16.mxu0 0
    %1801 = vmatpush1.bf16.msra.mxu0 %v1401
    %1802 = vmatprep.subr.bf16.mxu0 0
    %1803 = vmatpush1.bf16.msra.mxu0 %v1402
    %1804 = vmatprep.subr.bf16.mxu0 0
    %1805 = vmatpush1.bf16.msra.mxu0 %v1403
    %1806 = vmatprep.subr.bf16.mxu0 0
    %1807 = vmatpush1.bf16.msra.mxu0 %v1404
    %1808 = vmatprep.subr.bf16.mxu0 0
    %1809 = vmatpush1.bf16.msra.mxu0 %v1405
    %1810 = vmatprep.subr.bf16.mxu0 0
    %1811 = vmatpush1.bf16.msra.mxu0 %v1406
    %1812 = vmatprep.subr.bf16.mxu0 0
    %1813 = vmatpush1.bf16.msra.mxu0 %v1407
    %1814 = vmatprep.subr.bf16.mxu0 0
    %1815 = vmatpush1.bf16.msra.mxu0 %v1408
    %1816 = vmatprep.subr.bf16.mxu0 0
    %1817 = vmatpush1.bf16.msra.mxu0 %v1409
    %1818 = vmatprep.subr.bf16.mxu0 0
    %1819 = vmatpush1.bf16.msra.mxu0 %v1410
    %1820 = vmatprep.subr.bf16.mxu0 0
    %1821 = vmatpush1.bf16.msra.mxu0 %v1411
    %1822 = vmatprep.subr.bf16.mxu0 0
    %1823 = vmatpush1.bf16.msra.mxu0 %v1412
    %1824 = vmatprep.subr.bf16.mxu0 0
    %1825 = vmatpush1.bf16.msra.mxu0 %v1413
    %1826 = vmatprep.mubr.bf16.mxu0 %v466
    %1827 = vmatmul.mubr.bf16.gmra.mrb[0].mxu0 %v452
    %v1828 = vpop.f32.mrb[0].mxu0
    %v1829 = vadd.f32 %v423, %v1828
    %v1830 = vpop.f32.mrb[0].mxu0
    %v1831 = vpop.f32.mrb[0].mxu0
    %v1832 = vpop.f32.mrb[0].mxu0
    %1833 = vdwg.mxu0
    %1834 = vmatprep.subr.bf16.mxu0 0
    %1835 = vmatpush1.bf16.msra.mxu0 %v1414
    %1836 = vmatprep.subr.bf16.mxu0 0
    %1837 = vmatpush1.bf16.msra.mxu0 %v1415
    %1838 = vmatprep.subr.bf16.mxu0 0
    %1839 = vmatpush1.bf16.msra.mxu0 %v1416
    %1840 = vmatprep.subr.bf16.mxu0 0
    %1841 = vmatpush1.bf16.msra.mxu0 %v1417
    %1842 = vmatprep.subr.bf16.mxu0 0
    %1843 = vmatpush1.bf16.msra.mxu0 %v1418
    %1844 = vmatprep.subr.bf16.mxu0 0
    %1845 = vmatpush1.bf16.msra.mxu0 %v1419
    %1846 = vmatprep.subr.bf16.mxu0 0
    %1847 = vmatpush1.bf16.msra.mxu0 %v1420
    %1848 = vmatprep.subr.bf16.mxu0 0
    %1849 = vmatpush1.bf16.msra.mxu0 %v1421
    %1850 = vmatprep.subr.bf16.mxu0 0
    %1851 = vmatpush1.bf16.msra.mxu0 %v1422
    %1852 = vmatprep.subr.bf16.mxu0 0
    %1853 = vmatpush1.bf16.msra.mxu0 %v1423
    %1854 = vmatprep.subr.bf16.mxu0 0
    %1855 = vmatpush1.bf16.msra.mxu0 %v1424
    %1856 = vmatprep.subr.bf16.mxu0 0
    %1857 = vmatpush1.bf16.msra.mxu0 %v1425
    %1858 = vmatprep.subr.bf16.mxu0 0
    %1859 = vmatpush1.bf16.msra.mxu0 %v1426
    %1860 = vmatprep.subr.bf16.mxu0 0
    %1861 = vmatpush1.bf16.msra.mxu0 %v1427
    %1862 = vmatprep.subr.bf16.mxu0 0
    %1863 = vmatpush1.bf16.msra.mxu0 %v1428
    %1864 = vmatprep.subr.bf16.mxu0 0
    %1865 = vmatpush1.bf16.msra.mxu0 %v1429
    %1866 = vmatprep.mubr.bf16.mxu0 %v476
    %1867 = vmatmul.mubr.bf16.gmra.mrb[0].mxu0 %v474
    %v1868 = vpop.f32.mrb[0].mxu0
    %v1869 = vadd.f32 %v1829, %v1868
    %v1870 = vpop.f32.mrb[0].mxu0
    %v1871 = vpop.f32.mrb[0].mxu0
    %v1872 = vpop.f32.mrb[0].mxu0
    %1873 = vdwg.mxu0
    %1874 = vmatprep.subr.bf16.mxu0 0
    %1875 = vmatpush1.bf16.msra.mxu0 %v1430
    %1876 = vmatprep.subr.bf16.mxu0 0
    %1877 = vmatpush1.bf16.msra.mxu0 %v1431
    %1878 = vmatprep.subr.bf16.mxu0 0
    %1879 = vmatpush1.bf16.msra.mxu0 %v1432
    %1880 = vmatprep.subr.bf16.mxu0 0
    %1881 = vmatpush1.bf16.msra.mxu0 %v1433
    %1882 = vmatprep.subr.bf16.mxu0 0
    %1883 = vmatpush1.bf16.msra.mxu0 %v1434
    %1884 = vmatprep.subr.bf16.mxu0 0
    %1885 = vmatpush1.bf16.msra.mxu0 %v1435
    %1886 = vmatprep.subr.bf16.mxu0 0
    %1887 = vmatpush1.bf16.msra.mxu0 %v1436
    %1888 = vmatprep.subr.bf16.mxu0 0
    %1889 = vmatpush1.bf16.msra.mxu0 %v1437
    %1890 = vmatprep.subr.bf16.mxu0 0
    %1891 = vmatpush1.bf16.msra.mxu0 %v1438
    %1892 = vmatprep.subr.bf16.mxu0 0
    %1893 = vmatpush1.bf16.msra.mxu0 %v1439
    %1894 = vmatprep.subr.bf16.mxu0 0
    %1895 = vmatpush1.bf16.msra.mxu0 %v1440
    %1896 = vmatprep.subr.bf16.mxu0 0
    %1897 = vmatpush1.bf16.msra.mxu0 %v1441
    %1898 = vmatprep.subr.bf16.mxu0 0
    %1899 = vmatpush1.bf16.msra.mxu0 %v1442
    %1900 = vmatprep.subr.bf16.mxu0 0
    %1901 = vmatpush1.bf16.msra.mxu0 %v1443
    %1902 = vmatprep.subr.bf16.mxu0 0
    %1903 = vmatpush1.bf16.msra.mxu0 %v1444
    %1904 = vmatprep.subr.bf16.mxu0 0
    %1905 = vmatpush1.bf16.msra.mxu0 %v1445
    %1906 = vmatprep.mubr.bf16.mxu0 %v473
    %1907 = vmatmul.mubr.bf16.gmra.mrb[0].mxu0 %v459
    %v1908 = vpop.f32.mrb[0].mxu0
    %v1909 = vadd.f32 %v1869, %v1908
    %v1910 = vpop.f32.mrb[0].mxu0
    %v1911 = vpop.f32.mrb[0].mxu0
    %v1912 = vpop.f32.mrb[0].mxu0
    %1913 = vdwg.mxu0
    %1914 = vmatprep.subr.bf16.mxu0 0
    %1915 = vmatpush1.bf16.msra.mxu0 %v1446
    %1916 = vmatprep.subr.bf16.mxu0 0
    %1917 = vmatpush1.bf16.msra.mxu0 %v1447
    %1918 = vmatprep.subr.bf16.mxu0 0
    %1919 = vmatpush1.bf16.msra.mxu0 %v1448
    %1920 = vmatprep.subr.bf16.mxu0 0
    %1921 = vmatpush1.bf16.msra.mxu0 %v1449
    %1922 = vmatprep.subr.bf16.mxu0 0
    %1923 = vmatpush1.bf16.msra.mxu0 %v1450
    %1924 = vmatprep.subr.bf16.mxu0 0
    %1925 = vmatpush1.bf16.msra.mxu0 %v1451
    %1926 = vmatprep.subr.bf16.mxu0 0
    %1927 = vmatpush1.bf16.msra.mxu0 %v1452
    %1928 = vmatprep.subr.bf16.mxu0 0
    %1929 = vmatpush1.bf16.msra.mxu0 %v1453
    %1930 = vmatprep.subr.bf16.mxu0 0
    %1931 = vmatpush1.bf16.msra.mxu0 %v1454
    %1932 = vmatprep.subr.bf16.mxu0 0
    %1933 = vmatpush1.bf16.msra.mxu0 %v1455
    %1934 = vmatprep.subr.bf16.mxu0 0
    %1935 = vmatpush1.bf16.msra.mxu0 %v1456
    %1936 = vmatprep.subr.bf16.mxu0 0
    %1937 = vmatpush1.bf16.msra.mxu0 %v1457
    %1938 = vmatprep.subr.bf16.mxu0 0
    %1939 = vmatpush1.bf16.msra.mxu0 %v1458
    %1940 = vmatprep.subr.bf16.mxu0 0
    %1941 = vmatpush1.bf16.msra.mxu0 %v1459
    %1942 = vmatprep.subr.bf16.mxu0 0
    %1943 = vmatpush1.bf16.msra.mxu0 %v1460
    %1944 = vmatprep.subr.bf16.mxu0 0
    %1945 = vmatpush1.bf16.msra.mxu0 %v1461
    %1946 = vmatprep.mubr.bf16.mxu0 %v477
    %1947 = vmatmul.mubr.bf16.gmra.mrb[0].mxu0 %v475
    %v1948 = vpop.f32.mrb[0].mxu0
    %v1949 = vadd.f32 %v1909, %v1948
    %v1950 = vpop.f32.mrb[0].mxu0
    %v1951 = vpop.f32.mrb[0].mxu0
    %v1952 = vpop.f32.mrb[0].mxu0
    %1953 = vdwg.mxu0
    %1954 = vmatprep.subr.bf16.mxu0 0
    %1955 = vmatpush1.bf16.msra.mxu0 %v1462
    %1956 = vmatprep.subr.bf16.mxu0 0
    %1957 = vmatpush1.bf16.msra.mxu0 %v1463
    %1958 = vmatprep.subr.bf16.mxu0 0
    %1959 = vmatpush1.bf16.msra.mxu0 %v1464
    %1960 = vmatprep.subr.bf16.mxu0 0
    %1961 = vmatpush1.bf16.msra.mxu0 %v1465
    %1962 = vmatprep.subr.bf16.mxu0 0
    %1963 = vmatpush1.bf16.msra.mxu0 %v1466
    %1964 = vmatprep.subr.bf16.mxu0 0
    %1965 = vmatpush1.bf16.msra.mxu0 %v1467
    %1966 = vmatprep.subr.bf16.mxu0 0
    %1967 = vmatpush1.bf16.msra.mxu0 %v1468
    %1968 = vmatprep.subr.bf16.mxu0 0
    %1969 = vmatpush1.bf16.msra.mxu0 %v1469
    %1970 = vmatprep.subr.bf16.mxu0 0
    %1971 = vmatpush1.bf16.msra.mxu0 %v1470
    %1972 = vmatprep.subr.bf16.mxu0 0
    %1973 = vmatpush1.bf16.msra.mxu0 %v1471
    %1974 = vmatprep.subr.bf16.mxu0 0
    %1975 = vmatpush1.bf16.msra.mxu0 %v1472
    %1976 = vmatprep.subr.bf16.mxu0 0
    %1977 = vmatpush1.bf16.msra.mxu0 %v1473
    %1978 = vmatprep.subr.bf16.mxu0 0
    %1979 = vmatpush1.bf16.msra.mxu0 %v1474
    %1980 = vmatprep.subr.bf16.mxu0 0
    %1981 = vmatpush1.bf16.msra.mxu0 %v1475
    %1982 = vmatprep.subr.bf16.mxu0 0
    %1983 = vmatpush1.bf16.msra.mxu0 %v1476
    %1984 = vmatprep.subr.bf16.mxu0 0
    %1985 = vmatpush1.bf16.msra.mxu0 %v1477
    %1986 = vmatprep.mubr.bf16.mxu0 %v515
    %1987 = vmatmul.mubr.bf16.gmra.mrb[0].mxu0 %v501
    %v1988 = vpop.f32.mrb[0].mxu0
    %v1989 = vadd.f32 %v1949, %v1988
    %v1990 = vpop.f32.mrb[0].mxu0
    %v1991 = vpop.f32.mrb[0].mxu0
    %v1992 = vpop.f32.mrb[0].mxu0
    %1993 = vdwg.mxu0
    %1994 = vmatprep.subr.bf16.mxu0 0
    %1995 = vmatpush1.bf16.msra.mxu0 %v1478
    %1996 = vmatprep.subr.bf16.mxu0 0
    %1997 = vmatpush1.bf16.msra.mxu0 %v1479
    %1998 = vmatprep.subr.bf16.mxu0 0
    %1999 = vmatpush1.bf16.msra.mxu0 %v1480
    %2000 = vmatprep.subr.bf16.mxu0 0
    %2001 = vmatpush1.bf16.msra.mxu0 %v1481
    %2002 = vmatprep.subr.bf16.mxu0 0
    %2003 = vmatpush1.bf16.msra.mxu0 %v1482
    %2004 = vmatprep.subr.bf16.mxu0 0
    %2005 = vmatpush1.bf16.msra.mxu0 %v1483
    %2006 = vmatprep.subr.bf16.mxu0 0
    %2007 = vmatpush1.bf16.msra.mxu0 %v1484
    %2008 = vmatprep.subr.bf16.mxu0 0
    %2009 = vmatpush1.bf16.msra.mxu0 %v1485
    %2010 = vmatprep.subr.bf16.mxu0 0
    %2011 = vmatpush1.bf16.msra.mxu0 %v1486
    %2012 = vmatprep.subr.bf16.mxu0 0
    %2013 = vmatpush1.bf16.msra.mxu0 %v1487
    %2014 = vmatprep.subr.bf16.mxu0 0
    %2015 = vmatpush1.bf16.msra.mxu0 %v1488
    %2016 = vmatprep.subr.bf16.mxu0 0
    %2017 = vmatpush1.bf16.msra.mxu0 %v1489
    %2018 = vmatprep.subr.bf16.mxu0 0
    %2019 = vmatpush1.bf16.msra.mxu0 %v1490
    %2020 = vmatprep.subr.bf16.mxu0 0
    %2021 = vmatpush1.bf16.msra.mxu0 %v1491
    %2022 = vmatprep.subr.bf16.mxu0 0
    %2023 = vmatpush1.bf16.msra.mxu0 %v1492
    %2024 = vmatprep.subr.bf16.mxu0 0
    %2025 = vmatpush1.bf16.msra.mxu0 %v1493
    %2026 = vmatprep.mubr.bf16.mxu0 %v525
    %2027 = vmatmul.mubr.bf16.gmra.mrb[0].mxu0 %v523
    %v2028 = vpop.f32.mrb[0].mxu0
    %v2029 = vadd.f32 %v1989, %v2028
    %v2030 = vpop.f32.mrb[0].mxu0
    %v2031 = vpop.f32.mrb[0].mxu0
    %v2032 = vpop.f32.mrb[0].mxu0
    %2033 = vdwg.mxu0
    %2034 = vmatprep.subr.bf16.mxu0 0
    %2035 = vmatpush1.bf16.msra.mxu0 %v1494
    %2036 = vmatprep.subr.bf16.mxu0 0
    %2037 = vmatpush1.bf16.msra.mxu0 %v1495
    %2038 = vmatprep.subr.bf16.mxu0 0
    %2039 = vmatpush1.bf16.msra.mxu0 %v1496
    %2040 = vmatprep.subr.bf16.mxu0 0
    %2041 = vmatpush1.bf16.msra.mxu0 %v1497
    %2042 = vmatprep.subr.bf16.mxu0 0
    %2043 = vmatpush1.bf16.msra.mxu0 %v1498
    %2044 = vmatprep.subr.bf16.mxu0 0
    %2045 = vmatpush1.bf16.msra.mxu0 %v1499
    %2046 = vmatprep.subr.bf16.mxu0 0
    %2047 = vmatpush1.bf16.msra.mxu0 %v1500
    %2048 = vmatprep.subr.bf16.mxu0 0
    %2049 = vmatpush1.bf16.msra.mxu0 %v1501
    %2050 = vmatprep.subr.bf16.mxu0 0
    %2051 = vmatpush1.bf16.msra.mxu0 %v1502
    %2052 = vmatprep.subr.bf16.mxu0 0
    %2053 = vmatpush1.bf16.msra.mxu0 %v1503
    %2054 = vmatprep.subr.bf16.mxu0 0
    %2055 = vmatpush1.bf16.msra.mxu0 %v1504
    %2056 = vmatprep.subr.bf16.mxu0 0
    %2057 = vmatpush1.bf16.msra.mxu0 %v1505
    %2058 = vmatprep.subr.bf16.mxu0 0
    %2059 = vmatpush1.bf16.msra.mxu0 %v1506
    %2060 = vmatprep.subr.bf16.mxu0 0
    %2061 = vmatpush1.bf16.msra.mxu0 %v1507
    %2062 = vmatprep.subr.bf16.mxu0 0
    %2063 = vmatpush1.bf16.msra.mxu0 %v1508
    %2064 = vmatprep.subr.bf16.mxu0 0
    %2065 = vmatpush1.bf16.msra.mxu0 %v1509
    %2066 = vmatprep.mubr.bf16.mxu0 %v522
    %2067 = vmatmul.mubr.bf16.gmra.mrb[0].mxu0 %v508
    %v2068 = vpop.f32.mrb[0].mxu0
    %v2069 = vadd.f32 %v2029, %v2068
    %v2070 = vpop.f32.mrb[0].mxu0
    %v2071 = vpop.f32.mrb[0].mxu0
    %v2072 = vpop.f32.mrb[0].mxu0
    %2073 = vdwg.mxu0
    %2074 = vmatprep.subr.bf16.mxu0 0
    %2075 = vmatpush1.bf16.msra.mxu0 %v1510
    %2076 = vmatprep.subr.bf16.mxu0 0
    %2077 = vmatpush1.bf16.msra.mxu0 %v1511
    %2078 = vmatprep.subr.bf16.mxu0 0
    %2079 = vmatpush1.bf16.msra.mxu0 %v1512
    %2080 = vmatprep.subr.bf16.mxu0 0
    %2081 = vmatpush1.bf16.msra.mxu0 %v1513
    %2082 = vmatprep.subr.bf16.mxu0 0
    %2083 = vmatpush1.bf16.msra.mxu0 %v1514
    %2084 = vmatprep.subr.bf16.mxu0 0
    %2085 = vmatpush1.bf16.msra.mxu0 %v1515
    %2086 = vmatprep.subr.bf16.mxu0 0
    %2087 = vmatpush1.bf16.msra.mxu0 %v1516
    %2088 = vmatprep.subr.bf16.mxu0 0
    %2089 = vmatpush1.bf16.msra.mxu0 %v1517
    %2090 = vmatprep.subr.bf16.mxu0 0
    %2091 = vmatpush1.bf16.msra.mxu0 %v1518
    %2092 = vmatprep.subr.bf16.mxu0 0
    %2093 = vmatpush1.bf16.msra.mxu0 %v1519
    %2094 = vmatprep.subr.bf16.mxu0 0
    %2095 = vmatpush1.bf16.msra.mxu0 %v1520
    %2096 = vmatprep.subr.bf16.mxu0 0
    %2097 = vmatpush1.bf16.msra.mxu0 %v1521
    %2098 = vmatprep.subr.bf16.mxu0 0
    %2099 = vmatpush1.bf16.msra.mxu0 %v1522
    %2100 = vmatprep.subr.bf16.mxu0 0
    %2101 = vmatpush1.bf16.msra.mxu0 %v1523
    %2102 = vmatprep.subr.bf16.mxu0 0
    %2103 = vmatpush1.bf16.msra.mxu0 %v1524
    %2104 = vmatprep.subr.bf16.mxu0 0
    %2105 = vmatpush1.bf16.msra.mxu0 %v1525
    %2106 = vmatprep.mubr.bf16.mxu0 %v526
    %2107 = vmatmul.mubr.bf16.gmra.mrb[0].mxu0 %v524
    %v2108 = vpop.f32.mrb[0].mxu0
    %v2109 = vadd.f32 %v2069, %v2108
    %v2110 = vpop.f32.mrb[0].mxu0
    %v2111 = vpop.f32.mrb[0].mxu0
    %v2112 = vpop.f32.mrb[0].mxu0
    %2113 = vdwg.mxu0
    %2114 = vmatprep.subr.bf16.mxu0 0
    %2115 = vmatpush1.bf16.msra.mxu0 %v1526
    %2116 = vmatprep.subr.bf16.mxu0 0
    %2117 = vmatpush1.bf16.msra.mxu0 %v1527
    %2118 = vmatprep.subr.bf16.mxu0 0
    %2119 = vmatpush1.bf16.msra.mxu0 %v1528
    %2120 = vmatprep.subr.bf16.mxu0 0
    %2121 = vmatpush1.bf16.msra.mxu0 %v1529
    %2122 = vmatprep.subr.bf16.mxu0 0
    %2123 = vmatpush1.bf16.msra.mxu0 %v1530
    %2124 = vmatprep.subr.bf16.mxu0 0
    %2125 = vmatpush1.bf16.msra.mxu0 %v1531
    %2126 = vmatprep.subr.bf16.mxu0 0
    %2127 = vmatpush1.bf16.msra.mxu0 %v1532
    %2128 = vmatprep.subr.bf16.mxu0 0
    %2129 = vmatpush1.bf16.msra.mxu0 %v1533
    %2130 = vmatprep.subr.bf16.mxu0 0
    %2131 = vmatpush1.bf16.msra.mxu0 %v1534
    %2132 = vmatprep.subr.bf16.mxu0 0
    %2133 = vmatpush1.bf16.msra.mxu0 %v1535
    %2134 = vmatprep.subr.bf16.mxu0 0
    %2135 = vmatpush1.bf16.msra.mxu0 %v1536
    %2136 = vmatprep.subr.bf16.mxu0 0
    %2137 = vmatpush1.bf16.msra.mxu0 %v1537
    %2138 = vmatprep.subr.bf16.mxu0 0
    %2139 = vmatpush1.bf16.msra.mxu0 %v1538
    %2140 = vmatprep.subr.bf16.mxu0 0
    %2141 = vmatpush1.bf16.msra.mxu0 %v1539
    %2142 = vmatprep.subr.bf16.mxu0 0
    %2143 = vmatpush1.bf16.msra.mxu0 %v1540
    %2144 = vmatprep.subr.bf16.mxu0 0
    %2145 = vmatpush1.bf16.msra.mxu0 %v1541
    %2146 = vmatprep.mubr.bf16.mxu0 %v564
    %2147 = vmatmul.mubr.bf16.gmra.mrb[0].mxu0 %v550
    %v2148 = vpop.f32.mrb[0].mxu0
    %v2149 = vadd.f32 %v2109, %v2148
    %v2150 = vpop.f32.mrb[0].mxu0
    %v2151 = vpop.f32.mrb[0].mxu0
    %v2152 = vpop.f32.mrb[0].mxu0
    %2153 = vdwg.mxu0
    %2154 = vmatprep.subr.bf16.mxu0 0
    %2155 = vmatpush1.bf16.msra.mxu0 %v1542
    %2156 = vmatprep.subr.bf16.mxu0 0
    %2157 = vmatpush1.bf16.msra.mxu0 %v1543
    %2158 = vmatprep.subr.bf16.mxu0 0
    %2159 = vmatpush1.bf16.msra.mxu0 %v1544
    %2160 = vmatprep.subr.bf16.mxu0 0
    %2161 = vmatpush1.bf16.msra.mxu0 %v1545
    %2162 = vmatprep.subr.bf16.mxu0 0
    %2163 = vmatpush1.bf16.msra.mxu0 %v1546
    %2164 = vmatprep.subr.bf16.mxu0 0
    %2165 = vmatpush1.bf16.msra.mxu0 %v1547
    %2166 = vmatprep.subr.bf16.mxu0 0
    %2167 = vmatpush1.bf16.msra.mxu0 %v1548
    %2168 = vmatprep.subr.bf16.mxu0 0
    %2169 = vmatpush1.bf16.msra.mxu0 %v1549
    %2170 = vmatprep.subr.bf16.mxu0 0
    %2171 = vmatpush1.bf16.msra.mxu0 %v1550
    %2172 = vmatprep.subr.bf16.mxu0 0
    %2173 = vmatpush1.bf16.msra.mxu0 %v1551
    %2174 = vmatprep.subr.bf16.mxu0 0
    %2175 = vmatpush1.bf16.msra.mxu0 %v1552
    %2176 = vmatprep.subr.bf16.mxu0 0
    %2177 = vmatpush1.bf16.msra.mxu0 %v1553
    %2178 = vmatprep.subr.bf16.mxu0 0
    %2179 = vmatpush1.bf16.msra.mxu0 %v1554
    %2180 = vmatprep.subr.bf16.mxu0 0
    %2181 = vmatpush1.bf16.msra.mxu0 %v1555
    %2182 = vmatprep.subr.bf16.mxu0 0
    %2183 = vmatpush1.bf16.msra.mxu0 %v1556
    %2184 = vmatprep.subr.bf16.mxu0 0
    %2185 = vmatpush1.bf16.msra.mxu0 %v1557
    %2186 = vmatprep.mubr.bf16.mxu0 %v574
    %2187 = vmatmul.mubr.bf16.gmra.mrb[0].mxu0 %v572
    %v2188 = vpop.f32.mrb[0].mxu0
    %v2189 = vadd.f32 %v2149, %v2188
    %v2190 = vpop.f32.mrb[0].mxu0
    %v2191 = vpop.f32.mrb[0].mxu0
    %v2192 = vpop.f32.mrb[0].mxu0
    %2193 = vdwg.mxu0
    %2194 = vmatprep.subr.bf16.mxu0 0
    %2195 = vmatpush1.bf16.msra.mxu0 %v1558
    %2196 = vmatprep.subr.bf16.mxu0 0
    %2197 = vmatpush1.bf16.msra.mxu0 %v1559
    %2198 = vmatprep.subr.bf16.mxu0 0
    %2199 = vmatpush1.bf16.msra.mxu0 %v1560
    %2200 = vmatprep.subr.bf16.mxu0 0
    %2201 = vmatpush1.bf16.msra.mxu0 %v1561
    %2202 = vmatprep.subr.bf16.mxu0 0
    %2203 = vmatpush1.bf16.msra.mxu0 %v1562
    %2204 = vmatprep.subr.bf16.mxu0 0
    %2205 = vmatpush1.bf16.msra.mxu0 %v1563
    %2206 = vmatprep.subr.bf16.mxu0 0
    %2207 = vmatpush1.bf16.msra.mxu0 %v1564
    %2208 = vmatprep.subr.bf16.mxu0 0
    %2209 = vmatpush1.bf16.msra.mxu0 %v1565
    %2210 = vmatprep.subr.bf16.mxu0 0
    %2211 = vmatpush1.bf16.msra.mxu0 %v1566
    %2212 = vmatprep.subr.bf16.mxu0 0
    %2213 = vmatpush1.bf16.msra.mxu0 %v1567
    %2214 = vmatprep.subr.bf16.mxu0 0
    %2215 = vmatpush1.bf16.msra.mxu0 %v1568
    %2216 = vmatprep.subr.bf16.mxu0 0
    %2217 = vmatpush1.bf16.msra.mxu0 %v1569
    %2218 = vmatprep.subr.bf16.mxu0 0
    %2219 = vmatpush1.bf16.msra.mxu0 %v1570
    %2220 = vmatprep.subr.bf16.mxu0 0
    %2221 = vmatpush1.bf16.msra.mxu0 %v1571
    %2222 = vmatprep.subr.bf16.mxu0 0
    %2223 = vmatpush1.bf16.msra.mxu0 %v1572
    %2224 = vmatprep.subr.bf16.mxu0 0
    %2225 = vmatpush1.bf16.msra.mxu0 %v1573
    %2226 = vmatprep.mubr.bf16.mxu0 %v571
    %2227 = vmatmul.mubr.bf16.gmra.mrb[0].mxu0 %v557
    %v2228 = vpop.f32.mrb[0].mxu0
    %v2229 = vadd.f32 %v2189, %v2228
    %v2230 = vpop.f32.mrb[0].mxu0
    %v2231 = vpop.f32.mrb[0].mxu0
    %v2232 = vpop.f32.mrb[0].mxu0
    %2233 = vdwg.mxu0
    %2234 = vmatprep.subr.bf16.mxu0 0
    %2235 = vmatpush1.bf16.msra.mxu0 %v1574
    %2236 = vmatprep.subr.bf16.mxu0 0
    %2237 = vmatpush1.bf16.msra.mxu0 %v1575
    %2238 = vmatprep.subr.bf16.mxu0 0
    %2239 = vmatpush1.bf16.msra.mxu0 %v1576
    %2240 = vmatprep.subr.bf16.mxu0 0
    %2241 = vmatpush1.bf16.msra.mxu0 %v1577
    %2242 = vmatprep.subr.bf16.mxu0 0
    %2243 = vmatpush1.bf16.msra.mxu0 %v1578
    %2244 = vmatprep.subr.bf16.mxu0 0
    %2245 = vmatpush1.bf16.msra.mxu0 %v1579
    %2246 = vmatprep.subr.bf16.mxu0 0
    %2247 = vmatpush1.bf16.msra.mxu0 %v1580
    %2248 = vmatprep.subr.bf16.mxu0 0
    %2249 = vmatpush1.bf16.msra.mxu0 %v1581
    %2250 = vmatprep.subr.bf16.mxu0 0
    %2251 = vmatpush1.bf16.msra.mxu0 %v1582
    %2252 = vmatprep.subr.bf16.mxu0 0
    %2253 = vmatpush1.bf16.msra.mxu0 %v1583
    %2254 = vmatprep.subr.bf16.mxu0 0
    %2255 = vmatpush1.bf16.msra.mxu0 %v1584
    %2256 = vmatprep.subr.bf16.mxu0 0
    %2257 = vmatpush1.bf16.msra.mxu0 %v1585
    %2258 = vmatprep.subr.bf16.mxu0 0
    %2259 = vmatpush1.bf16.msra.mxu0 %v1586
    %2260 = vmatprep.subr.bf16.mxu0 0
    %2261 = vmatpush1.bf16.msra.mxu0 %v1587
    %2262 = vmatprep.subr.bf16.mxu0 0
    %2263 = vmatpush1.bf16.msra.mxu0 %v1588
    %2264 = vmatprep.subr.bf16.mxu0 0
    %2265 = vmatpush1.bf16.msra.mxu0 %v1589
    %2266 = vmatprep.mubr.bf16.mxu0 %v575
    %2267 = vmatmul.mubr.bf16.gmra.mrb[0].mxu0 %v573
    %v2268 = vpop.f32.mrb[0].mxu0
    %v2269 = vadd.f32 %v2229, %v2268
    %v2270 = vpop.f32.mrb[0].mxu0
    %v2271 = vpop.f32.mrb[0].mxu0
    %v2272 = vpop.f32.mrb[0].mxu0
    %2273 = vdwg.mxu0
    %2274 = vmatprep.subr.bf16.mxu0 0
    %2275 = vmatpush1.bf16.msra.mxu0 %v1590
    %2276 = vmatprep.subr.bf16.mxu0 0
    %2277 = vmatpush1.bf16.msra.mxu0 %v1591
    %2278 = vmatprep.subr.bf16.mxu0 0
    %2279 = vmatpush1.bf16.msra.mxu0 %v1592
    %2280 = vmatprep.subr.bf16.mxu0 0
    %2281 = vmatpush1.bf16.msra.mxu0 %v1593
    %2282 = vmatprep.subr.bf16.mxu0 0
    %2283 = vmatpush1.bf16.msra.mxu0 0
    %2284 = vmatprep.subr.bf16.mxu0 0
    %2285 = vmatpush1.bf16.msra.mxu0 0
    %2286 = vmatprep.subr.bf16.mxu0 0
    %2287 = vmatpush1.bf16.msra.mxu0 0
    %2288 = vmatprep.subr.bf16.mxu0 0
    %2289 = vmatpush1.bf16.msra.mxu0 0
    %2290 = vmatprep.subr.bf16.mxu0 0
    %2291 = vmatpush1.bf16.msra.mxu0 0
    %2292 = vmatprep.subr.bf16.mxu0 0
    %2293 = vmatpush1.bf16.msra.mxu0 0
    %2294 = vmatprep.subr.bf16.mxu0 0
    %2295 = vmatpush1.bf16.msra.mxu0 0
    %2296 = vmatprep.subr.bf16.mxu0 0
    %2297 = vmatpush1.bf16.msra.mxu0 0
    %2298 = vmatprep.subr.bf16.mxu0 0
    %2299 = vmatpush1.bf16.msra.mxu0 0
    %2300 = vmatprep.subr.bf16.mxu0 0
    %2301 = vmatpush1.bf16.msra.mxu0 0
    %2302 = vmatprep.subr.bf16.mxu0 0
    %2303 = vmatpush1.bf16.msra.mxu0 0
    %2304 = vmatprep.subr.bf16.mxu0 0
    %2305 = vmatpush1.bf16.msra.mxu0 0
    %2306 = vmatprep.mubr.bf16.mxu0 0
    %2307 = vmatmul.mubr.bf16.gmra.mrb[0].mxu0 %v1792
    %v2308 = vpop.f32.mrb[0].mxu0
    %v2309 = vadd.f32 %v2269, %v2308
    %v2310 = vpop.f32.mrb[0].mxu0
    %v2311 = vpop.f32.mrb[0].mxu0
    %v2312 = vpop.f32.mrb[0].mxu0
    %2313 = vdwg.mxu0
    %v2314 = vmax.f32 %v2309, 0.0
    %v2315 = vpack.c.bf16 %v2314, %v2314
    %v2316 = vld [vmem:[%s3] sm:$0xf]
    %v2317 = vld [vmem:[%s3 + $0x4] sm:$0xf]
    %v2318 = vld [vmem:[%s3 + $0x8] sm:$0xf]
    %v2319 = vld [vmem:[%s3 + $0xc] sm:$0xf]
    %v2320 = vld [vmem:[%s3 + $0x10] sm:$0xf]
    %v2321 = vld [vmem:[%s3 + $0x14] sm:$0xf]
    %v2322 = vld [vmem:[%s3 + $0x18] sm:$0xf]
    %v2323 = vld [vmem:[%s3 + $0x1c] sm:$0xf]
    %v2324 = vld [vmem:[%s3 + $0x20] sm:$0xf]
    %v2325 = vld [vmem:[%s3 + $0x24] sm:$0xf]
    %v2326 = vld [vmem:[%s3 + $0x28] sm:$0xf]
    %v2327 = vld [vmem:[%s3 + $0x2c] sm:$0xf]
    %v2328 = vld [vmem:[%s3 + $0x30] sm:$0xf]
    %v2329 = vld [vmem:[%s3 + $0x34] sm:$0xf]
    %v2330 = vld [vmem:[%s3 + $0x38] sm:$0xf]
    %v2331 = vld [vmem:[%s3 + $0x3c] sm:$0xf]
    %v2332 = vld [vmem:[%s4] sm:$0x1]
    %v2334 = vlaneseq
    %v2335 = vshrl.u32 %v2334, 7
    %v2336 = vsub.s32 0, %v2335
    %v2337 = vrot.slane %v2332, %v2336
    %v2355 = vunpack.c.l.b16 %v2316
    %v2356 = vunpack.c.l.b16 %v2317
    %v2357 = vunpack.c.l.b16 %v2318
    %v2358 = vunpack.c.l.b16 %v2319
    %v2359 = vunpack.c.l.b16 %v2320
    %v2360 = vunpack.c.l.b16 %v2321
    %v2361 = vunpack.c.l.b16 %v2322
    %v2362 = vunpack.c.l.b16 %v2323
    %v2363 = vunpack.c.l.b16 %v2324
    %v2364 = vunpack.c.l.b16 %v2325
    %v2365 = vunpack.c.l.b16 %v2326
    %v2366 = vunpack.c.l.b16 %v2327
    %v2367 = vunpack.c.l.b16 %v2328
    %v2368 = vunpack.c.l.b16 %v2329
    %v2369 = vunpack.c.l.b16 %v2330
    %v2370 = vunpack.c.l.b16 %v2331
    %v2371 = vpack.c.b16 %v2356, %v2355
    %v2372 = vpack.c.b16 %v2358, %v2357
    %v2373 = vpack.c.b16 %v2360, %v2359
    %v2374 = vpack.c.b16 %v2362, %v2361
    %v2375 = vpack.c.b16 %v2364, %v2363
    %v2376 = vpack.c.b16 %v2366, %v2365
    %v2377 = vpack.c.b16 %v2368, %v2367
    %v2378 = vpack.c.b16 %v2370, %v2369
    %2387 = vmatprep.subr.bf16.mxu0 0
    %2388 = vmatpush1.bf16.msra.mxu0 %v2371
    %2389 = vmatprep.subr.bf16.mxu0 0
    %2390 = vmatpush1.bf16.msra.mxu0 %v2372
    %2391 = vmatprep.subr.bf16.mxu0 0
    %2392 = vmatpush1.bf16.msra.mxu0 %v2373
    %2393 = vmatprep.subr.bf16.mxu0 0
    %2394 = vmatpush1.bf16.msra.mxu0 %v2374
    %2395 = vmatprep.subr.bf16.mxu0 0
    %2396 = vmatpush1.bf16.msra.mxu0 %v2375
    %2397 = vmatprep.subr.bf16.mxu0 0
    %2398 = vmatpush1.bf16.msra.mxu0 %v2376
    %2399 = vmatprep.subr.bf16.mxu0 0
    %2400 = vmatpush1.bf16.msra.mxu0 %v2377
    %2401 = vmatprep.subr.bf16.mxu0 0
    %2402 = vmatpush1.bf16.msra.mxu0 %v2378
    %2403 = vmatprep.subr.bf16.mxu0 0
    %2404 = vmatpush1.bf16.msra.mxu0 0
    %2405 = vmatprep.subr.bf16.mxu0 0
    %2406 = vmatpush1.bf16.msra.mxu0 0
    %2407 = vmatprep.subr.bf16.mxu0 0
    %2408 = vmatpush1.bf16.msra.mxu0 0
    %2409 = vmatprep.subr.bf16.mxu0 0
    %2410 = vmatpush1.bf16.msra.mxu0 0
    %2411 = vmatprep.subr.bf16.mxu0 0
    %2412 = vmatpush1.bf16.msra.mxu0 0
    %2413 = vmatprep.subr.bf16.mxu0 0
    %2414 = vmatpush1.bf16.msra.mxu0 0
    %2415 = vmatprep.subr.bf16.mxu0 0
    %2416 = vmatpush1.bf16.msra.mxu0 0
    %2417 = vmatprep.subr.bf16.mxu0 0
    %2418 = vmatpush1.bf16.msra.mxu0 0
    %2419 = vmatprep.mubr.bf16.mxu0 0
    %2420 = vmatmul.mubr.bf16.gmra.mrb[0].mxu0 %v2315
    %v2421 = vpop.f32.mrb[0].mxu0
    %v2422 = vadd.f32 %v2337, %v2421
    %v2423 = vpop.f32.mrb[0].mxu0
    %v2424 = vpop.f32.mrb[0].mxu0
    %v2425 = vpop.f32.mrb[0].mxu0
    %2426 = vdwg.mxu0
    %vm2427 = vcmask 74752
    %2428 = vst.msk [vmem:[#allocation2] sm:$0x3] %vm2427, %v2422
    // Predicated region
    $region22: #{mnist_cnn_forward.5} parent=1 // pred_check
      _
    $region23: #{mnist_cnn_forward.5} parent=1 // pred_check_branch
      %2430 = sbr.rel (0) target = $region25
    $region24: #{mnist_cnn_forward.5} parent=1 // pred_region
      %s2432 = ssub.s32 32, 32
      %2433 = vsyncadd [#allocation3], %s2432
      %s2435 = sshll.u32 [#allocation2], 4
      %s2436 = int_to_ptr.vmem [resolvable:$true] %s2435
      %2438 = dma.vmem_to_hbm [thread:$0]  %s2436, 32, %s5, [#allocation3]
    $region25: #{mnist_cnn_forward.5} parent=1 // pred_fallthru
      _
    // Predicated region
    $region26: #{mnist_cnn_forward.5} parent=1 // pred_check
      _
    $region27: #{mnist_cnn_forward.5} parent=1 // pred_check_branch
      %2440 = sbr.rel (0) target = $region29
    $region28: #{mnist_cnn_forward.5} parent=1 // pred_region
      %2441 = dma.done [#allocation3], 32
    $region29: #{mnist_cnn_forward.5} parent=1 // pred_fallthru
      _
    %2442 = vsyncpa [#allocation3], 1

</llo_original>
